<compile_context>
chip_gen: v7x
topology: tpu7x:2x2x1
jax: 0.10.0
libtpu: 0.0.40
codegen_flags: <defaults>
</compile_context>

<pallas_src>
import functools
import math

import jax
import jax.numpy as jnp
from jax.experimental import pallas as pl
from jax.experimental.pallas import tpu as pltpu

VMEM_SPEC = pl.BlockSpec(memory_space=pltpu.MemorySpace.VMEM)
_VMEM_LIMIT = 64 * 1024 * 1024      # sized against v7x's 64 MiB physical VMEM
LANE = 128


def _pick_tile(dim, target, align):
    """Largest tile <= target that is a multiple of `align` and divides `dim`.
    Falls back to the full dim (always a legal Pallas block)."""
    if dim <= target:
        return dim
    t = (target // align) * align
    while t >= align:
        if dim % t == 0:
            return t
        t -= align
    return dim


# --------------------------- tiled matmul (+ activation) --------------------------- #

def _matmul_kernel(x_ref, w_ref, b_ref, o_ref, acc_ref, *, act):
    @pl.when(pl.program_id(2) == 0)
    def _():
        acc_ref[...] = jnp.zeros_like(acc_ref)

    acc_ref[...] += jnp.dot(x_ref[...], w_ref[...],
                            preferred_element_type=jnp.float32)

    @pl.when(pl.program_id(2) == pl.num_programs(2) - 1)
    def _():
        y = acc_ref[...] + b_ref[...]          # f32 epilogue
        if act == "gelu":
            # TODO(synk): HF ALBERT default hidden_act is "gelu_new" (tanh approx);
            # if the checkpoint config says "gelu" (erf) switch approximate=False.
            y = jax.nn.gelu(y, approximate=True)
        elif act == "tanh":
            y = jnp.tanh(y)
        o_ref[...] = y.astype(o_ref.dtype)


def linear(x, w, b, act="none", out_dtype=jnp.bfloat16, tm=256, tn=512, tk=512):
    M, K = x.shape
    _, N = w.shape
    tm = _pick_tile(M, tm, 8)
    tn = _pick_tile(N, tn, 128)
    tk = _pick_tile(K, tk, 128)
    grid = (M // tm, N // tn, K // tk)
    return pl.pallas_call(
        functools.partial(_matmul_kernel, act=act),
        out_shape=jax.ShapeDtypeStruct((M, N), out_dtype),
        grid_spec=pltpu.PrefetchScalarGridSpec(
            num_scalar_prefetch=0,
            grid=grid,
            in_specs=[pl.BlockSpec((tm, tk), lambda i, j, k: (i, k)),
                      pl.BlockSpec((tk, tn), lambda i, j, k: (k, j)),
                      pl.BlockSpec((1, tn), lambda i, j, k: (0, j))],
            out_specs=pl.BlockSpec((tm, tn), lambda i, j, k: (i, j)),
            scratch_shapes=[pltpu.VMEM((tm, tn), jnp.float32)]),
        compiler_params=pltpu.CompilerParams(
            dimension_semantics=("parallel", "parallel", "arbitrary"),
            vmem_limit_bytes=_VMEM_LIMIT),
    )(x, w, b)


# ------------------- fused matmul + residual + LayerNorm epilogue ------------------ #

def _matmul_res_ln_kernel(x_ref, w_ref, b_ref, r_ref, g_ref, bt_ref,
                          o_ref, acc_ref, *, eps):
    @pl.when(pl.program_id(1) == 0)
    def _():
        acc_ref[...] = jnp.zeros_like(acc_ref)

    acc_ref[...] += jnp.dot(x_ref[...], w_ref[...],
                            preferred_element_type=jnp.float32)

    @pl.when(pl.program_id(1) == pl.num_programs(1) - 1)
    def _():
        y = acc_ref[...] + b_ref[...] + r_ref[...].astype(jnp.float32)
        mu = jnp.mean(y, axis=-1, keepdims=True)
        yc = y - mu
        var = jnp.mean(yc * yc, axis=-1, keepdims=True)
        o_ref[...] = (yc * jax.lax.rsqrt(var + eps) * g_ref[...]
                      + bt_ref[...]).astype(o_ref.dtype)


def linear_residual_layernorm(x, w, b, residual, gamma, beta, eps=1e-12,
                              out_dtype=jnp.bfloat16, tm=256, tk=512):
    M, K = x.shape
    _, N = w.shape                       # N = hidden, kept full for the row LN
    tm = _pick_tile(M, tm, 8)
    tk = _pick_tile(K, tk, 128)
    grid = (M // tm, K // tk)
    return pl.pallas_call(
        functools.partial(_matmul_res_ln_kernel, eps=eps),
        out_shape=jax.ShapeDtypeStruct((M, N), out_dtype),
        grid_spec=pltpu.PrefetchScalarGridSpec(
            num_scalar_prefetch=0,
            grid=grid,
            in_specs=[pl.BlockSpec((tm, tk), lambda i, k: (i, k)),
                      pl.BlockSpec((tk, N), lambda i, k: (k, 0)),
                      pl.BlockSpec((1, N), lambda i, k: (0, 0)),
                      pl.BlockSpec((tm, N), lambda i, k: (i, 0)),
                      pl.BlockSpec((1, N), lambda i, k: (0, 0)),
                      pl.BlockSpec((1, N), lambda i, k: (0, 0))],
            out_specs=pl.BlockSpec((tm, N), lambda i, k: (i, 0)),
            scratch_shapes=[pltpu.VMEM((tm, N), jnp.float32)]),
        compiler_params=pltpu.CompilerParams(
            dimension_semantics=("parallel", "arbitrary"),
            vmem_limit_bytes=_VMEM_LIMIT),
    )(x, w, b, residual, gamma, beta)


# -------------------------------- plain LayerNorm ---------------------------------- #

def _ln_kernel(x_ref, g_ref, b_ref, o_ref, *, eps):
    x = x_ref[...].astype(jnp.float32)
    mu = jnp.mean(x, axis=-1, keepdims=True)
    xc = x - mu
    var = jnp.mean(xc * xc, axis=-1, keepdims=True)
    o_ref[...] = (xc * jax.lax.rsqrt(var + eps) * g_ref[...]
                  + b_ref[...]).astype(o_ref.dtype)


def layernorm(x, gamma, beta, eps=1e-12, out_dtype=jnp.bfloat16, tm=512):
    M, N = x.shape
    tm = _pick_tile(M, tm, 8)
    return pl.pallas_call(
        functools.partial(_ln_kernel, eps=eps),
        out_shape=jax.ShapeDtypeStruct((M, N), out_dtype),
        grid_spec=pltpu.PrefetchScalarGridSpec(
            num_scalar_prefetch=0,
            grid=(M // tm,),
            in_specs=[pl.BlockSpec((tm, N), lambda i: (i, 0)),
                      pl.BlockSpec((1, N), lambda i: (0, 0)),
                      pl.BlockSpec((1, N), lambda i: (0, 0))],
            out_specs=pl.BlockSpec((tm, N), lambda i: (i, 0))),
        compiler_params=pltpu.CompilerParams(
            dimension_semantics=("parallel",),
            vmem_limit_bytes=_VMEM_LIMIT),
    )(x, gamma, beta)


# --------------------------- flash-style tiled attention --------------------------- #

def _flash_attn_kernel(q_ref, k_ref, v_ref, bias_ref, o_ref, m_sc, l_sc, acc_sc):
    ki = pl.program_id(3)

    @pl.when(ki == 0)
    def _():
        m_sc[...] = jnp.full_like(m_sc, -1e30)
        l_sc[...] = jnp.zeros_like(l_sc)
        acc_sc[...] = jnp.zeros_like(acc_sc)

    q = q_ref[0, 0]                                   # (tq, dh) bf16, pre-scaled
    k = k_ref[0, 0]                                   # (tk, dh) bf16
    s = jnp.dot(q, k.T, preferred_element_type=jnp.float32)      # (tq, tk)
    s = s + bias_ref[0, 0]                            # (1, tk) additive mask

    m_prev = m_sc[...]
    m_new = jnp.maximum(m_prev, jnp.max(s, axis=-1, keepdims=True))
    alpha = jnp.exp(m_prev - m_new)
    p = jnp.exp(s - m_new)
    l_sc[...] = alpha * l_sc[...] + jnp.sum(p, axis=-1, keepdims=True)
    acc_sc[...] = alpha * acc_sc[...] + jnp.dot(
        p.astype(v_ref.dtype), v_ref[0, 0], preferred_element_type=jnp.float32)
    m_sc[...] = m_new

    @pl.when(ki == pl.num_programs(3) - 1)
    def _():
        inv_l = pl.reciprocal(l_sc[...], approx=True)
        o_ref[0, 0] = (acc_sc[...] * inv_l).astype(o_ref.dtype)


def flash_attention(q, k, v, bias, tq=128, tk=256):
    """q/k/v: (B, H, S, dh) bf16 (q already scaled by 1/sqrt(dh)); bias: (B,1,1,S) f32."""
    B, H, S, D = q.shape
    tq = _pick_tile(S, tq, 8)
    tk = _pick_tile(S, tk, 128)          # 128-aligned so the bias block is lane-legal
    grid = (B, H, S // tq, S // tk)
    return pl.pallas_call(
        _flash_attn_kernel,
        out_shape=jax.ShapeDtypeStruct((B, H, S, D), q.dtype),
        grid_spec=pltpu.PrefetchScalarGridSpec(
            num_scalar_prefetch=0,
            grid=grid,
            in_specs=[pl.BlockSpec((1, 1, tq, D), lambda b, h, qi, ki: (b, h, qi, 0)),
                      pl.BlockSpec((1, 1, tk, D), lambda b, h, qi, ki: (b, h, ki, 0)),
                      pl.BlockSpec((1, 1, tk, D), lambda b, h, qi, ki: (b, h, ki, 0)),
                      pl.BlockSpec((1, 1, 1, tk), lambda b, h, qi, ki: (b, 0, 0, ki))],
            out_specs=pl.BlockSpec((1, 1, tq, D), lambda b, h, qi, ki: (b, h, qi, 0)),
            scratch_shapes=[pltpu.VMEM((tq, 1), jnp.float32),
                            pltpu.VMEM((tq, 1), jnp.float32),
                            pltpu.VMEM((tq, D), jnp.float32)]),
        compiler_params=pltpu.CompilerParams(
            dimension_semantics=("parallel", "parallel", "parallel", "arbitrary"),
            vmem_limit_bytes=_VMEM_LIMIT),
    )(q, k, v, bias)


# -------------------------- classifier softmax + cross-entropy --------------------- #

def _cls_head_kernel(logits_ref, onehot_ref, probs_ref, loss_ref):
    x = logits_ref[...]
    m = jnp.max(x, axis=-1, keepdims=True)
    e = jnp.exp(x - m)
    z = jnp.sum(e, axis=-1, keepdims=True)
    probs_ref[...] = e * pl.reciprocal(z, approx=True)
    logp = (x - m) - jnp.log(z)
    nll = -jnp.sum(onehot_ref[...] * logp, axis=-1, keepdims=True)   # (B, 1)
    loss_ref[...] = jnp.mean(nll, axis=0, keepdims=True)             # (1, 1)


def softmax_and_ce(logits, onehot):
    probs, loss = pl.pallas_call(
        _cls_head_kernel,
        out_shape=(jax.ShapeDtypeStruct(logits.shape, jnp.float32),
                   jax.ShapeDtypeStruct((1, 1), jnp.float32)),
        in_specs=[VMEM_SPEC, VMEM_SPEC],
        out_specs=(VMEM_SPEC, VMEM_SPEC),
    )(logits, onehot)
    return probs, loss[0, 0]


# ---------------------------------- model wrapper ----------------------------------- #

def init_params(key, cfg):
    E, H, I, L = cfg["emb"], cfg["hidden"], cfg["inter"], cfg["num_labels"]
    keys = jax.random.split(key, 16)

    def w(k, shape, dtype=jnp.bfloat16):
        return (0.02 * jax.random.normal(k, shape, jnp.float32)).astype(dtype)

    zf = lambda shape: jnp.zeros(shape, jnp.float32)
    of = lambda shape: jnp.ones(shape, jnp.float32)

    return {
        # embeddings (gathers are plain-JAX glue, kept f32)
        "word_emb": w(keys[0], (cfg["vocab"], E), jnp.float32),
        "pos_emb": w(keys[1], (cfg["max_pos"], E), jnp.float32),
        "type_emb": w(keys[2], (cfg["type_vocab"], E), jnp.float32),
        "emb_ln_g": of((1, E)), "emb_ln_b": zf((1, E)),
        # embedding -> hidden projection
        "map_w": w(keys[3], (E, H)), "map_b": zf((1, H)),
        # shared ALBERT layer (attention)
        "q_w": w(keys[4], (H, H)), "q_b": zf((1, H)),
        "k_w": w(keys[5], (H, H)), "k_b": zf((1, H)),
        "v_w": w(keys[6], (H, H)), "v_b": zf((1, H)),
        "ao_w": w(keys[7], (H, H)), "ao_b": zf((1, H)),
        "attn_ln_g": of((1, H)), "attn_ln_b": zf((1, H)),
        # shared ALBERT layer (FFN)
        "ffn_w": w(keys[8], (H, I)), "ffn_b": zf((1, I)),
        "ffn_out_w": w(keys[9], (I, H)), "ffn_out_b": zf((1, H)),
        "ffn_ln_g": of((1, H)), "ffn_ln_b": zf((1, H)),
        # pooler + classifier
        "pool_w": w(keys[10], (H, H)), "pool_b": zf((1, H)),
        "cls_w": w(keys[11], (H, L)), "cls_b": zf((1, L)),
    }


def albert_forward(params, input_ids, attention_mask, token_type_ids, labels, cfg):
    B, S = input_ids.shape
    E, H, nh = cfg["emb"], cfg["hidden"], cfg["heads"]
    assert H % nh == 0
    dh = H // nh
    L = cfg["num_labels"]

    # ---- embeddings (gather + sum is glue) ----
    emb = (params["word_emb"][input_ids]
           + params["pos_emb"][jnp.arange(S)][None, :, :]
           + params["type_emb"][token_type_ids])                       # (B,S,E) f32
    x = layernorm(emb.reshape(B * S, E), params["emb_ln_g"], params["emb_ln_b"])
    x = linear(x, params["map_w"], params["map_b"])                    # (B*S,H) bf16

    # extended attention mask, HF convention: (1 - mask) * -10000, shape (B,1,1,S)
    ext_bias = ((1.0 - attention_mask.astype(jnp.float32)) * -10000.0)[:, None, None, :]

    # fused QKV weight; 1/sqrt(dh) folded into the Q projection (zero runtime cost)
    scale = 1.0 / math.sqrt(dh)
    qkv_w = jnp.concatenate(
        [(params["q_w"].astype(jnp.float32) * scale).astype(jnp.bfloat16),
         params["k_w"], params["v_w"]], axis=1)                        # (H,3H) bf16
    qkv_b = jnp.concatenate(
        [params["q_b"] * scale, params["k_b"], params["v_b"]], axis=1)  # (1,3H) f32

    def layer(_, x):
        qkv = linear(x, qkv_w, qkv_b)                                  # (B*S,3H) bf16
        qkv = qkv.reshape(B, S, 3, nh, dh).transpose(2, 0, 3, 1, 4)    # (3,B,nh,S,dh)
        # TODO(synk): keep heads packed on the 128-lane axis inside the attention
        # kernel instead of relayout-transposing here (dh=64 wastes half a vreg).
        ctx = flash_attention(qkv[0], qkv[1], qkv[2], ext_bias)        # (B,nh,S,dh)
        ctx = ctx.transpose(0, 2, 1, 3).reshape(B * S, H)
        # attention-output projection + residual + LayerNorm (fused epilogue)
        x = linear_residual_layernorm(ctx, params["ao_w"], params["ao_b"],
                                      x, params["attn_ln_g"], params["attn_ln_b"])
        # FFN: gelu matmul, then out-matmul + residual + LayerNorm (fused epilogue)
        h = linear(x, params["ffn_w"], params["ffn_b"], act="gelu")    # (B*S,I)
        x = linear_residual_layernorm(h, params["ffn_out_w"], params["ffn_out_b"],
                                      x, params["ffn_ln_g"], params["ffn_ln_b"])
        return x

    # ALBERT shares one layer's parameters across all layers
    x = jax.lax.fori_loop(0, cfg["layers"], layer, x)

    # ---- pooler / classifier / loss / probabilities ----
    pooled_in = x.reshape(B, S, H)[:, 0, :]                            # (B,H) bf16
    pooled = linear(pooled_in, params["pool_w"], params["pool_b"], act="tanh")

    # lane-dense (128-wide) classifier head; padded columns get -1e30 bias so their
    # softmax contribution is exactly zero.
    npad = max(LANE, L)
    cls_w_pad = jnp.zeros((H, npad), jnp.bfloat16).at[:, :L].set(params["cls_w"])
    cls_b_pad = jnp.full((1, npad), -1e30, jnp.float32).at[:, :L].set(params["cls_b"])
    logits_pad = linear(pooled, cls_w_pad, cls_b_pad, out_dtype=jnp.float32)  # (B,128)

    onehot_pad = jax.nn.one_hot(labels, npad, dtype=jnp.float32)
    probs_pad, loss = softmax_and_ce(logits_pad, onehot_pad)

    logits = logits_pad[:, :L]
    probabilities = probs_pad[:, :L]
    # TODO(synk): dropout omitted (inference semantics); pretrained-weight loading and
    # the BertTokenizer from the PyTorch module have no Pallas equivalent.
    return loss, logits, probabilities


# --------------------------------------- main --------------------------------------- #

if __name__ == "__main__":
    cfg = dict(vocab=100, emb=16, hidden=32, heads=4, inter=64, layers=2,
               max_pos=16, type_vocab=2, num_labels=2)
    B, S = 2, 8

    params = init_params(jax.random.PRNGKey(0), cfg)

    k_ids, _ = jax.random.split(jax.random.PRNGKey(0), 2)
    input_ids = jax.random.randint(k_ids, (B, S), 0, cfg["vocab"], dtype=jnp.int32)
    token_type_ids = jnp.concatenate(
        [jnp.zeros((B, S // 2), jnp.int32), jnp.ones((B, S // 2), jnp.int32)], axis=1)
    attention_mask = jnp.ones((B, S), jnp.int32)
    labels = jnp.array([0, 1], dtype=jnp.int32)

    # jit the whole forward: all pallas_calls + gather/transpose glue dispatch once.
    forward = jax.jit(functools.partial(albert_forward, cfg=cfg))

    loss, logits, probs = forward(params, input_ids, attention_mask,
                                  token_type_ids, labels)
    jax.block_until_ready((loss, logits, probs))

    assert logits.shape == (B, cfg["num_labels"])
    assert probs.shape == (B, cfg["num_labels"])
    assert loss.shape == ()
    assert bool(jnp.isfinite(loss))
    print("KERNEL_OK")
</pallas_src>

<mosaic_0001>
module attributes {stable_mosaic.version = 11 : i64} {
  func.func @_matmul_kernel(%arg0: i32, %arg1: i32, %arg2: i32, %arg3: memref<16x16xbf16, #tpu.memory_space<vmem>>, %arg4: memref<16x32xbf16, #tpu.memory_space<vmem>>, %arg5: memref<1x32xf32, #tpu.memory_space<vmem>>, %arg6: memref<16x32xbf16, #tpu.memory_space<vmem>>, %arg7: memref<16x32xf32, #tpu.memory_space<vmem>>) attributes {dimension_semantics = [#tpu.dimension_semantics<parallel>, #tpu.dimension_semantics<parallel>, #tpu.dimension_semantics<arbitrary>], iteration_bounds = array<i64: 1, 1, 1>, scalar_prefetch = 0 : i64, scratch_operands = 1 : i64, tpu.core_type = #tpu.core_type<tc>, window_params = [{transform_indices = @transform_0, window_bounds = array<i64: 16, 16>}, {transform_indices = @transform_1, window_bounds = array<i64: 16, 32>}, {transform_indices = @transform_2, window_bounds = array<i64: 1, 32>}, {transform_indices = @transform_3, window_bounds = array<i64: 16, 32>}]} {
    %c0_i32 = arith.constant 0 : i32
    %0 = arith.cmpi eq, %arg2, %c0_i32 : i32
    %1 = arith.extui %0 : i1 to i32
    %c0_i32_0 = arith.constant 0 : i32
    %2 = arith.cmpi ne, %1, %c0_i32_0 : i32
    scf.if %2 {
      %cst_10 = arith.constant 0.000000e+00 : f32
      %12 = vector.broadcast %cst_10 : f32 to vector<16x32xf32>
      %c0_11 = arith.constant 0 : index
      %c0_12 = arith.constant 0 : index
      %13 = vector.load %arg7[%c0_11, %c0_12] : memref<16x32xf32, #tpu.memory_space<vmem>>, vector<16x32xf32>
      tpu.vector_store %arg7[%c0_11, %c0_12], %12 {strides = array<i32>} : memref<16x32xf32, #tpu.memory_space<vmem>>, vector<16x32xf32>,
    } else {
    }
    %c0 = arith.constant 0 : index
    %c0_1 = arith.constant 0 : index
    %3 = vector.load %arg7[%c0, %c0_1] : memref<16x32xf32, #tpu.memory_space<vmem>>, vector<16x32xf32>
    %c0_2 = arith.constant 0 : index
    %c0_3 = arith.constant 0 : index
    %4 = vector.load %arg3[%c0_2, %c0_3] : memref<16x16xbf16, #tpu.memory_space<vmem>>, vector<16x16xbf16>
    %c0_4 = arith.constant 0 : index
    %c0_5 = arith.constant 0 : index
    %5 = vector.load %arg4[%c0_4, %c0_5] : memref<16x32xbf16, #tpu.memory_space<vmem>>, vector<16x32xbf16>
    %cst = arith.constant dense<0.000000e+00> : vector<16x32xf32>
    %6 = tpu.matmul %4, %5, %cst {dimension_numbers = #tpu.dot_dimension_numbers<[1], [0], [0], [1], [0, 0, 1, 1], [], []>} : vector<16x16xbf16>, vector<16x32xbf16>, vector<16x32xf32> -> vector<16x32xf32>
    %7 = arith.addf %3, %6 : vector<16x32xf32>
    %c0_6 = arith.constant 0 : index
    %c0_7 = arith.constant 0 : index
    %8 = vector.load %arg7[%c0_6, %c0_7] : memref<16x32xf32, #tpu.memory_space<vmem>>, vector<16x32xf32>
    tpu.vector_store %arg7[%c0_6, %c0_7], %7 {strides = array<i32>} : memref<16x32xf32, #tpu.memory_space<vmem>>, vector<16x32xf32>,
    %c0_i32_8 = arith.constant 0 : i32
    %9 = arith.cmpi eq, %arg2, %c0_i32_8 : i32
    %10 = arith.extui %9 : i1 to i32
    %c0_i32_9 = arith.constant 0 : i32
    %11 = arith.cmpi ne, %10, %c0_i32_9 : i32
    scf.if %11 {
      %c0_10 = arith.constant 0 : index
      %c0_11 = arith.constant 0 : index
      %12 = vector.load %arg7[%c0_10, %c0_11] : memref<16x32xf32, #tpu.memory_space<vmem>>, vector<16x32xf32>
      %c0_12 = arith.constant 0 : index
      %c0_13 = arith.constant 0 : index
      %13 = vector.load %arg5[%c0_12, %c0_13] : memref<1x32xf32, #tpu.memory_space<vmem>>, vector<1x32xf32>
      %14 = vector.broadcast %13 : vector<1x32xf32> to vector<16x32xf32>
      %15 = arith.addf %12, %14 : vector<16x32xf32>
      %16 = arith.truncf %15 : vector<16x32xf32> to vector<16x32xbf16>
      %c0_14 = arith.constant 0 : index
      %c0_15 = arith.constant 0 : index
      %17 = vector.load %arg6[%c0_14, %c0_15] : memref<16x32xbf16, #tpu.memory_space<vmem>>, vector<16x32xbf16>
      tpu.vector_store %arg6[%c0_14, %c0_15], %16 {strides = array<i32>} : memref<16x32xbf16, #tpu.memory_space<vmem>>, vector<16x32xbf16>,
    } else {
    }
    return
  }
  func.func @transform_0(%arg0: i32, %arg1: i32, %arg2: i32) -> (i32, i32) {
    %c0_i32 = arith.constant 0 : i32
    return %arg0, %arg2 : i32, i32
  }
  func.func @transform_1(%arg0: i32, %arg1: i32, %arg2: i32) -> (i32, i32) {
    %c0_i32 = arith.constant 0 : i32
    return %arg2, %arg1 : i32, i32
  }
  func.func @transform_2(%arg0: i32, %arg1: i32, %arg2: i32) -> (i32, i32) {
    %c0_i32 = arith.constant 0 : i32
    %c0_i32_0 = arith.constant 0 : i32
    return %c0_i32, %arg1 : i32, i32
  }
  func.func @transform_3(%arg0: i32, %arg1: i32, %arg2: i32) -> (i32, i32) {
    %c0_i32 = arith.constant 0 : i32
    return %arg0, %arg1 : i32, i32
  }
}

module attributes {stable_mosaic.version = 11 : i64} {
  func.func @_ln_kernel(%arg0: i32, %arg1: memref<16x16xf32, #tpu.memory_space<vmem>>, %arg2: memref<1x16xf32, #tpu.memory_space<vmem>>, %arg3: memref<1x16xf32, #tpu.memory_space<vmem>>, %arg4: memref<16x16xbf16, #tpu.memory_space<vmem>>) attributes {dimension_semantics = [#tpu.dimension_semantics<parallel>], iteration_bounds = array<i64: 1>, scalar_prefetch = 0 : i64, scratch_operands = 0 : i64, tpu.core_type = #tpu.core_type<tc>, window_params = [{transform_indices = @transform_0, window_bounds = array<i64: 16, 16>}, {pipeline_mode = #tpu.pipeline_mode<synchronous>, transform_indices = @transform_1, window_bounds = array<i64: 1, 16>}, {pipeline_mode = #tpu.pipeline_mode<synchronous>, transform_indices = @transform_2, window_bounds = array<i64: 1, 16>}, {transform_indices = @transform_3, window_bounds = array<i64: 16, 16>}]} {
    %c0 = arith.constant 0 : index
    %c0_0 = arith.constant 0 : index
    %0 = vector.load %arg1[%c0, %c0_0] : memref<16x16xf32, #tpu.memory_space<vmem>>, vector<16x16xf32>
    %cst = arith.constant dense<0.000000e+00> : vector<16xf32>
    %1 = vector.multi_reduction <add>, %0, %cst [1] : vector<16x16xf32> to vector<16xf32>
    %2 = vector.shape_cast %1 : vector<16xf32> to vector<16x1xf32>
    %cst_1 = arith.constant 1.600000e+01 : f32
    %3 = vector.broadcast %cst_1 : f32 to vector<16x1xf32>
    %4 = arith.divf %2, %3 : vector<16x1xf32>
    %5 = vector.broadcast %4 : vector<16x1xf32> to vector<16x16xf32>
    %6 = arith.subf %0, %5 : vector<16x16xf32>
    %7 = arith.mulf %6, %6 : vector<16x16xf32>
    %cst_2 = arith.constant dense<0.000000e+00> : vector<16xf32>
    %8 = vector.multi_reduction <add>, %7, %cst_2 [1] : vector<16x16xf32> to vector<16xf32>
    %9 = vector.shape_cast %8 : vector<16xf32> to vector<16x1xf32>
    %cst_3 = arith.constant 1.600000e+01 : f32
    %10 = vector.broadcast %cst_3 : f32 to vector<16x1xf32>
    %11 = arith.divf %9, %10 : vector<16x1xf32>
    %cst_4 = arith.constant 9.99999996E-13 : f32
    %12 = vector.broadcast %cst_4 : f32 to vector<16x1xf32>
    %13 = arith.addf %11, %12 : vector<16x1xf32>
    %14 = math.rsqrt %13 : vector<16x1xf32>
    %15 = vector.broadcast %14 : vector<16x1xf32> to vector<16x16xf32>
    %16 = arith.mulf %6, %15 : vector<16x16xf32>
    %c0_5 = arith.constant 0 : index
    %c0_6 = arith.constant 0 : index
    %17 = vector.load %arg2[%c0_5, %c0_6] : memref<1x16xf32, #tpu.memory_space<vmem>>, vector<1x16xf32>
    %18 = vector.broadcast %17 : vector<1x16xf32> to vector<16x16xf32>
    %19 = arith.mulf %16, %18 : vector<16x16xf32>
    %c0_7 = arith.constant 0 : index
    %c0_8 = arith.constant 0 : index
    %20 = vector.load %arg3[%c0_7, %c0_8] : memref<1x16xf32, #tpu.memory_space<vmem>>, vector<1x16xf32>
    %21 = vector.broadcast %20 : vector<1x16xf32> to vector<16x16xf32>
    %22 = arith.addf %19, %21 : vector<16x16xf32>
    %23 = arith.truncf %22 : vector<16x16xf32> to vector<16x16xbf16>
    %c0_9 = arith.constant 0 : index
    %c0_10 = arith.constant 0 : index
    %24 = vector.load %arg4[%c0_9, %c0_10] : memref<16x16xbf16, #tpu.memory_space<vmem>>, vector<16x16xbf16>
    tpu.vector_store %arg4[%c0_9, %c0_10], %23 {strides = array<i32>} : memref<16x16xbf16, #tpu.memory_space<vmem>>, vector<16x16xbf16>,
    return
  }
  func.func @transform_0(%arg0: i32) -> (i32, i32) {
    %c0_i32 = arith.constant 0 : i32
    %c0_i32_0 = arith.constant 0 : i32
    return %arg0, %c0_i32 : i32, i32
  }
  func.func @transform_1(%arg0: i32) -> (i32, i32) {
    %c0_i32 = arith.constant 0 : i32
    %c0_i32_0 = arith.constant 0 : i32
    %c0_i32_1 = arith.constant 0 : i32
    return %c0_i32, %c0_i32_0 : i32, i32
  }
  func.func @transform_2(%arg0: i32) -> (i32, i32) {
    %c0_i32 = arith.constant 0 : i32
    %c0_i32_0 = arith.constant 0 : i32
    %c0_i32_1 = arith.constant 0 : i32
    return %c0_i32, %c0_i32_0 : i32, i32
  }
  func.func @transform_3(%arg0: i32) -> (i32, i32) {
    %c0_i32 = arith.constant 0 : i32
    %c0_i32_0 = arith.constant 0 : i32
    return %arg0, %c0_i32 : i32, i32
  }
}

module attributes {stable_mosaic.version = 11 : i64} {
  func.func @_matmul_kernel(%arg0: i32, %arg1: i32, %arg2: i32, %arg3: memref<16x32xbf16, #tpu.memory_space<vmem>>, %arg4: memref<32x96xbf16, #tpu.memory_space<vmem>>, %arg5: memref<1x96xf32, #tpu.memory_space<vmem>>, %arg6: memref<16x96xbf16, #tpu.memory_space<vmem>>, %arg7: memref<16x96xf32, #tpu.memory_space<vmem>>) attributes {dimension_semantics = [#tpu.dimension_semantics<parallel>, #tpu.dimension_semantics<parallel>, #tpu.dimension_semantics<arbitrary>], iteration_bounds = array<i64: 1, 1, 1>, scalar_prefetch = 0 : i64, scratch_operands = 1 : i64, tpu.core_type = #tpu.core_type<tc>, window_params = [{transform_indices = @transform_0, window_bounds = array<i64: 16, 32>}, {transform_indices = @transform_1, window_bounds = array<i64: 32, 96>}, {transform_indices = @transform_2, window_bounds = array<i64: 1, 96>}, {transform_indices = @transform_3, window_bounds = array<i64: 16, 96>}]} {
    %c0_i32 = arith.constant 0 : i32
    %0 = arith.cmpi eq, %arg2, %c0_i32 : i32
    %1 = arith.extui %0 : i1 to i32
    %c0_i32_0 = arith.constant 0 : i32
    %2 = arith.cmpi ne, %1, %c0_i32_0 : i32
    scf.if %2 {
      %cst_10 = arith.constant 0.000000e+00 : f32
      %12 = vector.broadcast %cst_10 : f32 to vector<16x96xf32>
      %c0_11 = arith.constant 0 : index
      %c0_12 = arith.constant 0 : index
      %13 = vector.load %arg7[%c0_11, %c0_12] : memref<16x96xf32, #tpu.memory_space<vmem>>, vector<16x96xf32>
      tpu.vector_store %arg7[%c0_11, %c0_12], %12 {strides = array<i32>} : memref<16x96xf32, #tpu.memory_space<vmem>>, vector<16x96xf32>,
    } else {
    }
    %c0 = arith.constant 0 : index
    %c0_1 = arith.constant 0 : index
    %3 = vector.load %arg7[%c0, %c0_1] : memref<16x96xf32, #tpu.memory_space<vmem>>, vector<16x96xf32>
    %c0_2 = arith.constant 0 : index
    %c0_3 = arith.constant 0 : index
    %4 = vector.load %arg3[%c0_2, %c0_3] : memref<16x32xbf16, #tpu.memory_space<vmem>>, vector<16x32xbf16>
    %c0_4 = arith.constant 0 : index
    %c0_5 = arith.constant 0 : index
    %5 = vector.load %arg4[%c0_4, %c0_5] : memref<32x96xbf16, #tpu.memory_space<vmem>>, vector<32x96xbf16>
    %cst = arith.constant dense<0.000000e+00> : vector<16x96xf32>
    %6 = tpu.matmul %4, %5, %cst {dimension_numbers = #tpu.dot_dimension_numbers<[1], [0], [0], [1], [0, 0, 1, 1], [], []>} : vector<16x32xbf16>, vector<32x96xbf16>, vector<16x96xf32> -> vector<16x96xf32>
    %7 = arith.addf %3, %6 : vector<16x96xf32>
    %c0_6 = arith.constant 0 : index
    %c0_7 = arith.constant 0 : index
    %8 = vector.load %arg7[%c0_6, %c0_7] : memref<16x96xf32, #tpu.memory_space<vmem>>, vector<16x96xf32>
    tpu.vector_store %arg7[%c0_6, %c0_7], %7 {strides = array<i32>} : memref<16x96xf32, #tpu.memory_space<vmem>>, vector<16x96xf32>,
    %c0_i32_8 = arith.constant 0 : i32
    %9 = arith.cmpi eq, %arg2, %c0_i32_8 : i32
    %10 = arith.extui %9 : i1 to i32
    %c0_i32_9 = arith.constant 0 : i32
    %11 = arith.cmpi ne, %10, %c0_i32_9 : i32
    scf.if %11 {
      %c0_10 = arith.constant 0 : index
      %c0_11 = arith.constant 0 : index
      %12 = vector.load %arg7[%c0_10, %c0_11] : memref<16x96xf32, #tpu.memory_space<vmem>>, vector<16x96xf32>
      %c0_12 = arith.constant 0 : index
      %c0_13 = arith.constant 0 : index
      %13 = vector.load %arg5[%c0_12, %c0_13] : memref<1x96xf32, #tpu.memory_space<vmem>>, vector<1x96xf32>
      %14 = vector.broadcast %13 : vector<1x96xf32> to vector<16x96xf32>
      %15 = arith.addf %12, %14 : vector<16x96xf32>
      %16 = arith.truncf %15 : vector<16x96xf32> to vector<16x96xbf16>
      %c0_14 = arith.constant 0 : index
      %c0_15 = arith.constant 0 : index
      %17 = vector.load %arg6[%c0_14, %c0_15] : memref<16x96xbf16, #tpu.memory_space<vmem>>, vector<16x96xbf16>
      tpu.vector_store %arg6[%c0_14, %c0_15], %16 {strides = array<i32>} : memref<16x96xbf16, #tpu.memory_space<vmem>>, vector<16x96xbf16>,
    } else {
    }
    return
  }
  func.func @transform_0(%arg0: i32, %arg1: i32, %arg2: i32) -> (i32, i32) {
    %c0_i32 = arith.constant 0 : i32
    return %arg0, %arg2 : i32, i32
  }
  func.func @transform_1(%arg0: i32, %arg1: i32, %arg2: i32) -> (i32, i32) {
    %c0_i32 = arith.constant 0 : i32
    return %arg2, %arg1 : i32, i32
  }
  func.func @transform_2(%arg0: i32, %arg1: i32, %arg2: i32) -> (i32, i32) {
    %c0_i32 = arith.constant 0 : i32
    %c0_i32_0 = arith.constant 0 : i32
    return %c0_i32, %arg1 : i32, i32
  }
  func.func @transform_3(%arg0: i32, %arg1: i32, %arg2: i32) -> (i32, i32) {
    %c0_i32 = arith.constant 0 : i32
    return %arg0, %arg1 : i32, i32
  }
}

module attributes {stable_mosaic.version = 11 : i64} {
  func.func @_flash_attn_kernel(%arg0: i32, %arg1: i32, %arg2: i32, %arg3: i32, %arg4: memref<1x1x8x8xbf16, #tpu.memory_space<vmem>>, %arg5: memref<1x1x8x8xbf16, #tpu.memory_space<vmem>>, %arg6: memref<1x1x8x8xbf16, #tpu.memory_space<vmem>>, %arg7: memref<1x1x1x8xf32, #tpu.memory_space<vmem>>, %arg8: memref<1x1x8x8xbf16, #tpu.memory_space<vmem>>, %arg9: memref<8x1xf32, #tpu.memory_space<vmem>>, %arg10: memref<8x1xf32, #tpu.memory_space<vmem>>, %arg11: memref<8x8xf32, #tpu.memory_space<vmem>>) attributes {dimension_semantics = [#tpu.dimension_semantics<parallel>, #tpu.dimension_semantics<parallel>, #tpu.dimension_semantics<parallel>, #tpu.dimension_semantics<arbitrary>], iteration_bounds = array<i64: 2, 4, 1, 1>, scalar_prefetch = 0 : i64, scratch_operands = 3 : i64, tpu.core_type = #tpu.core_type<tc>, window_params = [{transform_indices = @transform_0, window_bounds = array<i64: 1, 1, 8, 8>}, {transform_indices = @transform_1, window_bounds = array<i64: 1, 1, 8, 8>}, {transform_indices = @transform_2, window_bounds = array<i64: 1, 1, 8, 8>}, {transform_indices = @transform_3, window_bounds = array<i64: 1, 1, 1, 8>}, {transform_indices = @transform_4, window_bounds = array<i64: 1, 1, 8, 8>}]} {
    %c0_i32 = arith.constant 0 : i32
    %0 = arith.cmpi eq, %arg3, %c0_i32 : i32
    %1 = arith.extui %0 : i1 to i32
    %c0_i32_0 = arith.constant 0 : i32
    %2 = arith.cmpi ne, %1, %c0_i32_0 : i32
    scf.if %2 {
      %cst_33 = arith.constant -1.000000e+30 : f32
      %41 = vector.broadcast %cst_33 : f32 to vector<8x1xf32>
      %c0_34 = arith.constant 0 : index
      %c0_35 = arith.constant 0 : index
      %42 = vector.load %arg9[%c0_34, %c0_35] : memref<8x1xf32, #tpu.memory_space<vmem>>, vector<8x1xf32>
      tpu.vector_store %arg9[%c0_34, %c0_35], %41 {strides = array<i32>} : memref<8x1xf32, #tpu.memory_space<vmem>>, vector<8x1xf32>,
      %cst_36 = arith.constant 0.000000e+00 : f32
      %43 = vector.broadcast %cst_36 : f32 to vector<8x1xf32>
      %c0_37 = arith.constant 0 : index
      %c0_38 = arith.constant 0 : index
      %44 = vector.load %arg10[%c0_37, %c0_38] : memref<8x1xf32, #tpu.memory_space<vmem>>, vector<8x1xf32>
      tpu.vector_store %arg10[%c0_37, %c0_38], %43 {strides = array<i32>} : memref<8x1xf32, #tpu.memory_space<vmem>>, vector<8x1xf32>,
      %cst_39 = arith.constant 0.000000e+00 : f32
      %45 = vector.broadcast %cst_39 : f32 to vector<8x8xf32>
      %c0_40 = arith.constant 0 : index
      %c0_41 = arith.constant 0 : index
      %46 = vector.load %arg11[%c0_40, %c0_41] : memref<8x8xf32, #tpu.memory_space<vmem>>, vector<8x8xf32>
      tpu.vector_store %arg11[%c0_40, %c0_41], %45 {strides = array<i32>} : memref<8x8xf32, #tpu.memory_space<vmem>>, vector<8x8xf32>,
    } else {
    }
    %c0 = arith.constant 0 : index
    %c0_1 = arith.constant 0 : index
    %c0_2 = arith.constant 0 : index
    %c0_3 = arith.constant 0 : index
    %3 = vector.load %arg4[%c0, %c0_1, %c0_2, %c0_3] : memref<1x1x8x8xbf16, #tpu.memory_space<vmem>>, vector<1x1x8x8xbf16>
    %4 = vector.shape_cast %3 : vector<1x1x8x8xbf16> to vector<8x8xbf16>
    %c0_4 = arith.constant 0 : index
    %c0_5 = arith.constant 0 : index
    %c0_6 = arith.constant 0 : index
    %c0_7 = arith.constant 0 : index
    %5 = vector.load %arg5[%c0_4, %c0_5, %c0_6, %c0_7] : memref<1x1x8x8xbf16, #tpu.memory_space<vmem>>, vector<1x1x8x8xbf16>
    %6 = vector.shape_cast %5 : vector<1x1x8x8xbf16> to vector<8x8xbf16>
    %7 = tpu.transpose %6, [1, 0] : vector<8x8xbf16> -> vector<8x8xbf16>
    %cst = arith.constant dense<0.000000e+00> : vector<8x8xf32>
    %8 = tpu.matmul %4, %7, %cst {dimension_numbers = #tpu.dot_dimension_numbers<[1], [0], [0], [1], [0, 0, 1, 1], [], []>} : vector<8x8xbf16>, vector<8x8xbf16>, vector<8x8xf32> -> vector<8x8xf32>
    %c0_8 = arith.constant 0 : index
    %c0_9 = arith.constant 0 : index
    %c0_10 = arith.constant 0 : index
    %c0_11 = arith.constant 0 : index
    %9 = vector.load %arg7[%c0_8, %c0_9, %c0_10, %c0_11] : memref<1x1x1x8xf32, #tpu.memory_space<vmem>>, vector<1x1x1x8xf32>
    %10 = vector.shape_cast %9 : vector<1x1x1x8xf32> to vector<1x8xf32>
    %11 = vector.broadcast %10 : vector<1x8xf32> to vector<8x8xf32>
    %12 = arith.addf %8, %11 : vector<8x8xf32>
    %c0_12 = arith.constant 0 : index
    %c0_13 = arith.constant 0 : index
    %13 = vector.load %arg9[%c0_12, %c0_13] : memref<8x1xf32, #tpu.memory_space<vmem>>, vector<8x1xf32>
    %cst_14 = arith.constant dense<0xFF800000> : vector<8xf32>
    %14 = vector.multi_reduction <maximumf>, %12, %cst_14 [1] : vector<8x8xf32> to vector<8xf32>
    %15 = vector.shape_cast %14 : vector<8xf32> to vector<8x1xf32>
    %16 = arith.maximumf %13, %15 : vector<8x1xf32>
    %17 = arith.subf %13, %16 : vector<8x1xf32>
    %18 = math.exp %17 : vector<8x1xf32>
    %19 = vector.broadcast %16 : vector<8x1xf32> to vector<8x8xf32>
    %20 = arith.subf %12, %19 : vector<8x8xf32>
    %21 = math.exp %20 : vector<8x8xf32>
    %c0_15 = arith.constant 0 : index
    %c0_16 = arith.constant 0 : index
    %22 = vector.load %arg10[%c0_15, %c0_16] : memref<8x1xf32, #tpu.memory_space<vmem>>, vector<8x1xf32>
    %23 = arith.mulf %18, %22 : vector<8x1xf32>
    %cst_17 = arith.constant dense<0.000000e+00> : vector<8xf32>
    %24 = vector.multi_reduction <add>, %21, %cst_17 [1] : vector<8x8xf32> to vector<8xf32>
    %25 = vector.shape_cast %24 : vector<8xf32> to vector<8x1xf32>
    %26 = arith.addf %23, %25 : vector<8x1xf32>
    %c0_18 = arith.constant 0 : index
    %c0_19 = arith.constant 0 : index
    %27 = vector.load %arg10[%c0_18, %c0_19] : memref<8x1xf32, #tpu.memory_space<vmem>>, vector<8x1xf32>
    tpu.vector_store %arg10[%c0_18, %c0_19], %26 {strides = array<i32>} : memref<8x1xf32, #tpu.memory_space<vmem>>, vector<8x1xf32>,
    %c0_20 = arith.constant 0 : index
    %c0_21 = arith.constant 0 : index
    %28 = vector.load %arg11[%c0_20, %c0_21] : memref<8x8xf32, #tpu.memory_space<vmem>>, vector<8x8xf32>
    %29 = vector.broadcast %18 : vector<8x1xf32> to vector<8x8xf32>
    %30 = arith.mulf %29, %28 : vector<8x8xf32>
    %31 = arith.truncf %21 : vector<8x8xf32> to vector<8x8xbf16>
    %c0_22 = arith.constant 0 : index
    %c0_23 = arith.constant 0 : index
    %c0_24 = arith.constant 0 : index
    %c0_25 = arith.constant 0 : index
    %32 = vector.load %arg6[%c0_22, %c0_23, %c0_24, %c0_25] : memref<1x1x8x8xbf16, #tpu.memory_space<vmem>>, vector<1x1x8x8xbf16>
    %33 = vector.shape_cast %32 : vector<1x1x8x8xbf16> to vector<8x8xbf16>
    %cst_26 = arith.constant dense<0.000000e+00> : vector<8x8xf32>
    %34 = tpu.matmul %31, %33, %cst_26 {dimension_numbers = #tpu.dot_dimension_numbers<[1], [0], [0], [1], [0, 0, 1, 1], [], []>} : vector<8x8xbf16>, vector<8x8xbf16>, vector<8x8xf32> -> vector<8x8xf32>
    %35 = arith.addf %30, %34 : vector<8x8xf32>
    %c0_27 = arith.constant 0 : index
    %c0_28 = arith.constant 0 : index
    %36 = vector.load %arg11[%c0_27, %c0_28] : memref<8x8xf32, #tpu.memory_space<vmem>>, vector<8x8xf32>
    tpu.vector_store %arg11[%c0_27, %c0_28], %35 {strides = array<i32>} : memref<8x8xf32, #tpu.memory_space<vmem>>, vector<8x8xf32>,
    %c0_29 = arith.constant 0 : index
    %c0_30 = arith.constant 0 : index
    %37 = vector.load %arg9[%c0_29, %c0_30] : memref<8x1xf32, #tpu.memory_space<vmem>>, vector<8x1xf32>
    tpu.vector_store %arg9[%c0_29, %c0_30], %16 {strides = array<i32>} : memref<8x1xf32, #tpu.memory_space<vmem>>, vector<8x1xf32>,
    %c0_i32_31 = arith.constant 0 : i32
    %38 = arith.cmpi eq, %arg3, %c0_i32_31 : i32
    %39 = arith.extui %38 : i1 to i32
    %c0_i32_32 = arith.constant 0 : i32
    %40 = arith.cmpi ne, %39, %c0_i32_32 : i32
    scf.if %40 {
      %c0_33 = arith.constant 0 : index
      %c0_34 = arith.constant 0 : index
      %41 = vector.load %arg10[%c0_33, %c0_34] : memref<8x1xf32, #tpu.memory_space<vmem>>, vector<8x1xf32>
      %42 = tpu.reciprocal %41 {approx = true} : vector<8x1xf32> -> vector<8x1xf32>
      %c0_35 = arith.constant 0 : index
      %c0_36 = arith.constant 0 : index
      %43 = vector.load %arg11[%c0_35, %c0_36] : memref<8x8xf32, #tpu.memory_space<vmem>>, vector<8x8xf32>
      %44 = vector.broadcast %42 : vector<8x1xf32> to vector<8x8xf32>
      %45 = arith.mulf %43, %44 : vector<8x8xf32>
      %46 = arith.truncf %45 : vector<8x8xf32> to vector<8x8xbf16>
      %c0_37 = arith.constant 0 : index
      %c0_38 = arith.constant 0 : index
      %c0_39 = arith.constant 0 : index
      %c0_40 = arith.constant 0 : index
      %47 = vector.load %arg8[%c0_37, %c0_38, %c0_39, %c0_40] : memref<1x1x8x8xbf16, #tpu.memory_space<vmem>>, vector<1x1x8x8xbf16>
      %48 = vector.shape_cast %47 : vector<1x1x8x8xbf16> to vector<8x8xbf16>
      %49 = vector.shape_cast %46 : vector<8x8xbf16> to vector<1x1x8x8xbf16>
      tpu.vector_store %arg8[%c0_37, %c0_38, %c0_39, %c0_40], %49 {strides = array<i32>} : memref<1x1x8x8xbf16, #tpu.memory_space<vmem>>, vector<1x1x8x8xbf16>,
    } else {
    }
    return
  }
  func.func @transform_0(%arg0: i32, %arg1: i32, %arg2: i32, %arg3: i32) -> (i32, i32, i32, i32) {
    %c0_i32 = arith.constant 0 : i32
    %c0_i32_0 = arith.constant 0 : i32
    return %arg0, %arg1, %arg2, %c0_i32 : i32, i32, i32, i32
  }
  func.func @transform_1(%arg0: i32, %arg1: i32, %arg2: i32, %arg3: i32) -> (i32, i32, i32, i32) {
    %c0_i32 = arith.constant 0 : i32
    %c0_i32_0 = arith.constant 0 : i32
    return %arg0, %arg1, %arg3, %c0_i32 : i32, i32, i32, i32
  }
  func.func @transform_2(%arg0: i32, %arg1: i32, %arg2: i32, %arg3: i32) -> (i32, i32, i32, i32) {
    %c0_i32 = arith.constant 0 : i32
    %c0_i32_0 = arith.constant 0 : i32
    return %arg0, %arg1, %arg3, %c0_i32 : i32, i32, i32, i32
  }
  func.func @transform_3(%arg0: i32, %arg1: i32, %arg2: i32, %arg3: i32) -> (i32, i32, i32, i32) {
    %c0_i32 = arith.constant 0 : i32
    %c0_i32_0 = arith.constant 0 : i32
    %c0_i32_1 = arith.constant 0 : i32
    return %arg0, %c0_i32, %c0_i32_0, %arg3 : i32, i32, i32, i32
  }
  func.func @transform_4(%arg0: i32, %arg1: i32, %arg2: i32, %arg3: i32) -> (i32, i32, i32, i32) {
    %c0_i32 = arith.constant 0 : i32
    %c0_i32_0 = arith.constant 0 : i32
    return %arg0, %arg1, %arg2, %c0_i32 : i32, i32, i32, i32
  }
}

module attributes {stable_mosaic.version = 11 : i64} {
  func.func @_matmul_res_ln_kernel(%arg0: i32, %arg1: i32, %arg2: memref<16x64xbf16, #tpu.memory_space<vmem>>, %arg3: memref<64x32xbf16, #tpu.memory_space<vmem>>, %arg4: memref<1x32xf32, #tpu.memory_space<vmem>>, %arg5: memref<16x32xbf16, #tpu.memory_space<vmem>>, %arg6: memref<1x32xf32, #tpu.memory_space<vmem>>, %arg7: memref<1x32xf32, #tpu.memory_space<vmem>>, %arg8: memref<16x32xbf16, #tpu.memory_space<vmem>>, %arg9: memref<16x32xf32, #tpu.memory_space<vmem>>) attributes {dimension_semantics = [#tpu.dimension_semantics<parallel>, #tpu.dimension_semantics<arbitrary>], iteration_bounds = array<i64: 1, 1>, scalar_prefetch = 0 : i64, scratch_operands = 1 : i64, tpu.core_type = #tpu.core_type<tc>, window_params = [{transform_indices = @transform_0, window_bounds = array<i64: 16, 64>}, {transform_indices = @transform_1, window_bounds = array<i64: 64, 32>}, {pipeline_mode = #tpu.pipeline_mode<synchronous>, transform_indices = @transform_2, window_bounds = array<i64: 1, 32>}, {transform_indices = @transform_3, window_bounds = array<i64: 16, 32>}, {pipeline_mode = #tpu.pipeline_mode<synchronous>, transform_indices = @transform_4, window_bounds = array<i64: 1, 32>}, {pipeline_mode = #tpu.pipeline_mode<synchronous>, transform_indices = @transform_5, window_bounds = array<i64: 1, 32>}, {transform_indices = @transform_6, window_bounds = array<i64: 16, 32>}]} {
    %c0_i32 = arith.constant 0 : i32
    %0 = arith.cmpi eq, %arg1, %c0_i32 : i32
    %1 = arith.extui %0 : i1 to i32
    %c0_i32_0 = arith.constant 0 : i32
    %2 = arith.cmpi ne, %1, %c0_i32_0 : i32
    scf.if %2 {
      %cst_10 = arith.constant 0.000000e+00 : f32
      %12 = vector.broadcast %cst_10 : f32 to vector<16x32xf32>
      %c0_11 = arith.constant 0 : index
      %c0_12 = arith.constant 0 : index
      %13 = vector.load %arg9[%c0_11, %c0_12] : memref<16x32xf32, #tpu.memory_space<vmem>>, vector<16x32xf32>
      tpu.vector_store %arg9[%c0_11, %c0_12], %12 {strides = array<i32>} : memref<16x32xf32, #tpu.memory_space<vmem>>, vector<16x32xf32>,
    } else {
    }
    %c0 = arith.constant 0 : index
    %c0_1 = arith.constant 0 : index
    %3 = vector.load %arg9[%c0, %c0_1] : memref<16x32xf32, #tpu.memory_space<vmem>>, vector<16x32xf32>
    %c0_2 = arith.constant 0 : index
    %c0_3 = arith.constant 0 : index
    %4 = vector.load %arg2[%c0_2, %c0_3] : memref<16x64xbf16, #tpu.memory_space<vmem>>, vector<16x64xbf16>
    %c0_4 = arith.constant 0 : index
    %c0_5 = arith.constant 0 : index
    %5 = vector.load %arg3[%c0_4, %c0_5] : memref<64x32xbf16, #tpu.memory_space<vmem>>, vector<64x32xbf16>
    %cst = arith.constant dense<0.000000e+00> : vector<16x32xf32>
    %6 = tpu.matmul %4, %5, %cst {dimension_numbers = #tpu.dot_dimension_numbers<[1], [0], [0], [1], [0, 0, 1, 1], [], []>} : vector<16x64xbf16>, vector<64x32xbf16>, vector<16x32xf32> -> vector<16x32xf32>
    %7 = arith.addf %3, %6 : vector<16x32xf32>
    %c0_6 = arith.constant 0 : index
    %c0_7 = arith.constant 0 : index
    %8 = vector.load %arg9[%c0_6, %c0_7] : memref<16x32xf32, #tpu.memory_space<vmem>>, vector<16x32xf32>
    tpu.vector_store %arg9[%c0_6, %c0_7], %7 {strides = array<i32>} : memref<16x32xf32, #tpu.memory_space<vmem>>, vector<16x32xf32>,
    %c0_i32_8 = arith.constant 0 : i32
    %9 = arith.cmpi eq, %arg1, %c0_i32_8 : i32
    %10 = arith.extui %9 : i1 to i32
    %c0_i32_9 = arith.constant 0 : i32
    %11 = arith.cmpi ne, %10, %c0_i32_9 : i32
    scf.if %11 {
      %c0_10 = arith.constant 0 : index
      %c0_11 = arith.constant 0 : index
      %12 = vector.load %arg9[%c0_10, %c0_11] : memref<16x32xf32, #tpu.memory_space<vmem>>, vector<16x32xf32>
      %c0_12 = arith.constant 0 : index
      %c0_13 = arith.constant 0 : index
      %13 = vector.load %arg4[%c0_12, %c0_13] : memref<1x32xf32, #tpu.memory_space<vmem>>, vector<1x32xf32>
      %14 = vector.broadcast %13 : vector<1x32xf32> to vector<16x32xf32>
      %15 = arith.addf %12, %14 : vector<16x32xf32>
      %c0_14 = arith.constant 0 : index
      %c0_15 = arith.constant 0 : index
      %16 = vector.load %arg5[%c0_14, %c0_15] : memref<16x32xbf16, #tpu.memory_space<vmem>>, vector<16x32xbf16>
      %17 = arith.extf %16 : vector<16x32xbf16> to vector<16x32xf32>
      %18 = arith.addf %15, %17 : vector<16x32xf32>
      %cst_16 = arith.constant dense<0.000000e+00> : vector<16xf32>
      %19 = vector.multi_reduction <add>, %18, %cst_16 [1] : vector<16x32xf32> to vector<16xf32>
      %20 = vector.shape_cast %19 : vector<16xf32> to vector<16x1xf32>
      %cst_17 = arith.constant 3.200000e+01 : f32
      %21 = vector.broadcast %cst_17 : f32 to vector<16x1xf32>
      %22 = arith.divf %20, %21 : vector<16x1xf32>
      %23 = vector.broadcast %22 : vector<16x1xf32> to vector<16x32xf32>
      %24 = arith.subf %18, %23 : vector<16x32xf32>
      %25 = arith.mulf %24, %24 : vector<16x32xf32>
      %cst_18 = arith.constant dense<0.000000e+00> : vector<16xf32>
      %26 = vector.multi_reduction <add>, %25, %cst_18 [1] : vector<16x32xf32> to vector<16xf32>
      %27 = vector.shape_cast %26 : vector<16xf32> to vector<16x1xf32>
      %cst_19 = arith.constant 3.200000e+01 : f32
      %28 = vector.broadcast %cst_19 : f32 to vector<16x1xf32>
      %29 = arith.divf %27, %28 : vector<16x1xf32>
      %cst_20 = arith.constant 9.99999996E-13 : f32
      %30 = vector.broadcast %cst_20 : f32 to vector<16x1xf32>
      %31 = arith.addf %29, %30 : vector<16x1xf32>
      %32 = math.rsqrt %31 : vector<16x1xf32>
      %33 = vector.broadcast %32 : vector<16x1xf32> to vector<16x32xf32>
      %34 = arith.mulf %24, %33 : vector<16x32xf32>
      %c0_21 = arith.constant 0 : index
      %c0_22 = arith.constant 0 : index
      %35 = vector.load %arg6[%c0_21, %c0_22] : memref<1x32xf32, #tpu.memory_space<vmem>>, vector<1x32xf32>
      %36 = vector.broadcast %35 : vector<1x32xf32> to vector<16x32xf32>
      %37 = arith.mulf %34, %36 : vector<16x32xf32>
      %c0_23 = arith.constant 0 : index
      %c0_24 = arith.constant 0 : index
      %38 = vector.load %arg7[%c0_23, %c0_24] : memref<1x32xf32, #tpu.memory_space<vmem>>, vector<1x32xf32>
      %39 = vector.broadcast %38 : vector<1x32xf32> to vector<16x32xf32>
      %40 = arith.addf %37, %39 : vector<16x32xf32>
      %41 = arith.truncf %40 : vector<16x32xf32> to vector<16x32xbf16>
      %c0_25 = arith.constant 0 : index
      %c0_26 = arith.constant 0 : index
      %42 = vector.load %arg8[%c0_25, %c0_26] : memref<16x32xbf16, #tpu.memory_space<vmem>>, vector<16x32xbf16>
      tpu.vector_store %arg8[%c0_25, %c0_26], %41 {strides = array<i32>} : memref<16x32xbf16, #tpu.memory_space<vmem>>, vector<16x32xbf16>,
    } else {
    }
    return
  }
  func.func @transform_0(%arg0: i32, %arg1: i32) -> (i32, i32) {
    %c0_i32 = arith.constant 0 : i32
    return %arg0, %arg1 : i32, i32
  }
  func.func @transform_1(%arg0: i32, %arg1: i32) -> (i32, i32) {
    %c0_i32 = arith.constant 0 : i32
    %c0_i32_0 = arith.constant 0 : i32
    return %arg1, %c0_i32 : i32, i32
  }
  func.func @transform_2(%arg0: i32, %arg1: i32) -> (i32, i32) {
    %c0_i32 = arith.constant 0 : i32
    %c0_i32_0 = arith.constant 0 : i32
    %c0_i32_1 = arith.constant 0 : i32
    return %c0_i32, %c0_i32_0 : i32, i32
  }
  func.func @transform_3(%arg0: i32, %arg1: i32) -> (i32, i32) {
    %c0_i32 = arith.constant 0 : i32
    %c0_i32_0 = arith.constant 0 : i32
    return %arg0, %c0_i32 : i32, i32
  }
  func.func @transform_4(%arg0: i32, %arg1: i32) -> (i32, i32) {
    %c0_i32 = arith.constant 0 : i32
    %c0_i32_0 = arith.constant 0 : i32
    %c0_i32_1 = arith.constant 0 : i32
    return %c0_i32, %c0_i32_0 : i32, i32
  }
  func.func @transform_5(%arg0: i32, %arg1: i32) -> (i32, i32) {
    %c0_i32 = arith.constant 0 : i32
    %c0_i32_0 = arith.constant 0 : i32
    %c0_i32_1 = arith.constant 0 : i32
    return %c0_i32, %c0_i32_0 : i32, i32
  }
  func.func @transform_6(%arg0: i32, %arg1: i32) -> (i32, i32) {
    %c0_i32 = arith.constant 0 : i32
    %c0_i32_0 = arith.constant 0 : i32
    return %arg0, %c0_i32 : i32, i32
  }
}

module attributes {stable_mosaic.version = 11 : i64} {
  func.func @_matmul_kernel(%arg0: i32, %arg1: i32, %arg2: i32, %arg3: memref<16x32xbf16, #tpu.memory_space<vmem>>, %arg4: memref<32x64xbf16, #tpu.memory_space<vmem>>, %arg5: memref<1x64xf32, #tpu.memory_space<vmem>>, %arg6: memref<16x64xbf16, #tpu.memory_space<vmem>>, %arg7: memref<16x64xf32, #tpu.memory_space<vmem>>) attributes {dimension_semantics = [#tpu.dimension_semantics<parallel>, #tpu.dimension_semantics<parallel>, #tpu.dimension_semantics<arbitrary>], iteration_bounds = array<i64: 1, 1, 1>, scalar_prefetch = 0 : i64, scratch_operands = 1 : i64, tpu.core_type = #tpu.core_type<tc>, window_params = [{transform_indices = @transform_0, window_bounds = array<i64: 16, 32>}, {transform_indices = @transform_1, window_bounds = array<i64: 32, 64>}, {transform_indices = @transform_2, window_bounds = array<i64: 1, 64>}, {transform_indices = @transform_3, window_bounds = array<i64: 16, 64>}]} {
    %c0_i32 = arith.constant 0 : i32
    %0 = arith.cmpi eq, %arg2, %c0_i32 : i32
    %1 = arith.extui %0 : i1 to i32
    %c0_i32_0 = arith.constant 0 : i32
    %2 = arith.cmpi ne, %1, %c0_i32_0 : i32
    scf.if %2 {
      %cst_10 = arith.constant 0.000000e+00 : f32
      %12 = vector.broadcast %cst_10 : f32 to vector<16x64xf32>
      %c0_11 = arith.constant 0 : index
      %c0_12 = arith.constant 0 : index
      %13 = vector.load %arg7[%c0_11, %c0_12] : memref<16x64xf32, #tpu.memory_space<vmem>>, vector<16x64xf32>
      tpu.vector_store %arg7[%c0_11, %c0_12], %12 {strides = array<i32>} : memref<16x64xf32, #tpu.memory_space<vmem>>, vector<16x64xf32>,
    } else {
    }
    %c0 = arith.constant 0 : index
    %c0_1 = arith.constant 0 : index
    %3 = vector.load %arg7[%c0, %c0_1] : memref<16x64xf32, #tpu.memory_space<vmem>>, vector<16x64xf32>
    %c0_2 = arith.constant 0 : index
    %c0_3 = arith.constant 0 : index
    %4 = vector.load %arg3[%c0_2, %c0_3] : memref<16x32xbf16, #tpu.memory_space<vmem>>, vector<16x32xbf16>
    %c0_4 = arith.constant 0 : index
    %c0_5 = arith.constant 0 : index
    %5 = vector.load %arg4[%c0_4, %c0_5] : memref<32x64xbf16, #tpu.memory_space<vmem>>, vector<32x64xbf16>
    %cst = arith.constant dense<0.000000e+00> : vector<16x64xf32>
    %6 = tpu.matmul %4, %5, %cst {dimension_numbers = #tpu.dot_dimension_numbers<[1], [0], [0], [1], [0, 0, 1, 1], [], []>} : vector<16x32xbf16>, vector<32x64xbf16>, vector<16x64xf32> -> vector<16x64xf32>
    %7 = arith.addf %3, %6 : vector<16x64xf32>
    %c0_6 = arith.constant 0 : index
    %c0_7 = arith.constant 0 : index
    %8 = vector.load %arg7[%c0_6, %c0_7] : memref<16x64xf32, #tpu.memory_space<vmem>>, vector<16x64xf32>
    tpu.vector_store %arg7[%c0_6, %c0_7], %7 {strides = array<i32>} : memref<16x64xf32, #tpu.memory_space<vmem>>, vector<16x64xf32>,
    %c0_i32_8 = arith.constant 0 : i32
    %9 = arith.cmpi eq, %arg2, %c0_i32_8 : i32
    %10 = arith.extui %9 : i1 to i32
    %c0_i32_9 = arith.constant 0 : i32
    %11 = arith.cmpi ne, %10, %c0_i32_9 : i32
    scf.if %11 {
      %c0_10 = arith.constant 0 : index
      %c0_11 = arith.constant 0 : index
      %12 = vector.load %arg7[%c0_10, %c0_11] : memref<16x64xf32, #tpu.memory_space<vmem>>, vector<16x64xf32>
      %c0_12 = arith.constant 0 : index
      %c0_13 = arith.constant 0 : index
      %13 = vector.load %arg5[%c0_12, %c0_13] : memref<1x64xf32, #tpu.memory_space<vmem>>, vector<1x64xf32>
      %14 = vector.broadcast %13 : vector<1x64xf32> to vector<16x64xf32>
      %15 = arith.addf %12, %14 : vector<16x64xf32>
      %16 = arith.mulf %15, %15 : vector<16x64xf32>
      %17 = arith.mulf %15, %16 : vector<16x64xf32>
      %cst_14 = arith.constant 4.471500e-02 : f32
      %18 = vector.broadcast %cst_14 : f32 to vector<16x64xf32>
      %19 = arith.mulf %18, %17 : vector<16x64xf32>
      %20 = arith.addf %15, %19 : vector<16x64xf32>
      %cst_15 = arith.constant 0.797884583 : f32
      %21 = vector.broadcast %cst_15 : f32 to vector<16x64xf32>
      %22 = arith.mulf %21, %20 : vector<16x64xf32>
      %23 = math.tanh %22 : vector<16x64xf32>
      %cst_16 = arith.constant 1.000000e+00 : f32
      %24 = vector.broadcast %cst_16 : f32 to vector<16x64xf32>
      %25 = arith.addf %24, %23 : vector<16x64xf32>
      %cst_17 = arith.constant 5.000000e-01 : f32
      %26 = vector.broadcast %cst_17 : f32 to vector<16x64xf32>
      %27 = arith.mulf %26, %25 : vector<16x64xf32>
      %28 = arith.mulf %15, %27 : vector<16x64xf32>
      %29 = arith.truncf %28 : vector<16x64xf32> to vector<16x64xbf16>
      %c0_18 = arith.constant 0 : index
      %c0_19 = arith.constant 0 : index
      %30 = vector.load %arg6[%c0_18, %c0_19] : memref<16x64xbf16, #tpu.memory_space<vmem>>, vector<16x64xbf16>
      tpu.vector_store %arg6[%c0_18, %c0_19], %29 {strides = array<i32>} : memref<16x64xbf16, #tpu.memory_space<vmem>>, vector<16x64xbf16>,
    } else {
    }
    return
  }
  func.func @transform_0(%arg0: i32, %arg1: i32, %arg2: i32) -> (i32, i32) {
    %c0_i32 = arith.constant 0 : i32
    return %arg0, %arg2 : i32, i32
  }
  func.func @transform_1(%arg0: i32, %arg1: i32, %arg2: i32) -> (i32, i32) {
    %c0_i32 = arith.constant 0 : i32
    return %arg2, %arg1 : i32, i32
  }
  func.func @transform_2(%arg0: i32, %arg1: i32, %arg2: i32) -> (i32, i32) {
    %c0_i32 = arith.constant 0 : i32
    %c0_i32_0 = arith.constant 0 : i32
    return %c0_i32, %arg1 : i32, i32
  }
  func.func @transform_3(%arg0: i32, %arg1: i32, %arg2: i32) -> (i32, i32) {
    %c0_i32 = arith.constant 0 : i32
    return %arg0, %arg1 : i32, i32
  }
}

module attributes {stable_mosaic.version = 11 : i64} {
  func.func @_matmul_res_ln_kernel(%arg0: i32, %arg1: i32, %arg2: memref<16x32xbf16, #tpu.memory_space<vmem>>, %arg3: memref<32x32xbf16, #tpu.memory_space<vmem>>, %arg4: memref<1x32xf32, #tpu.memory_space<vmem>>, %arg5: memref<16x32xbf16, #tpu.memory_space<vmem>>, %arg6: memref<1x32xf32, #tpu.memory_space<vmem>>, %arg7: memref<1x32xf32, #tpu.memory_space<vmem>>, %arg8: memref<16x32xbf16, #tpu.memory_space<vmem>>, %arg9: memref<16x32xf32, #tpu.memory_space<vmem>>) attributes {dimension_semantics = [#tpu.dimension_semantics<parallel>, #tpu.dimension_semantics<arbitrary>], iteration_bounds = array<i64: 1, 1>, scalar_prefetch = 0 : i64, scratch_operands = 1 : i64, tpu.core_type = #tpu.core_type<tc>, window_params = [{transform_indices = @transform_0, window_bounds = array<i64: 16, 32>}, {transform_indices = @transform_1, window_bounds = array<i64: 32, 32>}, {pipeline_mode = #tpu.pipeline_mode<synchronous>, transform_indices = @transform_2, window_bounds = array<i64: 1, 32>}, {transform_indices = @transform_3, window_bounds = array<i64: 16, 32>}, {pipeline_mode = #tpu.pipeline_mode<synchronous>, transform_indices = @transform_4, window_bounds = array<i64: 1, 32>}, {pipeline_mode = #tpu.pipeline_mode<synchronous>, transform_indices = @transform_5, window_bounds = array<i64: 1, 32>}, {transform_indices = @transform_6, window_bounds = array<i64: 16, 32>}]} {
    %c0_i32 = arith.constant 0 : i32
    %0 = arith.cmpi eq, %arg1, %c0_i32 : i32
    %1 = arith.extui %0 : i1 to i32
    %c0_i32_0 = arith.constant 0 : i32
    %2 = arith.cmpi ne, %1, %c0_i32_0 : i32
    scf.if %2 {
      %cst_10 = arith.constant 0.000000e+00 : f32
      %12 = vector.broadcast %cst_10 : f32 to vector<16x32xf32>
      %c0_11 = arith.constant 0 : index
      %c0_12 = arith.constant 0 : index
      %13 = vector.load %arg9[%c0_11, %c0_12] : memref<16x32xf32, #tpu.memory_space<vmem>>, vector<16x32xf32>
      tpu.vector_store %arg9[%c0_11, %c0_12], %12 {strides = array<i32>} : memref<16x32xf32, #tpu.memory_space<vmem>>, vector<16x32xf32>,
    } else {
    }
    %c0 = arith.constant 0 : index
    %c0_1 = arith.constant 0 : index
    %3 = vector.load %arg9[%c0, %c0_1] : memref<16x32xf32, #tpu.memory_space<vmem>>, vector<16x32xf32>
    %c0_2 = arith.constant 0 : index
    %c0_3 = arith.constant 0 : index
    %4 = vector.load %arg2[%c0_2, %c0_3] : memref<16x32xbf16, #tpu.memory_space<vmem>>, vector<16x32xbf16>
    %c0_4 = arith.constant 0 : index
    %c0_5 = arith.constant 0 : index
    %5 = vector.load %arg3[%c0_4, %c0_5] : memref<32x32xbf16, #tpu.memory_space<vmem>>, vector<32x32xbf16>
    %cst = arith.constant dense<0.000000e+00> : vector<16x32xf32>
    %6 = tpu.matmul %4, %5, %cst {dimension_numbers = #tpu.dot_dimension_numbers<[1], [0], [0], [1], [0, 0, 1, 1], [], []>} : vector<16x32xbf16>, vector<32x32xbf16>, vector<16x32xf32> -> vector<16x32xf32>
    %7 = arith.addf %3, %6 : vector<16x32xf32>
    %c0_6 = arith.constant 0 : index
    %c0_7 = arith.constant 0 : index
    %8 = vector.load %arg9[%c0_6, %c0_7] : memref<16x32xf32, #tpu.memory_space<vmem>>, vector<16x32xf32>
    tpu.vector_store %arg9[%c0_6, %c0_7], %7 {strides = array<i32>} : memref<16x32xf32, #tpu.memory_space<vmem>>, vector<16x32xf32>,
    %c0_i32_8 = arith.constant 0 : i32
    %9 = arith.cmpi eq, %arg1, %c0_i32_8 : i32
    %10 = arith.extui %9 : i1 to i32
    %c0_i32_9 = arith.constant 0 : i32
    %11 = arith.cmpi ne, %10, %c0_i32_9 : i32
    scf.if %11 {
      %c0_10 = arith.constant 0 : index
      %c0_11 = arith.constant 0 : index
      %12 = vector.load %arg9[%c0_10, %c0_11] : memref<16x32xf32, #tpu.memory_space<vmem>>, vector<16x32xf32>
      %c0_12 = arith.constant 0 : index
      %c0_13 = arith.constant 0 : index
      %13 = vector.load %arg4[%c0_12, %c0_13] : memref<1x32xf32, #tpu.memory_space<vmem>>, vector<1x32xf32>
      %14 = vector.broadcast %13 : vector<1x32xf32> to vector<16x32xf32>
      %15 = arith.addf %12, %14 : vector<16x32xf32>
      %c0_14 = arith.constant 0 : index
      %c0_15 = arith.constant 0 : index
      %16 = vector.load %arg5[%c0_14, %c0_15] : memref<16x32xbf16, #tpu.memory_space<vmem>>, vector<16x32xbf16>
      %17 = arith.extf %16 : vector<16x32xbf16> to vector<16x32xf32>
      %18 = arith.addf %15, %17 : vector<16x32xf32>
      %cst_16 = arith.constant dense<0.000000e+00> : vector<16xf32>
      %19 = vector.multi_reduction <add>, %18, %cst_16 [1] : vector<16x32xf32> to vector<16xf32>
      %20 = vector.shape_cast %19 : vector<16xf32> to vector<16x1xf32>
      %cst_17 = arith.constant 3.200000e+01 : f32
      %21 = vector.broadcast %cst_17 : f32 to vector<16x1xf32>
      %22 = arith.divf %20, %21 : vector<16x1xf32>
      %23 = vector.broadcast %22 : vector<16x1xf32> to vector<16x32xf32>
      %24 = arith.subf %18, %23 : vector<16x32xf32>
      %25 = arith.mulf %24, %24 : vector<16x32xf32>
      %cst_18 = arith.constant dense<0.000000e+00> : vector<16xf32>
      %26 = vector.multi_reduction <add>, %25, %cst_18 [1] : vector<16x32xf32> to vector<16xf32>
      %27 = vector.shape_cast %26 : vector<16xf32> to vector<16x1xf32>
      %cst_19 = arith.constant 3.200000e+01 : f32
      %28 = vector.broadcast %cst_19 : f32 to vector<16x1xf32>
      %29 = arith.divf %27, %28 : vector<16x1xf32>
      %cst_20 = arith.constant 9.99999996E-13 : f32
      %30 = vector.broadcast %cst_20 : f32 to vector<16x1xf32>
      %31 = arith.addf %29, %30 : vector<16x1xf32>
      %32 = math.rsqrt %31 : vector<16x1xf32>
      %33 = vector.broadcast %32 : vector<16x1xf32> to vector<16x32xf32>
      %34 = arith.mulf %24, %33 : vector<16x32xf32>
      %c0_21 = arith.constant 0 : index
      %c0_22 = arith.constant 0 : index
      %35 = vector.load %arg6[%c0_21, %c0_22] : memref<1x32xf32, #tpu.memory_space<vmem>>, vector<1x32xf32>
      %36 = vector.broadcast %35 : vector<1x32xf32> to vector<16x32xf32>
      %37 = arith.mulf %34, %36 : vector<16x32xf32>
      %c0_23 = arith.constant 0 : index
      %c0_24 = arith.constant 0 : index
      %38 = vector.load %arg7[%c0_23, %c0_24] : memref<1x32xf32, #tpu.memory_space<vmem>>, vector<1x32xf32>
      %39 = vector.broadcast %38 : vector<1x32xf32> to vector<16x32xf32>
      %40 = arith.addf %37, %39 : vector<16x32xf32>
      %41 = arith.truncf %40 : vector<16x32xf32> to vector<16x32xbf16>
      %c0_25 = arith.constant 0 : index
      %c0_26 = arith.constant 0 : index
      %42 = vector.load %arg8[%c0_25, %c0_26] : memref<16x32xbf16, #tpu.memory_space<vmem>>, vector<16x32xbf16>
      tpu.vector_store %arg8[%c0_25, %c0_26], %41 {strides = array<i32>} : memref<16x32xbf16, #tpu.memory_space<vmem>>, vector<16x32xbf16>,
    } else {
    }
    return
  }
  func.func @transform_0(%arg0: i32, %arg1: i32) -> (i32, i32) {
    %c0_i32 = arith.constant 0 : i32
    return %arg0, %arg1 : i32, i32
  }
  func.func @transform_1(%arg0: i32, %arg1: i32) -> (i32, i32) {
    %c0_i32 = arith.constant 0 : i32
    %c0_i32_0 = arith.constant 0 : i32
    return %arg1, %c0_i32 : i32, i32
  }
  func.func @transform_2(%arg0: i32, %arg1: i32) -> (i32, i32) {
    %c0_i32 = arith.constant 0 : i32
    %c0_i32_0 = arith.constant 0 : i32
    %c0_i32_1 = arith.constant 0 : i32
    return %c0_i32, %c0_i32_0 : i32, i32
  }
  func.func @transform_3(%arg0: i32, %arg1: i32) -> (i32, i32) {
    %c0_i32 = arith.constant 0 : i32
    %c0_i32_0 = arith.constant 0 : i32
    return %arg0, %c0_i32 : i32, i32
  }
  func.func @transform_4(%arg0: i32, %arg1: i32) -> (i32, i32) {
    %c0_i32 = arith.constant 0 : i32
    %c0_i32_0 = arith.constant 0 : i32
    %c0_i32_1 = arith.constant 0 : i32
    return %c0_i32, %c0_i32_0 : i32, i32
  }
  func.func @transform_5(%arg0: i32, %arg1: i32) -> (i32, i32) {
    %c0_i32 = arith.constant 0 : i32
    %c0_i32_0 = arith.constant 0 : i32
    %c0_i32_1 = arith.constant 0 : i32
    return %c0_i32, %c0_i32_0 : i32, i32
  }
  func.func @transform_6(%arg0: i32, %arg1: i32) -> (i32, i32) {
    %c0_i32 = arith.constant 0 : i32
    %c0_i32_0 = arith.constant 0 : i32
    return %arg0, %c0_i32 : i32, i32
  }
}

module attributes {stable_mosaic.version = 11 : i64} {
  func.func @_matmul_kernel(%arg0: i32, %arg1: i32, %arg2: i32, %arg3: memref<2x32xbf16, #tpu.memory_space<vmem>>, %arg4: memref<32x32xbf16, #tpu.memory_space<vmem>>, %arg5: memref<1x32xf32, #tpu.memory_space<vmem>>, %arg6: memref<2x32xbf16, #tpu.memory_space<vmem>>, %arg7: memref<2x32xf32, #tpu.memory_space<vmem>>) attributes {dimension_semantics = [#tpu.dimension_semantics<parallel>, #tpu.dimension_semantics<parallel>, #tpu.dimension_semantics<arbitrary>], iteration_bounds = array<i64: 1, 1, 1>, scalar_prefetch = 0 : i64, scratch_operands = 1 : i64, tpu.core_type = #tpu.core_type<tc>, window_params = [{transform_indices = @transform_0, window_bounds = array<i64: 2, 32>}, {transform_indices = @transform_1, window_bounds = array<i64: 32, 32>}, {transform_indices = @transform_2, window_bounds = array<i64: 1, 32>}, {transform_indices = @transform_3, window_bounds = array<i64: 2, 32>}]} {
    %c0_i32 = arith.constant 0 : i32
    %0 = arith.cmpi eq, %arg2, %c0_i32 : i32
    %1 = arith.extui %0 : i1 to i32
    %c0_i32_0 = arith.constant 0 : i32
    %2 = arith.cmpi ne, %1, %c0_i32_0 : i32
    scf.if %2 {
      %cst_10 = arith.constant 0.000000e+00 : f32
      %12 = vector.broadcast %cst_10 : f32 to vector<2x32xf32>
      %c0_11 = arith.constant 0 : index
      %c0_12 = arith.constant 0 : index
      %13 = vector.load %arg7[%c0_11, %c0_12] : memref<2x32xf32, #tpu.memory_space<vmem>>, vector<2x32xf32>
      tpu.vector_store %arg7[%c0_11, %c0_12], %12 {strides = array<i32>} : memref<2x32xf32, #tpu.memory_space<vmem>>, vector<2x32xf32>,
    } else {
    }
    %c0 = arith.constant 0 : index
    %c0_1 = arith.constant 0 : index
    %3 = vector.load %arg7[%c0, %c0_1] : memref<2x32xf32, #tpu.memory_space<vmem>>, vector<2x32xf32>
    %c0_2 = arith.constant 0 : index
    %c0_3 = arith.constant 0 : index
    %4 = vector.load %arg3[%c0_2, %c0_3] : memref<2x32xbf16, #tpu.memory_space<vmem>>, vector<2x32xbf16>
    %c0_4 = arith.constant 0 : index
    %c0_5 = arith.constant 0 : index
    %5 = vector.load %arg4[%c0_4, %c0_5] : memref<32x32xbf16, #tpu.memory_space<vmem>>, vector<32x32xbf16>
    %cst = arith.constant dense<0.000000e+00> : vector<2x32xf32>
    %6 = tpu.matmul %4, %5, %cst {dimension_numbers = #tpu.dot_dimension_numbers<[1], [0], [0], [1], [0, 0, 1, 1], [], []>} : vector<2x32xbf16>, vector<32x32xbf16>, vector<2x32xf32> -> vector<2x32xf32>
    %7 = arith.addf %3, %6 : vector<2x32xf32>
    %c0_6 = arith.constant 0 : index
    %c0_7 = arith.constant 0 : index
    %8 = vector.load %arg7[%c0_6, %c0_7] : memref<2x32xf32, #tpu.memory_space<vmem>>, vector<2x32xf32>
    tpu.vector_store %arg7[%c0_6, %c0_7], %7 {strides = array<i32>} : memref<2x32xf32, #tpu.memory_space<vmem>>, vector<2x32xf32>,
    %c0_i32_8 = arith.constant 0 : i32
    %9 = arith.cmpi eq, %arg2, %c0_i32_8 : i32
    %10 = arith.extui %9 : i1 to i32
    %c0_i32_9 = arith.constant 0 : i32
    %11 = arith.cmpi ne, %10, %c0_i32_9 : i32
    scf.if %11 {
      %c0_10 = arith.constant 0 : index
      %c0_11 = arith.constant 0 : index
      %12 = vector.load %arg7[%c0_10, %c0_11] : memref<2x32xf32, #tpu.memory_space<vmem>>, vector<2x32xf32>
      %c0_12 = arith.constant 0 : index
      %c0_13 = arith.constant 0 : index
      %13 = vector.load %arg5[%c0_12, %c0_13] : memref<1x32xf32, #tpu.memory_space<vmem>>, vector<1x32xf32>
      %14 = vector.broadcast %13 : vector<1x32xf32> to vector<2x32xf32>
      %15 = arith.addf %12, %14 : vector<2x32xf32>
      %16 = math.tanh %15 : vector<2x32xf32>
      %17 = arith.truncf %16 : vector<2x32xf32> to vector<2x32xbf16>
      %c0_14 = arith.constant 0 : index
      %c0_15 = arith.constant 0 : index
      %18 = vector.load %arg6[%c0_14, %c0_15] : memref<2x32xbf16, #tpu.memory_space<vmem>>, vector<2x32xbf16>
      tpu.vector_store %arg6[%c0_14, %c0_15], %17 {strides = array<i32>} : memref<2x32xbf16, #tpu.memory_space<vmem>>, vector<2x32xbf16>,
    } else {
    }
    return
  }
  func.func @transform_0(%arg0: i32, %arg1: i32, %arg2: i32) -> (i32, i32) {
    %c0_i32 = arith.constant 0 : i32
    return %arg0, %arg2 : i32, i32
  }
  func.func @transform_1(%arg0: i32, %arg1: i32, %arg2: i32) -> (i32, i32) {
    %c0_i32 = arith.constant 0 : i32
    return %arg2, %arg1 : i32, i32
  }
  func.func @transform_2(%arg0: i32, %arg1: i32, %arg2: i32) -> (i32, i32) {
    %c0_i32 = arith.constant 0 : i32
    %c0_i32_0 = arith.constant 0 : i32
    return %c0_i32, %arg1 : i32, i32
  }
  func.func @transform_3(%arg0: i32, %arg1: i32, %arg2: i32) -> (i32, i32) {
    %c0_i32 = arith.constant 0 : i32
    return %arg0, %arg1 : i32, i32
  }
}

module attributes {stable_mosaic.version = 11 : i64} {
  func.func @_matmul_kernel(%arg0: i32, %arg1: i32, %arg2: i32, %arg3: memref<2x32xbf16, #tpu.memory_space<vmem>>, %arg4: memref<32x128xbf16, #tpu.memory_space<vmem>>, %arg5: memref<1x128xf32, #tpu.memory_space<vmem>>, %arg6: memref<2x128xf32, #tpu.memory_space<vmem>>, %arg7: memref<2x128xf32, #tpu.memory_space<vmem>>) attributes {dimension_semantics = [#tpu.dimension_semantics<parallel>, #tpu.dimension_semantics<parallel>, #tpu.dimension_semantics<arbitrary>], iteration_bounds = array<i64: 1, 1, 1>, scalar_prefetch = 0 : i64, scratch_operands = 1 : i64, tpu.core_type = #tpu.core_type<tc>, window_params = [{transform_indices = @transform_0, window_bounds = array<i64: 2, 32>}, {transform_indices = @transform_1, window_bounds = array<i64: 32, 128>}, {transform_indices = @transform_2, window_bounds = array<i64: 1, 128>}, {transform_indices = @transform_3, window_bounds = array<i64: 2, 128>}]} {
    %c0_i32 = arith.constant 0 : i32
    %0 = arith.cmpi eq, %arg2, %c0_i32 : i32
    %1 = arith.extui %0 : i1 to i32
    %c0_i32_0 = arith.constant 0 : i32
    %2 = arith.cmpi ne, %1, %c0_i32_0 : i32
    scf.if %2 {
      %cst_10 = arith.constant 0.000000e+00 : f32
      %12 = vector.broadcast %cst_10 : f32 to vector<2x128xf32>
      %c0_11 = arith.constant 0 : index
      %c0_12 = arith.constant 0 : index
      %13 = vector.load %arg7[%c0_11, %c0_12] : memref<2x128xf32, #tpu.memory_space<vmem>>, vector<2x128xf32>
      tpu.vector_store %arg7[%c0_11, %c0_12], %12 {strides = array<i32>} : memref<2x128xf32, #tpu.memory_space<vmem>>, vector<2x128xf32>,
    } else {
    }
    %c0 = arith.constant 0 : index
    %c0_1 = arith.constant 0 : index
    %3 = vector.load %arg7[%c0, %c0_1] : memref<2x128xf32, #tpu.memory_space<vmem>>, vector<2x128xf32>
    %c0_2 = arith.constant 0 : index
    %c0_3 = arith.constant 0 : index
    %4 = vector.load %arg3[%c0_2, %c0_3] : memref<2x32xbf16, #tpu.memory_space<vmem>>, vector<2x32xbf16>
    %c0_4 = arith.constant 0 : index
    %c0_5 = arith.constant 0 : index
    %5 = vector.load %arg4[%c0_4, %c0_5] : memref<32x128xbf16, #tpu.memory_space<vmem>>, vector<32x128xbf16>
    %cst = arith.constant dense<0.000000e+00> : vector<2x128xf32>
    %6 = tpu.matmul %4, %5, %cst {dimension_numbers = #tpu.dot_dimension_numbers<[1], [0], [0], [1], [0, 0, 1, 1], [], []>} : vector<2x32xbf16>, vector<32x128xbf16>, vector<2x128xf32> -> vector<2x128xf32>
    %7 = arith.addf %3, %6 : vector<2x128xf32>
    %c0_6 = arith.constant 0 : index
    %c0_7 = arith.constant 0 : index
    %8 = vector.load %arg7[%c0_6, %c0_7] : memref<2x128xf32, #tpu.memory_space<vmem>>, vector<2x128xf32>
    tpu.vector_store %arg7[%c0_6, %c0_7], %7 {strides = array<i32>} : memref<2x128xf32, #tpu.memory_space<vmem>>, vector<2x128xf32>,
    %c0_i32_8 = arith.constant 0 : i32
    %9 = arith.cmpi eq, %arg2, %c0_i32_8 : i32
    %10 = arith.extui %9 : i1 to i32
    %c0_i32_9 = arith.constant 0 : i32
    %11 = arith.cmpi ne, %10, %c0_i32_9 : i32
    scf.if %11 {
      %c0_10 = arith.constant 0 : index
      %c0_11 = arith.constant 0 : index
      %12 = vector.load %arg7[%c0_10, %c0_11] : memref<2x128xf32, #tpu.memory_space<vmem>>, vector<2x128xf32>
      %c0_12 = arith.constant 0 : index
      %c0_13 = arith.constant 0 : index
      %13 = vector.load %arg5[%c0_12, %c0_13] : memref<1x128xf32, #tpu.memory_space<vmem>>, vector<1x128xf32>
      %14 = vector.broadcast %13 : vector<1x128xf32> to vector<2x128xf32>
      %15 = arith.addf %12, %14 : vector<2x128xf32>
      %c0_14 = arith.constant 0 : index
      %c0_15 = arith.constant 0 : index
      %16 = vector.load %arg6[%c0_14, %c0_15] : memref<2x128xf32, #tpu.memory_space<vmem>>, vector<2x128xf32>
      tpu.vector_store %arg6[%c0_14, %c0_15], %15 {strides = array<i32>} : memref<2x128xf32, #tpu.memory_space<vmem>>, vector<2x128xf32>,
    } else {
    }
    return
  }
  func.func @transform_0(%arg0: i32, %arg1: i32, %arg2: i32) -> (i32, i32) {
    %c0_i32 = arith.constant 0 : i32
    return %arg0, %arg2 : i32, i32
  }
  func.func @transform_1(%arg0: i32, %arg1: i32, %arg2: i32) -> (i32, i32) {
    %c0_i32 = arith.constant 0 : i32
    return %arg2, %arg1 : i32, i32
  }
  func.func @transform_2(%arg0: i32, %arg1: i32, %arg2: i32) -> (i32, i32) {
    %c0_i32 = arith.constant 0 : i32
    %c0_i32_0 = arith.constant 0 : i32
    return %c0_i32, %arg1 : i32, i32
  }
  func.func @transform_3(%arg0: i32, %arg1: i32, %arg2: i32) -> (i32, i32) {
    %c0_i32 = arith.constant 0 : i32
    return %arg0, %arg1 : i32, i32
  }
}

module attributes {stable_mosaic.version = 11 : i64} {
  func.func @_cls_head_kernel(%arg0: memref<2x128xf32, #tpu.memory_space<vmem>>, %arg1: memref<2x128xf32, #tpu.memory_space<vmem>>, %arg2: memref<2x128xf32, #tpu.memory_space<vmem>>, %arg3: memref<1x1xf32, #tpu.memory_space<vmem>>) attributes {dimension_semantics = [], scalar_prefetch = 0 : i64, scratch_operands = 0 : i64, tpu.core_type = #tpu.core_type<tc>} {
    %c0 = arith.constant 0 : index
    %c0_0 = arith.constant 0 : index
    %0 = vector.load %arg0[%c0, %c0_0] : memref<2x128xf32, #tpu.memory_space<vmem>>, vector<2x128xf32>
    %cst = arith.constant dense<0xFF800000> : vector<2xf32>
    %1 = vector.multi_reduction <maximumf>, %0, %cst [1] : vector<2x128xf32> to vector<2xf32>
    %2 = vector.shape_cast %1 : vector<2xf32> to vector<2x1xf32>
    %3 = vector.broadcast %2 : vector<2x1xf32> to vector<2x128xf32>
    %4 = arith.subf %0, %3 : vector<2x128xf32>
    %5 = math.exp %4 : vector<2x128xf32>
    %cst_1 = arith.constant dense<0.000000e+00> : vector<2xf32>
    %6 = vector.multi_reduction <add>, %5, %cst_1 [1] : vector<2x128xf32> to vector<2xf32>
    %7 = vector.shape_cast %6 : vector<2xf32> to vector<2x1xf32>
    %8 = tpu.reciprocal %7 {approx = true} : vector<2x1xf32> -> vector<2x1xf32>
    %9 = vector.broadcast %8 : vector<2x1xf32> to vector<2x128xf32>
    %10 = arith.mulf %5, %9 : vector<2x128xf32>
    %c0_2 = arith.constant 0 : index
    %c0_3 = arith.constant 0 : index
    %11 = vector.load %arg2[%c0_2, %c0_3] : memref<2x128xf32, #tpu.memory_space<vmem>>, vector<2x128xf32>
    tpu.vector_store %arg2[%c0_2, %c0_3], %10 {strides = array<i32>} : memref<2x128xf32, #tpu.memory_space<vmem>>, vector<2x128xf32>,
    %12 = vector.broadcast %2 : vector<2x1xf32> to vector<2x128xf32>
    %13 = arith.subf %0, %12 : vector<2x128xf32>
    %14 = math.log %7 : vector<2x1xf32>
    %15 = vector.broadcast %14 : vector<2x1xf32> to vector<2x128xf32>
    %16 = arith.subf %13, %15 : vector<2x128xf32>
    %c0_4 = arith.constant 0 : index
    %c0_5 = arith.constant 0 : index
    %17 = vector.load %arg1[%c0_4, %c0_5] : memref<2x128xf32, #tpu.memory_space<vmem>>, vector<2x128xf32>
    %18 = arith.mulf %17, %16 : vector<2x128xf32>
    %cst_6 = arith.constant dense<0.000000e+00> : vector<2xf32>
    %19 = vector.multi_reduction <add>, %18, %cst_6 [1] : vector<2x128xf32> to vector<2xf32>
    %20 = vector.shape_cast %19 : vector<2xf32> to vector<2x1xf32>
    %cst_7 = arith.constant 0.000000e+00 : f32
    %21 = vector.broadcast %cst_7 : f32 to vector<2x1xf32>
    %22 = arith.subf %21, %20 : vector<2x1xf32>
    %cst_8 = arith.constant dense<0.000000e+00> : vector<1xf32>
    %23 = vector.multi_reduction <add>, %22, %cst_8 [0] : vector<2x1xf32> to vector<1xf32>
    %24 = vector.shape_cast %23 : vector<1xf32> to vector<1x1xf32>
    %cst_9 = arith.constant 2.000000e+00 : f32
    %25 = vector.broadcast %cst_9 : f32 to vector<1x1xf32>
    %26 = arith.divf %24, %25 : vector<1x1xf32>
    %c0_10 = arith.constant 0 : index
    %c0_11 = arith.constant 0 : index
    %27 = vector.load %arg3[%c0_10, %c0_11] : memref<1x1xf32, #tpu.memory_space<vmem>>, vector<1x1xf32>
    tpu.vector_store %arg3[%c0_10, %c0_11], %26 {strides = array<i32>} : memref<1x1xf32, #tpu.memory_space<vmem>>, vector<1x1xf32>,
    return
  }
}

</mosaic_0001>

<llo_original>
// kernel: albert_forward.6
$region0: #{albert_forward.6}
  #allocation0 [shape = 'u32[]', space=smem, size = 0x4, offset = 0x4, fixed_abs, tag = 'smem constant byte address 0x4 - core index']
  #allocation1 [shape = 'u32[144,128]{1,0:T(1,128)}', space=vmem, size = 0x12000, scoped, tag = 'internal scratch']
  #allocation2 [shape = 'f32[16,32]{1,0:T(8,128)}', space=vmem, size = 0x2000, scoped, tag = 'scratch operand']
  %s0 = inlined_call_operand.hbm [shape: bf16[16,16], index: 0, kind: input, shape index: {}]
  %s1 = inlined_call_operand.hbm [shape: bf16[16,32], index: 1, kind: input, shape index: {}]
  %s2 = inlined_call_operand.hbm [shape: f32[1,32], index: 2, kind: input, shape index: {}]
  %s3 = inlined_call_operand.hbm [shape: bf16[16,32], index: 3, kind: output, shape index: {}]
  %s4 = sld [smem:[#allocation0]]
  $region42: #{albert_forward.6} parent=0
    _
  %s6 = ssub.s32 1, %s4
  %s7 = scalar_select 0, %s6, %s4
  $region1: #{albert_forward.6} parent=0
    #allocation3 [shape = 'u8[4096]{0}', space=vmem, size = 0x1000, scoped, tag = 'input window, operand 0, single buffered']
    #allocation4 [shape = 's32[1]{0}', space=sflag, size = 0x4, scoped, tag = 'scoped memory for albert_forward.6']
    #allocation5 [shape = 's32[1]{0}', space=sflag, size = 0x4, scoped, tag = 'scoped memory for albert_forward.6']
    #allocation6 [shape = 'u8[4096]{0}', space=vmem, size = 0x1000, scoped, tag = 'input window, operand 1, single buffered']
    #allocation7 [shape = 's32[1]{0}', space=sflag, size = 0x4, scoped, tag = 'scoped memory for albert_forward.6']
    #allocation8 [shape = 'u8[512]{0}', space=vmem, size = 0x400, scoped, tag = 'input window, operand 2, single buffered']
    #allocation9 [shape = 'u8[4096]{0}', space=vmem, size = 0x1000, scoped, tag = 'output window, operand 0, single buffered']
    %8 = vsyncpa [#allocation4], 0
    %9 = vsyncpa [#allocation7], 0
    %10 = vsyncpa [#allocation5], 0
    // Predicated region
    $region2: #{albert_forward.6} parent=1 // pred_check
      _
    $region3: #{albert_forward.6} parent=1 // pred_check_branch
      %12 = sbr.rel (0) target = $region5
    $region4: #{albert_forward.6} parent=1 // pred_region
      %s14 = ssub.s32 128, 128
      %15 = vsyncadd [#allocation4], %s14
      %s16 = sshll.u32 [#allocation3], 4
      %s17 = int_to_ptr.vmem [resolvable:$true] %s16
      %22 = dma.hbm_to_vmem [thread:$0]  %s0, 128, %s17, [#allocation4], 64, 64, 4
    $region5: #{albert_forward.6} parent=1 // pred_fallthru
      _
    // Predicated region
    $region6: #{albert_forward.6} parent=1 // pred_check
      _
    $region7: #{albert_forward.6} parent=1 // pred_check_branch
      %24 = sbr.rel (0) target = $region9
    $region8: #{albert_forward.6} parent=1 // pred_region
      %s26 = ssub.s32 128, 128
      %27 = vsyncadd [#allocation7], %s26
      %s28 = sshll.u32 [#allocation6], 4
      %s29 = int_to_ptr.vmem [resolvable:$true] %s28
      %34 = dma.hbm_to_vmem [thread:$0]  %s1, 128, %s29, [#allocation7], 64, 64, 4
    $region9: #{albert_forward.6} parent=1 // pred_fallthru
      _
    // Predicated region
    $region10: #{albert_forward.6} parent=1 // pred_check
      _
    $region11: #{albert_forward.6} parent=1 // pred_check_branch
      %36 = sbr.rel (0) target = $region13
    $region12: #{albert_forward.6} parent=1 // pred_region
      %s38 = ssub.s32 16, 16
      %39 = vsyncadd [#allocation7], %s38
      %s41 = sshll.u32 [#allocation8], 4
      %s42 = int_to_ptr.vmem [resolvable:$true] %s41
      %44 = dma.hbm_to_vmem [thread:$0]  %s2, 16, %s42, [#allocation7]
    $region13: #{albert_forward.6} parent=1 // pred_fallthru
      _
    // Predicated region
    $region14: #{albert_forward.6} parent=1 // pred_check
      _
    $region15: #{albert_forward.6} parent=1 // pred_check_branch
      %46 = sbr.rel (0) target = $region17
    $region16: #{albert_forward.6} parent=1 // pred_region
      %47 = dma.done [#allocation4], 128
    $region17: #{albert_forward.6} parent=1 // pred_fallthru
      _
    // Predicated region
    $region18: #{albert_forward.6} parent=1 // pred_check
      _
    $region19: #{albert_forward.6} parent=1 // pred_check_branch
      %49 = sbr.rel (0) target = $region21
    $region20: #{albert_forward.6} parent=1 // pred_region
      %50 = dma.done [#allocation7], 128
    $region21: #{albert_forward.6} parent=1 // pred_fallthru
      _
    // Predicated region
    $region22: #{albert_forward.6} parent=1 // pred_check
      _
    $region23: #{albert_forward.6} parent=1 // pred_check_branch
      %52 = sbr.rel (0) target = $region25
    $region24: #{albert_forward.6} parent=1 // pred_region
      %53 = dma.done [#allocation7], 16
    $region25: #{albert_forward.6} parent=1 // pred_fallthru
      _
    %p55 = scmp.eq.s32.totalorder 0, 0
    // Predicated region
    $region26: #{albert_forward.6} parent=1 // pred_check
      %p56 = pneg %p55
    $region27: #{albert_forward.6} parent=1 // pred_check_branch
      %58 = sbr.rel (%p56) target = $region29
    $region28: #{albert_forward.6} parent=1 // pred_region
      %vm59 = vcmask 261120
      %60 = vst.msk [vmem:[#allocation2] sm:$0xff] %vm59, 0.0
      %61 = vst.msk [vmem:[#allocation2 + $0x8] sm:$0xff] %vm59, 0.0
    $region29: #{albert_forward.6} parent=1 // pred_fallthru
      _
    %v62 = vld [vmem:[#allocation2] sm:$0xff]
    %v63 = vld [vmem:[#allocation2 + $0x8] sm:$0xff]
    %v64 = vld [vmem:[#allocation3] sm:$0xf]
    %v65 = vld [vmem:[#allocation3 + $0x4] sm:$0xf]
    %v66 = vld [vmem:[#allocation6] sm:$0xf]
    %v67 = vld [vmem:[#allocation6 + $0x4] sm:$0xf]
    %v70 = vunpack.c.l.b16 %v64
    %v71 = vunpack.c.l.b16 %v65
    %v72 = vpack.c.b16 %v71, %v70
    %v75 = vunpack.c.l.b16 %v66
    %v76 = vunpack.c.l.b16 %v67
    %v77 = vpack.c.b16 %v76, %v75
    %vm79 = vcmask 130048
    %v81 = vsel %vm79, %v72, 0
    %83 = vmatprep.subr.bf16.mxu0 0
    %84 = vmatpush1.bf16.msra.mxu0 %v77
    %85 = vmatprep.subr.bf16.mxu0 0
    %86 = vmatpush1.bf16.msra.mxu0 0
    %87 = vmatprep.subr.bf16.mxu0 0
    %88 = vmatpush1.bf16.msra.mxu0 0
    %89 = vmatprep.subr.bf16.mxu0 0
    %90 = vmatpush1.bf16.msra.mxu0 0
    %91 = vmatprep.subr.bf16.mxu0 0
    %92 = vmatpush1.bf16.msra.mxu0 0
    %93 = vmatprep.subr.bf16.mxu0 0
    %94 = vmatpush1.bf16.msra.mxu0 0
    %95 = vmatprep.subr.bf16.mxu0 0
    %96 = vmatpush1.bf16.msra.mxu0 0
    %97 = vmatprep.subr.bf16.mxu0 0
    %98 = vmatpush1.bf16.msra.mxu0 0
    %99 = vmatprep.subr.bf16.mxu0 0
    %100 = vmatpush1.bf16.msra.mxu0 0
    %101 = vmatprep.subr.bf16.mxu0 0
    %102 = vmatpush1.bf16.msra.mxu0 0
    %103 = vmatprep.subr.bf16.mxu0 0
    %104 = vmatpush1.bf16.msra.mxu0 0
    %105 = vmatprep.subr.bf16.mxu0 0
    %106 = vmatpush1.bf16.msra.mxu0 0
    %107 = vmatprep.subr.bf16.mxu0 0
    %108 = vmatpush1.bf16.msra.mxu0 0
    %109 = vmatprep.subr.bf16.mxu0 0
    %110 = vmatpush1.bf16.msra.mxu0 0
    %111 = vmatprep.subr.bf16.mxu0 0
    %112 = vmatpush1.bf16.msra.mxu0 0
    %113 = vmatprep.subr.bf16.mxu0 0
    %114 = vmatpush1.bf16.msra.mxu0 0
    %115 = vmatprep.mubr.bf16.mxu0 0
    %116 = vmatmul.mubr.bf16.gmra.mrb[0].mxu0 %v81
    %v117 = vpop.f32.mrb[0].mxu0
    %v118 = vadd.f32 0.0, %v117
    %v119 = vpop.f32.mrb[0].mxu0
    %v120 = vpop.f32.mrb[0].mxu0
    %v121 = vadd.f32 0.0, %v120
    %v122 = vpop.f32.mrb[0].mxu0
    %123 = vdwg.mxu0
    %v124 = vadd.f32 %v62, %v118
    %v125 = vadd.f32 %v63, %v121
    %vm126 = vcmask 261120
    %127 = vst.msk [vmem:[#allocation2] sm:$0xff] %vm126, %v124
    %128 = vst.msk [vmem:[#allocation2 + $0x8] sm:$0xff] %vm126, %v125
    // Predicated region
    $region30: #{albert_forward.6} parent=1 // pred_check
      %p129 = pneg %p55
    $region31: #{albert_forward.6} parent=1 // pred_check_branch
      %131 = sbr.rel (%p129) target = $region33
    $region32: #{albert_forward.6} parent=1 // pred_region
      %v132 = vld [vmem:[#allocation2] sm:$0xff]
      %v133 = vld [vmem:[#allocation2 + $0x8] sm:$0xff]
      %v134 = vld [vmem:[#allocation8] sm:$0x1]
      %v136 = vlaneseq
      %v137 = vshrl.u32 %v136, 7
      %v138 = vsub.s32 0, %v137
      %v139 = vrot.slane %v134, %v138
      %v141 = vadd.f32 %v132, %v139
      %v142 = vadd.f32 %v133, %v139
      %v143 = vpack.c.bf16 %v142, %v141
      %v145 = vunpack.c.l.b16 %v143
      %v146 = vunpack.c.h.b16 %v143
      %v147 = vpack.c.b16 %v145, %v145
      %v148 = vpack.c.b16 %v146, %v146
      %vm151 = vcmask 257024
      %152 = vst.msk [vmem:[#allocation9] sm:$0xf] %vm151, %v147
      %153 = vst.msk [vmem:[#allocation9 + $0x4] sm:$0xf] %vm151, %v148
    $region33: #{albert_forward.6} parent=1 // pred_fallthru
      _
    // Predicated region
    $region34: #{albert_forward.6} parent=1 // pred_check
      _
    $region35: #{albert_forward.6} parent=1 // pred_check_branch
      %155 = sbr.rel (0) target = $region37
    $region36: #{albert_forward.6} parent=1 // pred_region
      %s157 = ssub.s32 128, 128
      %158 = vsyncadd [#allocation5], %s157
      %s159 = sshll.u32 [#allocation9], 4
      %s160 = int_to_ptr.vmem [resolvable:$true] %s159
      %165 = dma.vmem_to_hbm [thread:$0]  %s160, 128, %s3, [#allocation5], 64, 64, 4
    $region37: #{albert_forward.6} parent=1 // pred_fallthru
      _
    // Predicated region
    $region38: #{albert_forward.6} parent=1 // pred_check
      _
    $region39: #{albert_forward.6} parent=1 // pred_check_branch
      %167 = sbr.rel (0) target = $region41
    $region40: #{albert_forward.6} parent=1 // pred_region
      %168 = dma.done [#allocation5], 128
    $region41: #{albert_forward.6} parent=1 // pred_fallthru
      _
    %169 = vsyncpa [#allocation4], 1
    %170 = vsyncpa [#allocation7], 1
    %171 = vsyncpa [#allocation5], 1

// kernel: albert_forward.5
$region0: #{albert_forward.5}
  #allocation0 [shape = 'u32[]', space=smem, size = 0x4, offset = 0x4, fixed_abs, tag = 'smem constant byte address 0x4 - core index']
  #allocation1 [shape = 'u32[144,128]{1,0:T(1,128)}', space=vmem, size = 0x12000, scoped, tag = 'internal scratch']
  %s0 = inlined_call_operand.hbm [shape: f32[16,16], index: 0, kind: input, shape index: {}]
  %s1 = inlined_call_operand.hbm [shape: f32[1,16], index: 1, kind: input, shape index: {}]
  %s2 = inlined_call_operand.hbm [shape: f32[1,16], index: 2, kind: input, shape index: {}]
  %s3 = inlined_call_operand.hbm [shape: bf16[16,16], index: 3, kind: output, shape index: {}]
  %s4 = sld [smem:[#allocation0]]
  $region34: #{albert_forward.5} parent=0
    _
  %s6 = ssub.s32 1, %s4
  %s7 = scalar_select 0, %s6, %s4
  $region1: #{albert_forward.5} parent=0
    #allocation2 [shape = 'u8[8192]{0}', space=vmem, size = 0x2000, scoped, tag = 'input window, operand 0, single buffered']
    #allocation3 [shape = 's32[1]{0}', space=sflag, size = 0x4, scoped, tag = 'scoped memory for albert_forward.5']
    #allocation4 [shape = 's32[1]{0}', space=sflag, size = 0x4, scoped, tag = 'scoped memory for albert_forward.5']
    #allocation5 [shape = 'u8[512]{0}', space=vmem, size = 0x400, scoped, tag = 'input window, operand 1, single buffered']
    #allocation6 [shape = 's32[1]{0}', space=sflag, size = 0x4, scoped, tag = 'scoped memory for albert_forward.5']
    #allocation7 [shape = 'u8[512]{0}', space=vmem, size = 0x400, scoped, tag = 'input window, operand 2, single buffered']
    #allocation8 [shape = 'u8[4096]{0}', space=vmem, size = 0x1000, scoped, tag = 'output window, operand 0, single buffered']
    %8 = vsyncpa [#allocation3], 0
    %9 = vsyncpa [#allocation6], 0
    %10 = vsyncpa [#allocation4], 0
    // Predicated region
    $region2: #{albert_forward.5} parent=1 // pred_check
      _
    $region3: #{albert_forward.5} parent=1 // pred_check_branch
      %12 = sbr.rel (0) target = $region5
    $region4: #{albert_forward.5} parent=1 // pred_region
      %s14 = ssub.s32 256, 256
      %15 = vsyncadd [#allocation3], %s14
      %s16 = sshll.u32 [#allocation2], 4
      %s17 = int_to_ptr.vmem [resolvable:$true] %s16
      %22 = dma.hbm_to_vmem [thread:$0]  %s0, 256, %s17, [#allocation3], 128, 128, 8
    $region5: #{albert_forward.5} parent=1 // pred_fallthru
      _
    // Predicated region
    $region6: #{albert_forward.5} parent=1 // pred_check
      _
    $region7: #{albert_forward.5} parent=1 // pred_check_branch
      %24 = sbr.rel (0) target = $region9
    $region8: #{albert_forward.5} parent=1 // pred_region
      %s26 = ssub.s32 16, 16
      %27 = vsyncadd [#allocation6], %s26
      %s29 = sshll.u32 [#allocation5], 4
      %s30 = int_to_ptr.vmem [resolvable:$true] %s29
      %32 = dma.hbm_to_vmem [thread:$0]  %s1, 16, %s30, [#allocation6]
    $region9: #{albert_forward.5} parent=1 // pred_fallthru
      _
    // Predicated region
    $region10: #{albert_forward.5} parent=1 // pred_check
      _
    $region11: #{albert_forward.5} parent=1 // pred_check_branch
      %34 = sbr.rel (0) target = $region13
    $region12: #{albert_forward.5} parent=1 // pred_region
      %s36 = ssub.s32 16, 16
      %37 = vsyncadd [#allocation6], %s36
      %s39 = sshll.u32 [#allocation7], 4
      %s40 = int_to_ptr.vmem [resolvable:$true] %s39
      %42 = dma.hbm_to_vmem [thread:$0]  %s2, 16, %s40, [#allocation6]
    $region13: #{albert_forward.5} parent=1 // pred_fallthru
      _
    // Predicated region
    $region14: #{albert_forward.5} parent=1 // pred_check
      _
    $region15: #{albert_forward.5} parent=1 // pred_check_branch
      %44 = sbr.rel (0) target = $region17
    $region16: #{albert_forward.5} parent=1 // pred_region
      %45 = dma.done [#allocation3], 256
    $region17: #{albert_forward.5} parent=1 // pred_fallthru
      _
    // Predicated region
    $region18: #{albert_forward.5} parent=1 // pred_check
      _
    $region19: #{albert_forward.5} parent=1 // pred_check_branch
      %47 = sbr.rel (0) target = $region21
    $region20: #{albert_forward.5} parent=1 // pred_region
      %48 = dma.done [#allocation6], 16
    $region21: #{albert_forward.5} parent=1 // pred_fallthru
      _
    // Predicated region
    $region22: #{albert_forward.5} parent=1 // pred_check
      _
    $region23: #{albert_forward.5} parent=1 // pred_check_branch
      %50 = sbr.rel (0) target = $region25
    $region24: #{albert_forward.5} parent=1 // pred_region
      %51 = dma.done [#allocation6], 16
    $region25: #{albert_forward.5} parent=1 // pred_fallthru
      _
    %v52 = vld [vmem:[#allocation2] sm:$0xff]
    %v53 = vld [vmem:[#allocation2 + $0x8] sm:$0xff]
    %vm54 = vcmask 130048
    %v55 = vsel %vm54, %v52, 0.0
    %56 = vadd.xlane.f32.xlu0 %v55
    %v57 = vpop.xlane.xlu0 %56
    %v58 = vsel %vm54, %v53, 0.0
    %59 = vadd.xlane.f32.xlu0 %v58
    %v60 = vpop.xlane.xlu0 %59
    %v61 = vrcp.pop 16.0
    %v62 = vmul.f32 %v57, %v61
    %v63 = vmul.f32 %v60, %v61
    %v64 = vsub.f32 %v52, %v62
    %v65 = vsub.f32 %v53, %v63
    %v66 = vmul.f32 %v64, %v64
    %v67 = vmul.f32 %v65, %v65
    %v68 = vsel %vm54, %v66, 0.0
    %69 = vadd.xlane.f32.xlu0 %v68
    %v70 = vpop.xlane.xlu0 %69
    %v71 = vsel %vm54, %v67, 0.0
    %72 = vadd.xlane.f32.xlu0 %v71
    %v73 = vpop.xlane.xlu0 %72
    %v74 = vmul.f32 %v70, %v61
    %v75 = vmul.f32 %v73, %v61
    %v76 = vadd.f32 %v74, 1e-12
    %v77 = vadd.f32 %v75, 1e-12
    %v78 = vrsqrt.pop %v76
    %v79 = vrsqrt.pop %v77
    %v80 = vmul.f32 %v64, %v78
    %v81 = vmul.f32 %v65, %v79
    %v82 = vld [vmem:[#allocation5] sm:$0x1]
    %v84 = vlaneseq
    %v85 = vshrl.u32 %v84, 7
    %v86 = vsub.s32 0, %v85
    %v87 = vrot.slane %v82, %v86
    %v89 = vmul.f32 %v80, %v87
    %v90 = vmul.f32 %v81, %v87
    %v91 = vld [vmem:[#allocation7] sm:$0x1]
    %v93 = vlaneseq
    %v94 = vshrl.u32 %v93, 7
    %v95 = vsub.s32 0, %v94
    %v96 = vrot.slane %v91, %v95
    %v98 = vadd.f32 %v89, %v96
    %v99 = vadd.f32 %v90, %v96
    %v100 = vpack.c.bf16 %v99, %v98
    %v102 = vunpack.c.l.b16 %v100
    %v103 = vunpack.c.h.b16 %v100
    %v104 = vpack.c.b16 %v102, %v102
    %v105 = vpack.c.b16 %v103, %v103
    %vm108 = vcmask 125952
    %109 = vst.msk [vmem:[#allocation8] sm:$0xf] %vm108, %v104
    %110 = vst.msk [vmem:[#allocation8 + $0x4] sm:$0xf] %vm108, %v105
    // Predicated region
    $region26: #{albert_forward.5} parent=1 // pred_check
      _
    $region27: #{albert_forward.5} parent=1 // pred_check_branch
      %112 = sbr.rel (0) target = $region29
    $region28: #{albert_forward.5} parent=1 // pred_region
      %s114 = ssub.s32 128, 128
      %115 = vsyncadd [#allocation4], %s114
      %s116 = sshll.u32 [#allocation8], 4
      %s117 = int_to_ptr.vmem [resolvable:$true] %s116
      %122 = dma.vmem_to_hbm [thread:$0]  %s117, 128, %s3, [#allocation4], 64, 64, 4
    $region29: #{albert_forward.5} parent=1 // pred_fallthru
      _
    // Predicated region
    $region30: #{albert_forward.5} parent=1 // pred_check
      _
    $region31: #{albert_forward.5} parent=1 // pred_check_branch
      %124 = sbr.rel (0) target = $region33
    $region32: #{albert_forward.5} parent=1 // pred_region
      %125 = dma.done [#allocation4], 128
    $region33: #{albert_forward.5} parent=1 // pred_fallthru
      _
    %126 = vsyncpa [#allocation3], 1
    %127 = vsyncpa [#allocation6], 1
    %128 = vsyncpa [#allocation4], 1

// kernel: closed_call.16
$region0: #{closed_call.16}
  #allocation0 [shape = 'u32[]', space=smem, size = 0x4, offset = 0x4, fixed_abs, tag = 'smem constant byte address 0x4 - core index']
  #allocation1 [shape = 'u32[144,128]{1,0:T(1,128)}', space=vmem, size = 0x12000, scoped, tag = 'internal scratch']
  #allocation2 [shape = 'f32[16,96]{1,0:T(8,128)}', space=vmem, size = 0x2000, scoped, tag = 'scratch operand']
  %s0 = inlined_call_operand.hbm [shape: bf16[16,32], index: 0, kind: input, shape index: {}]
  %s1 = inlined_call_operand.hbm [shape: bf16[32,96], index: 1, kind: input, shape index: {}]
  %s2 = inlined_call_operand.hbm [shape: f32[1,96], index: 2, kind: input, shape index: {}]
  %s3 = inlined_call_operand.hbm [shape: bf16[16,96], index: 3, kind: output, shape index: {}]
  %s4 = sld [smem:[#allocation0]]
  $region42: #{closed_call.16} parent=0
    _
  %s6 = ssub.s32 1, %s4
  %s7 = scalar_select 0, %s6, %s4
  $region1: #{closed_call.16} parent=0
    #allocation3 [shape = 'u8[4096]{0}', space=vmem, size = 0x1000, scoped, tag = 'input window, operand 0, single buffered']
    #allocation4 [shape = 's32[1]{0}', space=sflag, size = 0x4, scoped, tag = 'scoped memory for closed_call.16']
    #allocation5 [shape = 's32[1]{0}', space=sflag, size = 0x4, scoped, tag = 'scoped memory for closed_call.16']
    #allocation6 [shape = 'u8[8192]{0}', space=vmem, size = 0x2000, scoped, tag = 'input window, operand 1, single buffered']
    #allocation7 [shape = 's32[1]{0}', space=sflag, size = 0x4, scoped, tag = 'scoped memory for closed_call.16']
    #allocation8 [shape = 'u8[512]{0}', space=vmem, size = 0x400, scoped, tag = 'input window, operand 2, single buffered']
    #allocation9 [shape = 'u8[4096]{0}', space=vmem, size = 0x1000, scoped, tag = 'output window, operand 0, single buffered']
    %8 = vsyncpa [#allocation4], 0
    %9 = vsyncpa [#allocation7], 0
    %10 = vsyncpa [#allocation5], 0
    // Predicated region
    $region2: #{closed_call.16} parent=1 // pred_check
      _
    $region3: #{closed_call.16} parent=1 // pred_check_branch
      %12 = sbr.rel (0) target = $region5
    $region4: #{closed_call.16} parent=1 // pred_region
      %s14 = ssub.s32 128, 128
      %15 = vsyncadd [#allocation4], %s14
      %s16 = sshll.u32 [#allocation3], 4
      %s17 = int_to_ptr.vmem [resolvable:$true] %s16
      %22 = dma.hbm_to_vmem [thread:$0]  %s0, 128, %s17, [#allocation4], 64, 64, 4
    $region5: #{closed_call.16} parent=1 // pred_fallthru
      _
    // Predicated region
    $region6: #{closed_call.16} parent=1 // pred_check
      _
    $region7: #{closed_call.16} parent=1 // pred_check_branch
      %24 = sbr.rel (0) target = $region9
    $region8: #{closed_call.16} parent=1 // pred_region
      %s26 = ssub.s32 256, 256
      %27 = vsyncadd [#allocation7], %s26
      %s28 = sshll.u32 [#allocation6], 4
      %s29 = int_to_ptr.vmem [resolvable:$true] %s28
      %34 = dma.hbm_to_vmem [thread:$0]  %s1, 256, %s29, [#allocation7], 64, 64, 4
    $region9: #{closed_call.16} parent=1 // pred_fallthru
      _
    // Predicated region
    $region10: #{closed_call.16} parent=1 // pred_check
      _
    $region11: #{closed_call.16} parent=1 // pred_check_branch
      %36 = sbr.rel (0) target = $region13
    $region12: #{closed_call.16} parent=1 // pred_region
      %s38 = ssub.s32 16, 16
      %39 = vsyncadd [#allocation7], %s38
      %s41 = sshll.u32 [#allocation8], 4
      %s42 = int_to_ptr.vmem [resolvable:$true] %s41
      %44 = dma.hbm_to_vmem [thread:$0]  %s2, 16, %s42, [#allocation7]
    $region13: #{closed_call.16} parent=1 // pred_fallthru
      _
    // Predicated region
    $region14: #{closed_call.16} parent=1 // pred_check
      _
    $region15: #{closed_call.16} parent=1 // pred_check_branch
      %46 = sbr.rel (0) target = $region17
    $region16: #{closed_call.16} parent=1 // pred_region
      %47 = dma.done [#allocation4], 128
    $region17: #{closed_call.16} parent=1 // pred_fallthru
      _
    // Predicated region
    $region18: #{closed_call.16} parent=1 // pred_check
      _
    $region19: #{closed_call.16} parent=1 // pred_check_branch
      %49 = sbr.rel (0) target = $region21
    $region20: #{closed_call.16} parent=1 // pred_region
      %50 = dma.done [#allocation7], 256
    $region21: #{closed_call.16} parent=1 // pred_fallthru
      _
    // Predicated region
    $region22: #{closed_call.16} parent=1 // pred_check
      _
    $region23: #{closed_call.16} parent=1 // pred_check_branch
      %52 = sbr.rel (0) target = $region25
    $region24: #{closed_call.16} parent=1 // pred_region
      %53 = dma.done [#allocation7], 16
    $region25: #{closed_call.16} parent=1 // pred_fallthru
      _
    %p55 = scmp.eq.s32.totalorder 0, 0
    // Predicated region
    $region26: #{closed_call.16} parent=1 // pred_check
      %p56 = pneg %p55
    $region27: #{closed_call.16} parent=1 // pred_check_branch
      %58 = sbr.rel (%p56) target = $region29
    $region28: #{closed_call.16} parent=1 // pred_region
      %vm59 = vcmask 785408
      %60 = vst.msk [vmem:[#allocation2] sm:$0xff] %vm59, 0.0
      %61 = vst.msk [vmem:[#allocation2 + $0x8] sm:$0xff] %vm59, 0.0
    $region29: #{closed_call.16} parent=1 // pred_fallthru
      _
    %v62 = vld [vmem:[#allocation2] sm:$0xff]
    %v63 = vld [vmem:[#allocation2 + $0x8] sm:$0xff]
    %v64 = vld [vmem:[#allocation3] sm:$0xf]
    %v65 = vld [vmem:[#allocation3 + $0x4] sm:$0xf]
    %v66 = vld [vmem:[#allocation6] sm:$0xf]
    %v67 = vld [vmem:[#allocation6 + $0x4] sm:$0xf]
    %v68 = vld [vmem:[#allocation6 + $0x8] sm:$0xf]
    %v69 = vld [vmem:[#allocation6 + $0xc] sm:$0xf]
    %v72 = vunpack.c.l.b16 %v64
    %v73 = vunpack.c.l.b16 %v65
    %v74 = vpack.c.b16 %v73, %v72
    %v79 = vunpack.c.l.b16 %v66
    %v80 = vunpack.c.l.b16 %v67
    %v81 = vunpack.c.l.b16 %v68
    %v82 = vunpack.c.l.b16 %v69
    %v83 = vpack.c.b16 %v80, %v79
    %v84 = vpack.c.b16 %v82, %v81
    %vm87 = vcmask 261120
    %v89 = vsel %vm87, %v74, 0
    %91 = vmatprep.subr.bf16.mxu0 0
    %92 = vmatpush1.bf16.msra.mxu0 %v83
    %93 = vmatprep.subr.bf16.mxu0 0
    %94 = vmatpush1.bf16.msra.mxu0 %v84
    %95 = vmatprep.subr.bf16.mxu0 0
    %96 = vmatpush1.bf16.msra.mxu0 0
    %97 = vmatprep.subr.bf16.mxu0 0
    %98 = vmatpush1.bf16.msra.mxu0 0
    %99 = vmatprep.subr.bf16.mxu0 0
    %100 = vmatpush1.bf16.msra.mxu0 0
    %101 = vmatprep.subr.bf16.mxu0 0
    %102 = vmatpush1.bf16.msra.mxu0 0
    %103 = vmatprep.subr.bf16.mxu0 0
    %104 = vmatpush1.bf16.msra.mxu0 0
    %105 = vmatprep.subr.bf16.mxu0 0
    %106 = vmatpush1.bf16.msra.mxu0 0
    %107 = vmatprep.subr.bf16.mxu0 0
    %108 = vmatpush1.bf16.msra.mxu0 0
    %109 = vmatprep.subr.bf16.mxu0 0
    %110 = vmatpush1.bf16.msra.mxu0 0
    %111 = vmatprep.subr.bf16.mxu0 0
    %112 = vmatpush1.bf16.msra.mxu0 0
    %113 = vmatprep.subr.bf16.mxu0 0
    %114 = vmatpush1.bf16.msra.mxu0 0
    %115 = vmatprep.subr.bf16.mxu0 0
    %116 = vmatpush1.bf16.msra.mxu0 0
    %117 = vmatprep.subr.bf16.mxu0 0
    %118 = vmatpush1.bf16.msra.mxu0 0
    %119 = vmatprep.subr.bf16.mxu0 0
    %120 = vmatpush1.bf16.msra.mxu0 0
    %121 = vmatprep.subr.bf16.mxu0 0
    %122 = vmatpush1.bf16.msra.mxu0 0
    %123 = vmatprep.mubr.bf16.mxu0 0
    %124 = vmatmul.mubr.bf16.gmra.mrb[0].mxu0 %v89
    %v125 = vpop.f32.mrb[0].mxu0
    %v126 = vadd.f32 0.0, %v125
    %v127 = vpop.f32.mrb[0].mxu0
    %v128 = vpop.f32.mrb[0].mxu0
    %v129 = vadd.f32 0.0, %v128
    %v130 = vpop.f32.mrb[0].mxu0
    %131 = vdwg.mxu0
    %v132 = vadd.f32 %v62, %v126
    %v133 = vadd.f32 %v63, %v129
    %vm134 = vcmask 785408
    %135 = vst.msk [vmem:[#allocation2] sm:$0xff] %vm134, %v132
    %136 = vst.msk [vmem:[#allocation2 + $0x8] sm:$0xff] %vm134, %v133
    // Predicated region
    $region30: #{closed_call.16} parent=1 // pred_check
      %p137 = pneg %p55
    $region31: #{closed_call.16} parent=1 // pred_check_branch
      %139 = sbr.rel (%p137) target = $region33
    $region32: #{closed_call.16} parent=1 // pred_region
      %v140 = vld [vmem:[#allocation2] sm:$0xff]
      %v141 = vld [vmem:[#allocation2 + $0x8] sm:$0xff]
      %v142 = vld [vmem:[#allocation8] sm:$0x1]
      %v144 = vlaneseq
      %v145 = vshrl.u32 %v144, 7
      %v146 = vsub.s32 0, %v145
      %v147 = vrot.slane %v142, %v146
      %v149 = vadd.f32 %v140, %v147
      %v150 = vadd.f32 %v141, %v147
      %v151 = vpack.c.bf16 %v150, %v149
      %v153 = vunpack.c.l.b16 %v151
      %v154 = vunpack.c.h.b16 %v151
      %v155 = vpack.c.b16 %v153, %v153
      %v156 = vpack.c.b16 %v154, %v154
      %vm159 = vcmask 781312
      %160 = vst.msk [vmem:[#allocation9] sm:$0xf] %vm159, %v155
      %161 = vst.msk [vmem:[#allocation9 + $0x4] sm:$0xf] %vm159, %v156
    $region33: #{closed_call.16} parent=1 // pred_fallthru
      _
    // Predicated region
    $region34: #{closed_call.16} parent=1 // pred_check
      _
    $region35: #{closed_call.16} parent=1 // pred_check_branch
      %163 = sbr.rel (0) target = $region37
    $region36: #{closed_call.16} parent=1 // pred_region
      %s165 = ssub.s32 128, 128
      %166 = vsyncadd [#allocation5], %s165
      %s167 = sshll.u32 [#allocation9], 4
      %s168 = int_to_ptr.vmem [resolvable:$true] %s167
      %173 = dma.vmem_to_hbm [thread:$0]  %s168, 128, %s3, [#allocation5], 64, 64, 4
    $region37: #{closed_call.16} parent=1 // pred_fallthru
      _
    // Predicated region
    $region38: #{closed_call.16} parent=1 // pred_check
      _
    $region39: #{closed_call.16} parent=1 // pred_check_branch
      %175 = sbr.rel (0) target = $region41
    $region40: #{closed_call.16} parent=1 // pred_region
      %176 = dma.done [#allocation5], 128
    $region41: #{closed_call.16} parent=1 // pred_fallthru
      _
    %177 = vsyncpa [#allocation4], 1
    %178 = vsyncpa [#allocation7], 1
    %179 = vsyncpa [#allocation5], 1

// kernel: closed_call.17
$region0: #{closed_call.17}
  #allocation0 [shape = 'u32[]', space=smem, size = 0x4, offset = 0x4, fixed_abs, tag = 'smem constant byte address 0x4 - core index']
  #allocation1 [shape = 'u32[144,128]{1,0:T(1,128)}', space=vmem, size = 0x12000, scoped, tag = 'internal scratch']
  #allocation2 [shape = 'f32[8,1]{1,0:T(8,128)}', space=vmem, size = 0x1000, scoped, tag = 'scratch operand']
  #allocation3 [shape = 'f32[8,1]{1,0:T(8,128)}', space=vmem, size = 0x1000, scoped, tag = 'scratch operand']
  #allocation4 [shape = 'f32[8,8]{1,0:T(8,128)}', space=vmem, size = 0x1000, scoped, tag = 'scratch operand']
  %s0 = inlined_call_operand.hbm [shape: bf16[2,4,8,8], index: 0, kind: input, shape index: {}]
  %s1 = inlined_call_operand.hbm [shape: bf16[2,4,8,8], index: 1, kind: input, shape index: {}]
  %s2 = inlined_call_operand.hbm [shape: bf16[2,4,8,8], index: 2, kind: input, shape index: {}]
  %s3 = inlined_call_operand.hbm [shape: f32[2,1,1,8], index: 3, kind: input, shape index: {}]
  %s4 = inlined_call_operand.hbm [shape: bf16[2,4,8,8], index: 4, kind: output, shape index: {}]
  %s5 = sld [smem:[#allocation0]]
  $region73: #{closed_call.17} parent=0
    _
  %s7 = ssub.s32 1, %s5
  %s8 = scalar_select 0, %s7, %s5
  $region1: #{closed_call.17} parent=0
    #allocation5 [shape = 'u8[4096]{0}', space=vmem, size = 0x1000, scoped, tag = 'input window, operand 0']
    #allocation6 [shape = 's32[2]{0}', space=sflag, size = 0x8, scoped, tag = 'scoped memory for closed_call.17']
    #allocation7 [shape = 's32[2]{0}', space=sflag, size = 0x8, scoped, tag = 'scoped memory for closed_call.17']
    #allocation8 [shape = 'u8[4096]{0}', space=vmem, size = 0x1000, scoped, tag = 'input window, operand 1']
    #allocation9 [shape = 's32[2]{0}', space=sflag, size = 0x8, scoped, tag = 'scoped memory for closed_call.17']
    #allocation10 [shape = 'u8[4096]{0}', space=vmem, size = 0x1000, scoped, tag = 'input window, operand 2']
    #allocation11 [shape = 'u8[1024]{0}', space=vmem, size = 0x400, scoped, tag = 'input window, operand 3']
    #allocation12 [shape = 's32[2]{0}', space=sflag, size = 0x8, scoped, tag = 'scoped memory for closed_call.17']
    #allocation13 [shape = 'u8[4096]{0}', space=vmem, size = 0x1000, scoped, tag = 'output window, operand 0']
    %9 = vsyncpa [#allocation6], 0
    %s10 = scalar_lea.sflag [#allocation6], 1
    %11 = vsyncpa %s10, 0
    %12 = vsyncpa [#allocation9], 0
    %s13 = scalar_lea.sflag [#allocation9], 1
    %14 = vsyncpa %s13, 0
    %15 = vsyncpa [#allocation12], 0
    %s16 = scalar_lea.sflag [#allocation12], 1
    %17 = vsyncpa %s16, 0
    %18 = vsyncpa [#allocation7], 0
    %s19 = scalar_lea.sflag [#allocation7], 1
    %20 = vsyncpa %s19, 0
    loop: start=0, step=1, limit=10
    $region2: #{closed_call.17} parent=1 // loop_pre_header
      _
    $region3: #{closed_call.17} parent=1 // loop_header
      %s22 = sphi 0, %s26
      %p23 = scmp.ge.s32.totalorder %s22, 10
      %s29 = sphi 0, %s55
      %s30 = sphi 0, %s51
      %s31 = sphi 0, %s47
      %s32 = sphi 0, %s43
      %s33 = sphi 0, %s29
      %s34 = sphi 0, %s30
      %s35 = sphi 0, %s31
      %s36 = sphi 0, %s32
      %s37 = sphi 0, %s33
      %s38 = sphi 0, %s34
      %s39 = sphi 0, %s35
      %s40 = sphi 0, %s36
      %s62 = sphi 0, %s64
      %s65 = sphi 0, %s62
      %s66 = sphi 0, %s65
      %s82 = sphi 0, %s66
      %s92 = sphi 0, %s94
      %s95 = sphi 0, %s92
      %s96 = sphi 0, %s95
      %s112 = sphi 0, %s96
      %s122 = sphi 0, %s124
      %s125 = sphi 0, %s122
      %s126 = sphi 0, %s125
      %s142 = sphi 0, %s126
      %s150 = sphi 0, %s152
      %s153 = sphi 0, %s150
      %s154 = sphi 0, %s153
      %s170 = sphi 0, %s154
      %s180 = sphi 0, %s182
      %s183 = sphi 0, %s180
      %s184 = sphi 0, %s183
      %s200 = sphi 0, %s184
    $region4: #{closed_call.17} parent=1 // loop_header_branch
      %25 = sbr.rel (%p23) target = $region8
    $region5: #{closed_call.17} parent=1 // loop_body
      %s27 = ssub.s32 %s22, 1
      %s28 = ssub.s32 %s22, 2
      %s41 = sadd.s32 1, %s32
      %p42 = scmp.ge.s32.totalorder %s41, 1
      %s43 = scalar_select %p42, 0, %s41
      %s44 = sadd.s32 1, %s31
      %s45 = scalar_select %p42, %s44, %s31
      %p46 = scmp.ge.s32.totalorder %s45, 1
      %s47 = scalar_select %p46, 0, %s45
      %s48 = sadd.s32 1, %s30
      %s49 = scalar_select %p46, %s48, %s30
      %p50 = scmp.ge.s32.totalorder %s49, 4
      %s51 = scalar_select %p50, 0, %s49
      %s52 = sadd.s32 1, %s29
      %s53 = scalar_select %p50, %s52, %s29
      %p54 = scmp.ge.s32.totalorder %s53, 2
      %s55 = scalar_select %p54, 0, %s53
      %s56 = ssub.s32 %s29, %s55
      %s57 = ssub.s32 %s30, %s51
      %s58 = sor.u32 %s56, %s57
      %s59 = ssub.s32 %s31, %s47
      %s60 = sor.u32 %s58, %s59
      %p61 = scmp.eq.s32.totalorder %s60, 0
      %s63 = sadd.s32 %s62, 1
      %s64 = scalar_select %p61, %s62, %s63
      %p67 = pneg %p61
      %p68 = scmp.eq.s32.totalorder %s22, 7
      %p69 = por %p67, %p68
      %p70 = scmp.ne.s32.totalorder %s62, %s65
      %p71 = scmp.eq.s32.totalorder %s22, 0
      %p72 = por %p70, %p71
      %p73 = scmp.ne.s32.totalorder %s62, %s65
      %p74 = scmp.eq.s32.totalorder %s27, 7
      %p75 = por %p73, %p74
      %p76 = scmp.ne.s32.totalorder %s65, %s66
      %p77 = scmp.eq.s32.totalorder %s27, 0
      %p78 = por %p76, %p77
      %p79 = scmp.ne.s32.totalorder %s65, %s66
      %p80 = scmp.eq.s32.totalorder %s28, 7
      %p81 = por %p79, %p80
      %p83 = scmp.ne.s32.totalorder %s66, %s82
      %p84 = scmp.eq.s32.totalorder %s28, 0
      %p85 = por %p83, %p84
      %s86 = ssub.s32 %s29, %s55
      %s87 = ssub.s32 %s30, %s51
      %s88 = sor.u32 %s86, %s87
      %s89 = ssub.s32 %s32, %s43
      %s90 = sor.u32 %s88, %s89
      %p91 = scmp.eq.s32.totalorder %s90, 0
      %s93 = sadd.s32 %s92, 1
      %s94 = scalar_select %p91, %s92, %s93
      %p97 = pneg %p91
      %p98 = scmp.eq.s32.totalorder %s22, 7
      %p99 = por %p97, %p98
      %p100 = scmp.ne.s32.totalorder %s92, %s95
      %p101 = scmp.eq.s32.totalorder %s22, 0
      %p102 = por %p100, %p101
      %p103 = scmp.ne.s32.totalorder %s92, %s95
      %p104 = scmp.eq.s32.totalorder %s27, 7
      %p105 = por %p103, %p104
      %p106 = scmp.ne.s32.totalorder %s95, %s96
      %p107 = scmp.eq.s32.totalorder %s27, 0
      %p108 = por %p106, %p107
      %p109 = scmp.ne.s32.totalorder %s95, %s96
      %p110 = scmp.eq.s32.totalorder %s28, 7
      %p111 = por %p109, %p110
      %p113 = scmp.ne.s32.totalorder %s96, %s112
      %p114 = scmp.eq.s32.totalorder %s28, 0
      %p115 = por %p113, %p114
      %s116 = ssub.s32 %s29, %s55
      %s117 = ssub.s32 %s30, %s51
      %s118 = sor.u32 %s116, %s117
      %s119 = ssub.s32 %s32, %s43
      %s120 = sor.u32 %s118, %s119
      %p121 = scmp.eq.s32.totalorder %s120, 0
      %s123 = sadd.s32 %s122, 1
      %s124 = scalar_select %p121, %s122, %s123
      %p127 = pneg %p121
      %p128 = scmp.eq.s32.totalorder %s22, 7
      %p129 = por %p127, %p128
      %p130 = scmp.ne.s32.totalorder %s122, %s125
      %p131 = scmp.eq.s32.totalorder %s22, 0
      %p132 = por %p130, %p131
      %p133 = scmp.ne.s32.totalorder %s122, %s125
      %p134 = scmp.eq.s32.totalorder %s27, 7
      %p135 = por %p133, %p134
      %p136 = scmp.ne.s32.totalorder %s125, %s126
      %p137 = scmp.eq.s32.totalorder %s27, 0
      %p138 = por %p136, %p137
      %p139 = scmp.ne.s32.totalorder %s125, %s126
      %p140 = scmp.eq.s32.totalorder %s28, 7
      %p141 = por %p139, %p140
      %p143 = scmp.ne.s32.totalorder %s126, %s142
      %p144 = scmp.eq.s32.totalorder %s28, 0
      %p145 = por %p143, %p144
      %s146 = ssub.s32 %s29, %s55
      %s147 = ssub.s32 %s32, %s43
      %s148 = sor.u32 %s146, %s147
      %p149 = scmp.eq.s32.totalorder %s148, 0
      %s151 = sadd.s32 %s150, 1
      %s152 = scalar_select %p149, %s150, %s151
      %p155 = pneg %p149
      %p156 = scmp.eq.s32.totalorder %s22, 7
      %p157 = por %p155, %p156
      %p158 = scmp.ne.s32.totalorder %s150, %s153
      %p159 = scmp.eq.s32.totalorder %s22, 0
      %p160 = por %p158, %p159
      %p161 = scmp.ne.s32.totalorder %s150, %s153
      %p162 = scmp.eq.s32.totalorder %s27, 7
      %p163 = por %p161, %p162
      %p164 = scmp.ne.s32.totalorder %s153, %s154
      %p165 = scmp.eq.s32.totalorder %s27, 0
      %p166 = por %p164, %p165
      %p167 = scmp.ne.s32.totalorder %s153, %s154
      %p168 = scmp.eq.s32.totalorder %s28, 7
      %p169 = por %p167, %p168
      %p171 = scmp.ne.s32.totalorder %s154, %s170
      %p172 = scmp.eq.s32.totalorder %s28, 0
      %p173 = por %p171, %p172
      %s174 = ssub.s32 %s29, %s55
      %s175 = ssub.s32 %s30, %s51
      %s176 = sor.u32 %s174, %s175
      %s177 = ssub.s32 %s31, %s47
      %s178 = sor.u32 %s176, %s177
      %p179 = scmp.eq.s32.totalorder %s178, 0
      %s181 = sadd.s32 %s180, 1
      %s182 = scalar_select %p179, %s180, %s181
      %p185 = pneg %p179
      %p186 = scmp.eq.s32.totalorder %s22, 7
      %p187 = por %p185, %p186
      %p188 = scmp.ne.s32.totalorder %s180, %s183
      %p189 = scmp.eq.s32.totalorder %s22, 0
      %p190 = por %p188, %p189
      %p191 = scmp.ne.s32.totalorder %s180, %s183
      %p192 = scmp.eq.s32.totalorder %s27, 7
      %p193 = por %p191, %p192
      %p194 = scmp.ne.s32.totalorder %s183, %s184
      %p195 = scmp.eq.s32.totalorder %s27, 0
      %p196 = por %p194, %p195
      %p197 = scmp.ne.s32.totalorder %s183, %s184
      %p198 = scmp.eq.s32.totalorder %s28, 7
      %p199 = por %p197, %p198
      %p201 = scmp.ne.s32.totalorder %s184, %s200
      %p202 = scmp.eq.s32.totalorder %s28, 0
      %p203 = por %p201, %p202
      %p204 = scmp.le.s32.totalorder 1, %s22
      %p205 = scmp.lt.s32.totalorder %s22, 9
      %p206 = pnand %p204, %p205
      %p207 = pneg %p206
      // Predicated region
      $region9: #{closed_call.17} parent=5 // pred_check
        _
      $region10: #{closed_call.17} parent=5 // pred_check_branch
        %209 = sbr.rel (%p206) target = $region12
      $region11: #{closed_call.17} parent=5 // pred_region
        %s210 = ssub.s32 %s22, 1
      $region12: #{closed_call.17} parent=5 // pred_fallthru
        _
      %p211 = scmp.lt.s32.totalorder %s22, 8
      // Predicated region
      $region13: #{closed_call.17} parent=5 // pred_check
        %p212 = pneg %p211
      $region14: #{closed_call.17} parent=5 // pred_check_branch
        %214 = sbr.rel (%p212) target = $region16
      $region15: #{closed_call.17} parent=5 // pred_region
        // Predicated region
        $region17: #{closed_call.17} parent=15 // pred_check
          %p215 = pneg %p72
        $region18: #{closed_call.17} parent=15 // pred_check_branch
          %217 = sbr.rel (%p215) target = $region20
        $region19: #{closed_call.17} parent=15 // pred_region
          %s218 = sand.u32 %s62, 1
          %s219 = scalar_lea.sflag [#allocation6], %s218
          %s220 = sand.u32 %s62, 1
          %s221 = smul.addr %s220, 4
          %s222 = scalar_lea.vmem [#allocation5], %s221
          %s224 = ssub.s32 64, 64
          %225 = vsyncadd %s219, %s224
          %s226 = sadd.s32 %s31, %s30
          %s227 = smul.addr %s29, 4
          %s228 = sadd.s32 %s226, %s227
          %s229 = smul.addr %s228, 64
          %s230 = scalar_lea.hbm %s0, %s229
          %s232 = sshll.u32 %s222, 4
          %s233 = int_to_ptr.vmem [resolvable:$true] %s232
          %235 = dma.hbm_to_vmem [thread:$0]  %s230, 64, %s233, %s219
        $region20: #{closed_call.17} parent=15 // pred_fallthru
          _
        // Predicated region
        $region21: #{closed_call.17} parent=15 // pred_check
          %p236 = pneg %p102
        $region22: #{closed_call.17} parent=15 // pred_check_branch
          %238 = sbr.rel (%p236) target = $region24
        $region23: #{closed_call.17} parent=15 // pred_region
          %s239 = sand.u32 %s22, 1
          %s240 = scalar_lea.sflag [#allocation9], %s239
          %s241 = sand.u32 %s92, 1
          %s242 = smul.addr %s241, 4
          %s243 = scalar_lea.vmem [#allocation8], %s242
          %s245 = ssub.s32 64, 64
          %246 = vsyncadd %s240, %s245
          %s247 = sadd.s32 %s32, %s30
          %s248 = smul.addr %s29, 4
          %s249 = sadd.s32 %s247, %s248
          %s250 = smul.addr %s249, 64
          %s251 = scalar_lea.hbm %s1, %s250
          %s253 = sshll.u32 %s243, 4
          %s254 = int_to_ptr.vmem [resolvable:$true] %s253
          %256 = dma.hbm_to_vmem [thread:$0]  %s251, 64, %s254, %s240
        $region24: #{closed_call.17} parent=15 // pred_fallthru
          _
        // Predicated region
        $region25: #{closed_call.17} parent=15 // pred_check
          %p257 = pneg %p132
        $region26: #{closed_call.17} parent=15 // pred_check_branch
          %259 = sbr.rel (%p257) target = $region28
        $region27: #{closed_call.17} parent=15 // pred_region
          %s260 = sand.u32 %s22, 1
          %s261 = scalar_lea.sflag [#allocation9], %s260
          %s262 = sand.u32 %s122, 1
          %s263 = smul.addr %s262, 4
          %s264 = scalar_lea.vmem [#allocation10], %s263
          %s266 = ssub.s32 64, 64
          %267 = vsyncadd %s261, %s266
          %s268 = sadd.s32 %s32, %s30
          %s269 = smul.addr %s29, 4
          %s270 = sadd.s32 %s268, %s269
          %s271 = smul.addr %s270, 64
          %s272 = scalar_lea.hbm %s2, %s271
          %s274 = sshll.u32 %s264, 4
          %s275 = int_to_ptr.vmem [resolvable:$true] %s274
          %277 = dma.hbm_to_vmem [thread:$0]  %s272, 64, %s275, %s261
        $region28: #{closed_call.17} parent=15 // pred_fallthru
          _
        // Predicated region
        $region29: #{closed_call.17} parent=15 // pred_check
          %p278 = pneg %p160
        $region30: #{closed_call.17} parent=15 // pred_check_branch
          %280 = sbr.rel (%p278) target = $region32
        $region31: #{closed_call.17} parent=15 // pred_region
          %s281 = sand.u32 %s150, 1
          %s282 = scalar_lea.sflag [#allocation12], %s281
          %s283 = sand.u32 %s150, 1
          %s284 = scalar_lea.vmem [#allocation11], %s283
          %s286 = ssub.s32 16, 16
          %287 = vsyncadd %s282, %s286
          %s288 = sadd.s32 %s32, %s29
          %s289 = smul.addr %s288, 16
          %s290 = scalar_lea.hbm %s3, %s289
          %s292 = sshll.u32 %s284, 4
          %s293 = int_to_ptr.vmem [resolvable:$true] %s292
          %295 = dma.hbm_to_vmem [thread:$0]  %s290, 16, %s293, %s282
        $region32: #{closed_call.17} parent=15 // pred_fallthru
          _
      $region16: #{closed_call.17} parent=5 // pred_fallthru
        _
      %p296 = scmp.le.s32.totalorder 1, %s22
      %p297 = scmp.lt.s32.totalorder %s22, 9
      %p298 = pnand %p296, %p297
      %p299 = pneg %p298
      // Predicated region
      $region33: #{closed_call.17} parent=5 // pred_check
        _
      $region34: #{closed_call.17} parent=5 // pred_check_branch
        %301 = sbr.rel (%p298) target = $region36
      $region35: #{closed_call.17} parent=5 // pred_region
        %s302 = ssub.s32 %s22, 1
        %s303 = sand.u32 %s65, 1
        %s304 = scalar_lea.sflag [#allocation6], %s303
        %s305 = sand.u32 %s65, 1
        %s306 = smul.addr %s305, 4
        %s307 = scalar_lea.vmem [#allocation5], %s306
        // Predicated region
        $region37: #{closed_call.17} parent=35 // pred_check
          %p308 = pneg %p78
        $region38: #{closed_call.17} parent=35 // pred_check_branch
          %310 = sbr.rel (%p308) target = $region40
        $region39: #{closed_call.17} parent=35 // pred_region
          %311 = dma.done %s304, 64
        $region40: #{closed_call.17} parent=35 // pred_fallthru
          _
        %s312 = sand.u32 %s27, 1
        %s313 = scalar_lea.sflag [#allocation9], %s312
        %s314 = sand.u32 %s95, 1
        %s315 = smul.addr %s314, 4
        %s316 = scalar_lea.vmem [#allocation8], %s315
        // Predicated region
        $region41: #{closed_call.17} parent=35 // pred_check
          %p317 = pneg %p108
        $region42: #{closed_call.17} parent=35 // pred_check_branch
          %319 = sbr.rel (%p317) target = $region44
        $region43: #{closed_call.17} parent=35 // pred_region
          %320 = dma.done %s313, 64
        $region44: #{closed_call.17} parent=35 // pred_fallthru
          _
        %s321 = sand.u32 %s27, 1
        %s322 = scalar_lea.sflag [#allocation9], %s321
        %s323 = sand.u32 %s125, 1
        %s324 = smul.addr %s323, 4
        %s325 = scalar_lea.vmem [#allocation10], %s324
        // Predicated region
        $region45: #{closed_call.17} parent=35 // pred_check
          %p326 = pneg %p138
        $region46: #{closed_call.17} parent=35 // pred_check_branch
          %328 = sbr.rel (%p326) target = $region48
        $region47: #{closed_call.17} parent=35 // pred_region
          %329 = dma.done %s322, 64
        $region48: #{closed_call.17} parent=35 // pred_fallthru
          _
        %s330 = sand.u32 %s153, 1
        %s331 = scalar_lea.sflag [#allocation12], %s330
        %s332 = sand.u32 %s153, 1
        %s333 = scalar_lea.vmem [#allocation11], %s332
        // Predicated region
        $region49: #{closed_call.17} parent=35 // pred_check
          %p334 = pneg %p166
        $region50: #{closed_call.17} parent=35 // pred_check_branch
          %336 = sbr.rel (%p334) target = $region52
        $region51: #{closed_call.17} parent=35 // pred_region
          %337 = dma.done %s331, 16
        $region52: #{closed_call.17} parent=35 // pred_fallthru
          _
        %s338 = sand.u32 %s65, 1
        %s339 = scalar_lea.sflag [#allocation6], %s338
        %s340 = sand.u32 %s65, 1
        %s341 = smul.addr %s340, 4
        %s342 = scalar_lea.vmem [#allocation5], %s341
        %p343 = pneg %p78
        %p344 = pneg %p75
        %s345 = sand.u32 %s27, 1
        %s346 = scalar_lea.sflag [#allocation9], %s345
        %s347 = sand.u32 %s95, 1
        %s348 = smul.addr %s347, 4
        %s349 = scalar_lea.vmem [#allocation8], %s348
        %p350 = pneg %p108
        %p351 = pneg %p105
        %s352 = sand.u32 %s27, 1
        %s353 = scalar_lea.sflag [#allocation9], %s352
        %s354 = sand.u32 %s125, 1
        %s355 = smul.addr %s354, 4
        %s356 = scalar_lea.vmem [#allocation10], %s355
        %p357 = pneg %p138
        %p358 = pneg %p135
        %s359 = sand.u32 %s153, 1
        %s360 = scalar_lea.sflag [#allocation12], %s359
        %s361 = sand.u32 %s153, 1
        %s362 = scalar_lea.vmem [#allocation11], %s361
        %p363 = pneg %p166
        %p364 = pneg %p163
        %p365 = pneg %p196
        %p366 = pneg %p193
        %s367 = sand.u32 %s183, 1
        %s368 = scalar_lea.sflag [#allocation7], %s367
        %s369 = sand.u32 %s183, 1
        %s370 = smul.addr %s369, 4
        %s371 = scalar_lea.vmem [#allocation13], %s370
        %p373 = scmp.eq.s32.totalorder %s36, 0
        // Predicated region
        $region53: #{closed_call.17} parent=35 // pred_check
          %p374 = pneg %p373
        $region54: #{closed_call.17} parent=35 // pred_check_branch
          %376 = sbr.rel (%p374) target = $region56
        $region55: #{closed_call.17} parent=35 // pred_region
          %vm377 = vcmask 7168
          %378 = vst.msk [vmem:[#allocation2] sm:$0xff] %vm377, -1e+30
          %379 = vst.msk [vmem:[#allocation3] sm:$0xff] %vm377, 0.0
          %vm380 = vcmask 64512
          %381 = vst.msk [vmem:[#allocation4] sm:$0xff] %vm380, 0.0
        $region56: #{closed_call.17} parent=35 // pred_fallthru
          _
        %v382 = vld [vmem:[%s307] sm:$0xf]
        %v383 = vld [vmem:[%s316] sm:$0xf]
        %v384 = vld [vmem:[%s333] sm:$0x1]
        %v386 = vlaneseq
        %v387 = vshrl.u32 %v386, 7
        %v388 = vsub.s32 0, %v387
        %v389 = vrot.slane %v384, %v388
        %vm391 = vcmask 64512
        %v393 = vsel %vm391, %v382, 0
        %v396 = vsel %vm391, %v383, 0
        %398 = vmatprep.subr.bf16.mxu0 0
        %399 = vmatpush1.bf16.xpose.msra.mxu0 %v396
        %400 = vmatprep.subr.bf16.mxu0 0
        %401 = vmatpush1.bf16.xpose.msra.mxu0 0
        %402 = vmatprep.subr.bf16.mxu0 0
        %403 = vmatpush1.bf16.xpose.msra.mxu0 0
        %404 = vmatprep.subr.bf16.mxu0 0
        %405 = vmatpush1.bf16.xpose.msra.mxu0 0
        %406 = vmatprep.subr.bf16.mxu0 0
        %407 = vmatpush1.bf16.xpose.msra.mxu0 0
        %408 = vmatprep.subr.bf16.mxu0 0
        %409 = vmatpush1.bf16.xpose.msra.mxu0 0
        %410 = vmatprep.subr.bf16.mxu0 0
        %411 = vmatpush1.bf16.xpose.msra.mxu0 0
        %412 = vmatprep.subr.bf16.mxu0 0
        %413 = vmatpush1.bf16.xpose.msra.mxu0 0
        %414 = vmatprep.subr.bf16.mxu0 0
        %415 = vmatpush1.bf16.xpose.msra.mxu0 0
        %416 = vmatprep.subr.bf16.mxu0 0
        %417 = vmatpush1.bf16.xpose.msra.mxu0 0
        %418 = vmatprep.subr.bf16.mxu0 0
        %419 = vmatpush1.bf16.xpose.msra.mxu0 0
        %420 = vmatprep.subr.bf16.mxu0 0
        %421 = vmatpush1.bf16.xpose.msra.mxu0 0
        %422 = vmatprep.subr.bf16.mxu0 0
        %423 = vmatpush1.bf16.xpose.msra.mxu0 0
        %424 = vmatprep.subr.bf16.mxu0 0
        %425 = vmatpush1.bf16.xpose.msra.mxu0 0
        %426 = vmatprep.subr.bf16.mxu0 0
        %427 = vmatpush1.bf16.xpose.msra.mxu0 0
        %428 = vmatprep.subr.bf16.mxu0 0
        %429 = vmatpush1.bf16.xpose.msra.mxu0 0
        %430 = vmatprep.mubr.bf16.mxu0 0
        %431 = vmatmul.mubr.bf16.gmra.mrb[0].mxu0 %v393
        %v432 = vpop.f32.mrb[0].mxu0
        %v433 = vadd.f32 %v389, %v432
        %v434 = vpop.f32.mrb[0].mxu0
        %v435 = vpop.f32.mrb[0].mxu0
        %v436 = vpop.f32.mrb[0].mxu0
        %437 = vdwg.mxu0
        %v438 = vld [vmem:[#allocation2] sm:$0xff]
        %v439 = vsel %vm391, %v433, -inf
        %440 = vmax.xlane.f32.xlu0 %v439
        %v441 = vpop.xlane.xlu0 %440
        %v442 = vmax.f32 %v438, %v441
        %v443 = vsub.f32 %v438, %v442
        %v444 = vmul.f32 %v443, 1.442695
        %v445 = vpow.pop %v444
        %447 = vset.pattern.permute.xlu0 0
        %448 = vperm.xlu0 %447, %v442
        %v449 = vpop.permute.xlu0 %448
        %v451 = vsub.f32 %v433, %v449
        %v452 = vmul.f32 %v451, 1.442695
        %v453 = vpow.pop %v452
        %v454 = vld [vmem:[#allocation3] sm:$0xff]
        %v455 = vmul.f32 %v445, %v454
        %v456 = vsel %vm391, %v453, 0.0
        %457 = vadd.xlane.f32.xlu0 %v456
        %v458 = vpop.xlane.xlu0 %457
        %v459 = vadd.f32 %v455, %v458
        %vm460 = vcmask 7168
        %461 = vst.msk [vmem:[#allocation3] sm:$0xff] %vm460, %v459
        %v462 = vld [vmem:[#allocation4] sm:$0xff]
        %464 = vset.pattern.permute.xlu0 0
        %465 = vperm.xlu0 %464, %v445
        %v466 = vpop.permute.xlu0 %465
        %v468 = vmul.f32 %v466, %v462
        %v469 = vpack.c.bf16 %v453, %v453
        %v470 = vld [vmem:[%s325] sm:$0xf]
        %v472 = vsel %vm391, %v469, 0
        %vm474 = vcmask 1043456
        %v476 = vsel %vm474, %v470, 0
        %478 = vmatprep.subr.bf16.mxu0 0
        %479 = vmatpush1.bf16.msra.mxu0 %v476
        %480 = vmatprep.subr.bf16.mxu0 0
        %481 = vmatpush1.bf16.msra.mxu0 0
        %482 = vmatprep.subr.bf16.mxu0 0
        %483 = vmatpush1.bf16.msra.mxu0 0
        %484 = vmatprep.subr.bf16.mxu0 0
        %485 = vmatpush1.bf16.msra.mxu0 0
        %486 = vmatprep.subr.bf16.mxu0 0
        %487 = vmatpush1.bf16.msra.mxu0 0
        %488 = vmatprep.subr.bf16.mxu0 0
        %489 = vmatpush1.bf16.msra.mxu0 0
        %490 = vmatprep.subr.bf16.mxu0 0
        %491 = vmatpush1.bf16.msra.mxu0 0
        %492 = vmatprep.subr.bf16.mxu0 0
        %493 = vmatpush1.bf16.msra.mxu0 0
        %494 = vmatprep.subr.bf16.mxu0 0
        %495 = vmatpush1.bf16.msra.mxu0 0
        %496 = vmatprep.subr.bf16.mxu0 0
        %497 = vmatpush1.bf16.msra.mxu0 0
        %498 = vmatprep.subr.bf16.mxu0 0
        %499 = vmatpush1.bf16.msra.mxu0 0
        %500 = vmatprep.subr.bf16.mxu0 0
        %501 = vmatpush1.bf16.msra.mxu0 0
        %502 = vmatprep.subr.bf16.mxu0 0
        %503 = vmatpush1.bf16.msra.mxu0 0
        %504 = vmatprep.subr.bf16.mxu0 0
        %505 = vmatpush1.bf16.msra.mxu0 0
        %506 = vmatprep.subr.bf16.mxu0 0
        %507 = vmatpush1.bf16.msra.mxu0 0
        %508 = vmatprep.subr.bf16.mxu0 0
        %509 = vmatpush1.bf16.msra.mxu0 0
        %510 = vmatprep.mubr.bf16.mxu0 0
        %511 = vmatmul.mubr.bf16.gmra.mrb[0].mxu0 %v472
        %v512 = vpop.f32.mrb[0].mxu0
        %v513 = vadd.f32 0.0, %v512
        %v514 = vpop.f32.mrb[0].mxu0
        %v515 = vpop.f32.mrb[0].mxu0
        %v516 = vpop.f32.mrb[0].mxu0
        %517 = vdwg.mxu0
        %v518 = vadd.f32 %v468, %v513
        %519 = vst.msk [vmem:[#allocation4] sm:$0xff] %vm391, %v518
        %520 = vst.msk [vmem:[#allocation2] sm:$0xff] %vm460, %v442
        // Predicated region
        $region57: #{closed_call.17} parent=35 // pred_check
          %p521 = pneg %p373
        $region58: #{closed_call.17} parent=35 // pred_check_branch
          %523 = sbr.rel (%p521) target = $region60
        $region59: #{closed_call.17} parent=35 // pred_region
          %v524 = vld [vmem:[#allocation3] sm:$0xff]
          %v525 = vrcp.pop %v524
          %v526 = vld [vmem:[#allocation4] sm:$0xff]
          %528 = vset.pattern.permute.xlu0 0
          %529 = vperm.xlu0 %528, %v525
          %v530 = vpop.permute.xlu0 %529
          %v532 = vmul.f32 %v526, %v530
          %v533 = vpack.c.bf16 %v532, %v532
          %vm534 = vcmask 60416
          %535 = vst.msk [vmem:[%s371] sm:$0xf] %vm534, %v533
        $region60: #{closed_call.17} parent=35 // pred_fallthru
          _
        %s536 = sand.u32 %s183, 1
        %s537 = scalar_lea.sflag [#allocation7], %s536
        %s538 = sand.u32 %s183, 1
        %s539 = smul.addr %s538, 4
        %s540 = scalar_lea.vmem [#allocation13], %s539
        // Predicated region
        $region61: #{closed_call.17} parent=35 // pred_check
          %p541 = pneg %p193
        $region62: #{closed_call.17} parent=35 // pred_check_branch
          %543 = sbr.rel (%p541) target = $region64
        $region63: #{closed_call.17} parent=35 // pred_region
          %s545 = ssub.s32 64, 64
          %546 = vsyncadd %s537, %s545
          %s547 = sadd.s32 %s35, %s34
          %s548 = smul.addr %s33, 4
          %s549 = sadd.s32 %s547, %s548
          %s550 = smul.addr %s549, 64
          %s551 = scalar_lea.hbm %s4, %s550
          %s553 = sshll.u32 %s540, 4
          %s554 = int_to_ptr.vmem [resolvable:$true] %s553
          %556 = dma.vmem_to_hbm [thread:$0]  %s554, 64, %s551, %s537
        $region64: #{closed_call.17} parent=35 // pred_fallthru
          _
      $region36: #{closed_call.17} parent=5 // pred_fallthru
        _
      %p557 = scmp.le.s32.totalorder 2, %s22
      // Predicated region
      $region65: #{closed_call.17} parent=5 // pred_check
        %p558 = pneg %p557
      $region66: #{closed_call.17} parent=5 // pred_check_branch
        %560 = sbr.rel (%p558) target = $region68
      $region67: #{closed_call.17} parent=5 // pred_region
        %s561 = ssub.s32 %s22, 2
        // Predicated region
        $region69: #{closed_call.17} parent=67 // pred_check
          %p562 = pneg %p199
        $region70: #{closed_call.17} parent=67 // pred_check_branch
          %564 = sbr.rel (%p562) target = $region72
        $region71: #{closed_call.17} parent=67 // pred_region
          %s565 = sand.u32 %s184, 1
          %s566 = scalar_lea.sflag [#allocation7], %s565
          %s567 = sand.u32 %s184, 1
          %s568 = smul.addr %s567, 4
          %s569 = scalar_lea.vmem [#allocation13], %s568
          %570 = dma.done %s566, 64
        $region72: #{closed_call.17} parent=67 // pred_fallthru
          _
      $region68: #{closed_call.17} parent=5 // pred_fallthru
        _
    $region6: #{closed_call.17} parent=1 // loop_footer
      %s26 = sadd.s32 1, %s22
    $region7: #{closed_call.17} parent=1 // loop_footer_branch
      %21 = sbr.rel target = $region3
    $region8: #{closed_call.17} parent=1 // loop_exit
      _
    %571 = vsyncpa [#allocation6], 1
    %s572 = scalar_lea.sflag [#allocation6], 1
    %573 = vsyncpa %s572, 1
    %574 = vsyncpa [#allocation9], 1
    %s575 = scalar_lea.sflag [#allocation9], 1
    %576 = vsyncpa %s575, 1
    %577 = vsyncpa [#allocation12], 1
    %s578 = scalar_lea.sflag [#allocation12], 1
    %579 = vsyncpa %s578, 1
    %580 = vsyncpa [#allocation7], 1
    %s581 = scalar_lea.sflag [#allocation7], 1
    %582 = vsyncpa %s581, 1

// kernel: closed_call.20
$region0: #{closed_call.20}
  #allocation0 [shape = 'u32[]', space=smem, size = 0x4, offset = 0x4, fixed_abs, tag = 'smem constant byte address 0x4 - core index']
  #allocation1 [shape = 'u32[144,128]{1,0:T(1,128)}', space=vmem, size = 0x12000, scoped, tag = 'internal scratch']
  #allocation2 [shape = 'f32[16,32]{1,0:T(8,128)}', space=vmem, size = 0x2000, scoped, tag = 'scratch operand']
  %s0 = inlined_call_operand.hbm [shape: bf16[16,64], index: 0, kind: input, shape index: {}]
  %s1 = inlined_call_operand.hbm [shape: bf16[64,32], index: 1, kind: input, shape index: {}]
  %s2 = inlined_call_operand.hbm [shape: f32[1,32], index: 2, kind: input, shape index: {}]
  %s3 = inlined_call_operand.hbm [shape: bf16[16,32], index: 3, kind: input, shape index: {}]
  %s4 = inlined_call_operand.hbm [shape: f32[1,32], index: 4, kind: input, shape index: {}]
  %s5 = inlined_call_operand.hbm [shape: f32[1,32], index: 5, kind: input, shape index: {}]
  %s6 = inlined_call_operand.hbm [shape: bf16[16,32], index: 6, kind: output, shape index: {}]
  %s7 = sld [smem:[#allocation0]]
  $region66: #{closed_call.20} parent=0
    _
  %s9 = ssub.s32 1, %s7
  %s10 = scalar_select 0, %s9, %s7
  $region1: #{closed_call.20} parent=0
    #allocation3 [shape = 'u8[4096]{0}', space=vmem, size = 0x1000, scoped, tag = 'input window, operand 0, single buffered']
    #allocation4 [shape = 's32[1]{0}', space=sflag, size = 0x4, scoped, tag = 'scoped memory for closed_call.20']
    #allocation5 [shape = 's32[1]{0}', space=sflag, size = 0x4, scoped, tag = 'scoped memory for closed_call.20']
    #allocation6 [shape = 'u8[16384]{0}', space=vmem, size = 0x4000, scoped, tag = 'input window, operand 1, single buffered']
    #allocation7 [shape = 's32[1]{0}', space=sflag, size = 0x4, scoped, tag = 'scoped memory for closed_call.20']
    #allocation8 [shape = 'u8[512]{0}', space=vmem, size = 0x400, scoped, tag = 'input window, operand 2, single buffered']
    #allocation9 [shape = 'u8[4096]{0}', space=vmem, size = 0x1000, scoped, tag = 'input window, operand 3, single buffered']
    #allocation10 [shape = 's32[1]{0}', space=sflag, size = 0x4, scoped, tag = 'scoped memory for closed_call.20']
    #allocation11 [shape = 'u8[512]{0}', space=vmem, size = 0x400, scoped, tag = 'input window, operand 4, single buffered']
    #allocation12 [shape = 'u8[512]{0}', space=vmem, size = 0x400, scoped, tag = 'input window, operand 5, single buffered']
    #allocation13 [shape = 's32[1]{0}', space=sflag, size = 0x4, scoped, tag = 'scoped memory for closed_call.20']
    #allocation14 [shape = 'u8[4096]{0}', space=vmem, size = 0x1000, scoped, tag = 'output window, operand 0, single buffered']
    %11 = vsyncpa [#allocation4], 0
    %12 = vsyncpa [#allocation7], 0
    %13 = vsyncpa [#allocation10], 0
    %14 = vsyncpa [#allocation13], 0
    %15 = vsyncpa [#allocation5], 0
    // Predicated region
    $region2: #{closed_call.20} parent=1 // pred_check
      _
    $region3: #{closed_call.20} parent=1 // pred_check_branch
      %17 = sbr.rel (0) target = $region5
    $region4: #{closed_call.20} parent=1 // pred_region
      %s19 = ssub.s32 128, 128
      %20 = vsyncadd [#allocation4], %s19
      %s21 = sshll.u32 [#allocation3], 4
      %s22 = int_to_ptr.vmem [resolvable:$true] %s21
      %27 = dma.hbm_to_vmem [thread:$0]  %s0, 128, %s22, [#allocation4], 64, 64, 4
    $region5: #{closed_call.20} parent=1 // pred_fallthru
      _
    // Predicated region
    $region6: #{closed_call.20} parent=1 // pred_check
      _
    $region7: #{closed_call.20} parent=1 // pred_check_branch
      %29 = sbr.rel (0) target = $region9
    $region8: #{closed_call.20} parent=1 // pred_region
      %s31 = ssub.s32 512, 512
      %32 = vsyncadd [#allocation7], %s31
      %s33 = sshll.u32 [#allocation6], 4
      %s34 = int_to_ptr.vmem [resolvable:$true] %s33
      %39 = dma.hbm_to_vmem [thread:$0]  %s1, 512, %s34, [#allocation7], 64, 64, 4
    $region9: #{closed_call.20} parent=1 // pred_fallthru
      _
    // Predicated region
    $region10: #{closed_call.20} parent=1 // pred_check
      _
    $region11: #{closed_call.20} parent=1 // pred_check_branch
      %41 = sbr.rel (0) target = $region13
    $region12: #{closed_call.20} parent=1 // pred_region
      %s43 = ssub.s32 16, 16
      %44 = vsyncadd [#allocation7], %s43
      %s46 = sshll.u32 [#allocation8], 4
      %s47 = int_to_ptr.vmem [resolvable:$true] %s46
      %49 = dma.hbm_to_vmem [thread:$0]  %s2, 16, %s47, [#allocation7]
    $region13: #{closed_call.20} parent=1 // pred_fallthru
      _
    // Predicated region
    $region14: #{closed_call.20} parent=1 // pred_check
      _
    $region15: #{closed_call.20} parent=1 // pred_check_branch
      %51 = sbr.rel (0) target = $region17
    $region16: #{closed_call.20} parent=1 // pred_region
      %s53 = ssub.s32 128, 128
      %54 = vsyncadd [#allocation10], %s53
      %s55 = sshll.u32 [#allocation9], 4
      %s56 = int_to_ptr.vmem [resolvable:$true] %s55
      %61 = dma.hbm_to_vmem [thread:$0]  %s3, 128, %s56, [#allocation10], 64, 64, 4
    $region17: #{closed_call.20} parent=1 // pred_fallthru
      _
    // Predicated region
    $region18: #{closed_call.20} parent=1 // pred_check
      _
    $region19: #{closed_call.20} parent=1 // pred_check_branch
      %63 = sbr.rel (0) target = $region21
    $region20: #{closed_call.20} parent=1 // pred_region
      %s65 = ssub.s32 16, 16
      %66 = vsyncadd [#allocation10], %s65
      %s68 = sshll.u32 [#allocation11], 4
      %s69 = int_to_ptr.vmem [resolvable:$true] %s68
      %71 = dma.hbm_to_vmem [thread:$0]  %s4, 16, %s69, [#allocation10]
    $region21: #{closed_call.20} parent=1 // pred_fallthru
      _
    // Predicated region
    $region22: #{closed_call.20} parent=1 // pred_check
      _
    $region23: #{closed_call.20} parent=1 // pred_check_branch
      %73 = sbr.rel (0) target = $region25
    $region24: #{closed_call.20} parent=1 // pred_region
      %s75 = ssub.s32 16, 16
      %76 = vsyncadd [#allocation13], %s75
      %s78 = sshll.u32 [#allocation12], 4
      %s79 = int_to_ptr.vmem [resolvable:$true] %s78
      %81 = dma.hbm_to_vmem [thread:$0]  %s5, 16, %s79, [#allocation13]
    $region25: #{closed_call.20} parent=1 // pred_fallthru
      _
    // Predicated region
    $region26: #{closed_call.20} parent=1 // pred_check
      _
    $region27: #{closed_call.20} parent=1 // pred_check_branch
      %83 = sbr.rel (0) target = $region29
    $region28: #{closed_call.20} parent=1 // pred_region
      %84 = dma.done [#allocation4], 128
    $region29: #{closed_call.20} parent=1 // pred_fallthru
      _
    // Predicated region
    $region30: #{closed_call.20} parent=1 // pred_check
      _
    $region31: #{closed_call.20} parent=1 // pred_check_branch
      %86 = sbr.rel (0) target = $region33
    $region32: #{closed_call.20} parent=1 // pred_region
      %87 = dma.done [#allocation7], 512
    $region33: #{closed_call.20} parent=1 // pred_fallthru
      _
    // Predicated region
    $region34: #{closed_call.20} parent=1 // pred_check
      _
    $region35: #{closed_call.20} parent=1 // pred_check_branch
      %89 = sbr.rel (0) target = $region37
    $region36: #{closed_call.20} parent=1 // pred_region
      %90 = dma.done [#allocation7], 16
    $region37: #{closed_call.20} parent=1 // pred_fallthru
      _
    // Predicated region
    $region38: #{closed_call.20} parent=1 // pred_check
      _
    $region39: #{closed_call.20} parent=1 // pred_check_branch
      %92 = sbr.rel (0) target = $region41
    $region40: #{closed_call.20} parent=1 // pred_region
      %93 = dma.done [#allocation10], 128
    $region41: #{closed_call.20} parent=1 // pred_fallthru
      _
    // Predicated region
    $region42: #{closed_call.20} parent=1 // pred_check
      _
    $region43: #{closed_call.20} parent=1 // pred_check_branch
      %95 = sbr.rel (0) target = $region45
    $region44: #{closed_call.20} parent=1 // pred_region
      %96 = dma.done [#allocation10], 16
    $region45: #{closed_call.20} parent=1 // pred_fallthru
      _
    // Predicated region
    $region46: #{closed_call.20} parent=1 // pred_check
      _
    $region47: #{closed_call.20} parent=1 // pred_check_branch
      %98 = sbr.rel (0) target = $region49
    $region48: #{closed_call.20} parent=1 // pred_region
      %99 = dma.done [#allocation13], 16
    $region49: #{closed_call.20} parent=1 // pred_fallthru
      _
    %p101 = scmp.eq.s32.totalorder 0, 0
    // Predicated region
    $region50: #{closed_call.20} parent=1 // pred_check
      %p102 = pneg %p101
    $region51: #{closed_call.20} parent=1 // pred_check_branch
      %104 = sbr.rel (%p102) target = $region53
    $region52: #{closed_call.20} parent=1 // pred_region
      %vm105 = vcmask 261120
      %106 = vst.msk [vmem:[#allocation2] sm:$0xff] %vm105, 0.0
      %107 = vst.msk [vmem:[#allocation2 + $0x8] sm:$0xff] %vm105, 0.0
    $region53: #{closed_call.20} parent=1 // pred_fallthru
      _
    %v108 = vld [vmem:[#allocation2] sm:$0xff]
    %v109 = vld [vmem:[#allocation2 + $0x8] sm:$0xff]
    %v110 = vld [vmem:[#allocation3] sm:$0xf]
    %v111 = vld [vmem:[#allocation3 + $0x4] sm:$0xf]
    %v112 = vld [vmem:[#allocation6] sm:$0xf]
    %v113 = vld [vmem:[#allocation6 + $0x4] sm:$0xf]
    %v114 = vld [vmem:[#allocation6 + $0x8] sm:$0xf]
    %v115 = vld [vmem:[#allocation6 + $0xc] sm:$0xf]
    %v116 = vld [vmem:[#allocation6 + $0x10] sm:$0xf]
    %v117 = vld [vmem:[#allocation6 + $0x14] sm:$0xf]
    %v118 = vld [vmem:[#allocation6 + $0x18] sm:$0xf]
    %v119 = vld [vmem:[#allocation6 + $0x1c] sm:$0xf]
    %v122 = vunpack.c.l.b16 %v110
    %v123 = vunpack.c.l.b16 %v111
    %v124 = vpack.c.b16 %v123, %v122
    %v133 = vunpack.c.l.b16 %v112
    %v134 = vunpack.c.l.b16 %v113
    %v135 = vunpack.c.l.b16 %v114
    %v136 = vunpack.c.l.b16 %v115
    %v137 = vunpack.c.l.b16 %v116
    %v138 = vunpack.c.l.b16 %v117
    %v139 = vunpack.c.l.b16 %v118
    %v140 = vunpack.c.l.b16 %v119
    %v141 = vpack.c.b16 %v134, %v133
    %v142 = vpack.c.b16 %v136, %v135
    %v143 = vpack.c.b16 %v138, %v137
    %v144 = vpack.c.b16 %v140, %v139
    %vm149 = vcmask 523264
    %v151 = vsel %vm149, %v124, 0
    %153 = vmatprep.subr.bf16.mxu0 0
    %154 = vmatpush1.bf16.msra.mxu0 %v141
    %155 = vmatprep.subr.bf16.mxu0 0
    %156 = vmatpush1.bf16.msra.mxu0 %v142
    %157 = vmatprep.subr.bf16.mxu0 0
    %158 = vmatpush1.bf16.msra.mxu0 %v143
    %159 = vmatprep.subr.bf16.mxu0 0
    %160 = vmatpush1.bf16.msra.mxu0 %v144
    %161 = vmatprep.subr.bf16.mxu0 0
    %162 = vmatpush1.bf16.msra.mxu0 0
    %163 = vmatprep.subr.bf16.mxu0 0
    %164 = vmatpush1.bf16.msra.mxu0 0
    %165 = vmatprep.subr.bf16.mxu0 0
    %166 = vmatpush1.bf16.msra.mxu0 0
    %167 = vmatprep.subr.bf16.mxu0 0
    %168 = vmatpush1.bf16.msra.mxu0 0
    %169 = vmatprep.subr.bf16.mxu0 0
    %170 = vmatpush1.bf16.msra.mxu0 0
    %171 = vmatprep.subr.bf16.mxu0 0
    %172 = vmatpush1.bf16.msra.mxu0 0
    %173 = vmatprep.subr.bf16.mxu0 0
    %174 = vmatpush1.bf16.msra.mxu0 0
    %175 = vmatprep.subr.bf16.mxu0 0
    %176 = vmatpush1.bf16.msra.mxu0 0
    %177 = vmatprep.subr.bf16.mxu0 0
    %178 = vmatpush1.bf16.msra.mxu0 0
    %179 = vmatprep.subr.bf16.mxu0 0
    %180 = vmatpush1.bf16.msra.mxu0 0
    %181 = vmatprep.subr.bf16.mxu0 0
    %182 = vmatpush1.bf16.msra.mxu0 0
    %183 = vmatprep.subr.bf16.mxu0 0
    %184 = vmatpush1.bf16.msra.mxu0 0
    %185 = vmatprep.mubr.bf16.mxu0 0
    %186 = vmatmul.mubr.bf16.gmra.mrb[0].mxu0 %v151
    %v187 = vpop.f32.mrb[0].mxu0
    %v188 = vadd.f32 0.0, %v187
    %v189 = vpop.f32.mrb[0].mxu0
    %v190 = vpop.f32.mrb[0].mxu0
    %v191 = vadd.f32 0.0, %v190
    %v192 = vpop.f32.mrb[0].mxu0
    %193 = vdwg.mxu0
    %v194 = vadd.f32 %v108, %v188
    %v195 = vadd.f32 %v109, %v191
    %vm196 = vcmask 261120
    %197 = vst.msk [vmem:[#allocation2] sm:$0xff] %vm196, %v194
    %198 = vst.msk [vmem:[#allocation2 + $0x8] sm:$0xff] %vm196, %v195
    // Predicated region
    $region54: #{closed_call.20} parent=1 // pred_check
      %p199 = pneg %p101
    $region55: #{closed_call.20} parent=1 // pred_check_branch
      %201 = sbr.rel (%p199) target = $region57
    $region56: #{closed_call.20} parent=1 // pred_region
      %v202 = vld [vmem:[#allocation2] sm:$0xff]
      %v203 = vld [vmem:[#allocation2 + $0x8] sm:$0xff]
      %v204 = vld [vmem:[#allocation8] sm:$0x1]
      %v206 = vlaneseq
      %v207 = vshrl.u32 %v206, 7
      %v208 = vsub.s32 0, %v207
      %v209 = vrot.slane %v204, %v208
      %v211 = vadd.f32 %v202, %v209
      %v212 = vadd.f32 %v203, %v209
      %v213 = vld [vmem:[#allocation9] sm:$0xf]
      %v214 = vld [vmem:[#allocation9 + $0x4] sm:$0xf]
      %v215 = vunpack.c.l.bf16 %v213
      %v216 = vunpack.c.l.bf16 %v214
      %v217 = vadd.f32 %v211, %v215
      %v218 = vadd.f32 %v212, %v216
      %v219 = vsel %vm196, %v217, 0.0
      %220 = vadd.xlane.f32.xlu0 %v219
      %v221 = vpop.xlane.xlu0 %220
      %v222 = vsel %vm196, %v218, 0.0
      %223 = vadd.xlane.f32.xlu0 %v222
      %v224 = vpop.xlane.xlu0 %223
      %v225 = vrcp.pop 32.0
      %v226 = vmul.f32 %v221, %v225
      %v227 = vmul.f32 %v224, %v225
      %v228 = vsub.f32 %v217, %v226
      %v229 = vsub.f32 %v218, %v227
      %v230 = vmul.f32 %v228, %v228
      %v231 = vmul.f32 %v229, %v229
      %v232 = vsel %vm196, %v230, 0.0
      %233 = vadd.xlane.f32.xlu0 %v232
      %v234 = vpop.xlane.xlu0 %233
      %v235 = vsel %vm196, %v231, 0.0
      %236 = vadd.xlane.f32.xlu0 %v235
      %v237 = vpop.xlane.xlu0 %236
      %v238 = vmul.f32 %v234, %v225
      %v239 = vmul.f32 %v237, %v225
      %v240 = vadd.f32 %v238, 1e-12
      %v241 = vadd.f32 %v239, 1e-12
      %v242 = vrsqrt.pop %v240
      %v243 = vrsqrt.pop %v241
      %v244 = vmul.f32 %v228, %v242
      %v245 = vmul.f32 %v229, %v243
      %v246 = vld [vmem:[#allocation11] sm:$0x1]
      %v248 = vlaneseq
      %v249 = vshrl.u32 %v248, 7
      %v250 = vsub.s32 0, %v249
      %v251 = vrot.slane %v246, %v250
      %v253 = vmul.f32 %v244, %v251
      %v254 = vmul.f32 %v245, %v251
      %v255 = vld [vmem:[#allocation12] sm:$0x1]
      %v257 = vlaneseq
      %v258 = vshrl.u32 %v257, 7
      %v259 = vsub.s32 0, %v258
      %v260 = vrot.slane %v255, %v259
      %v262 = vadd.f32 %v253, %v260
      %v263 = vadd.f32 %v254, %v260
      %v264 = vpack.c.bf16 %v263, %v262
      %v266 = vunpack.c.l.b16 %v264
      %v267 = vunpack.c.h.b16 %v264
      %v268 = vpack.c.b16 %v266, %v266
      %v269 = vpack.c.b16 %v267, %v267
      %vm272 = vcmask 257024
      %273 = vst.msk [vmem:[#allocation14] sm:$0xf] %vm272, %v268
      %274 = vst.msk [vmem:[#allocation14 + $0x4] sm:$0xf] %vm272, %v269
    $region57: #{closed_call.20} parent=1 // pred_fallthru
      _
    // Predicated region
    $region58: #{closed_call.20} parent=1 // pred_check
      _
    $region59: #{closed_call.20} parent=1 // pred_check_branch
      %276 = sbr.rel (0) target = $region61
    $region60: #{closed_call.20} parent=1 // pred_region
      %s278 = ssub.s32 128, 128
      %279 = vsyncadd [#allocation5], %s278
      %s280 = sshll.u32 [#allocation14], 4
      %s281 = int_to_ptr.vmem [resolvable:$true] %s280
      %286 = dma.vmem_to_hbm [thread:$0]  %s281, 128, %s6, [#allocation5], 64, 64, 4
    $region61: #{closed_call.20} parent=1 // pred_fallthru
      _
    // Predicated region
    $region62: #{closed_call.20} parent=1 // pred_check
      _
    $region63: #{closed_call.20} parent=1 // pred_check_branch
      %288 = sbr.rel (0) target = $region65
    $region64: #{closed_call.20} parent=1 // pred_region
      %289 = dma.done [#allocation5], 128
    $region65: #{closed_call.20} parent=1 // pred_fallthru
      _
    %290 = vsyncpa [#allocation4], 1
    %291 = vsyncpa [#allocation7], 1
    %292 = vsyncpa [#allocation10], 1
    %293 = vsyncpa [#allocation13], 1
    %294 = vsyncpa [#allocation5], 1

// kernel: closed_call.19
$region0: #{closed_call.19}
  #allocation0 [shape = 'u32[]', space=smem, size = 0x4, offset = 0x4, fixed_abs, tag = 'smem constant byte address 0x4 - core index']
  #allocation1 [shape = 'u32[144,128]{1,0:T(1,128)}', space=vmem, size = 0x12000, scoped, tag = 'internal scratch']
  #allocation2 [shape = 'f32[16,64]{1,0:T(8,128)}', space=vmem, size = 0x2000, scoped, tag = 'scratch operand']
  %s0 = inlined_call_operand.hbm [shape: bf16[16,32], index: 0, kind: input, shape index: {}]
  %s1 = inlined_call_operand.hbm [shape: bf16[32,64], index: 1, kind: input, shape index: {}]
  %s2 = inlined_call_operand.hbm [shape: f32[1,64], index: 2, kind: input, shape index: {}]
  %s3 = inlined_call_operand.hbm [shape: bf16[16,64], index: 3, kind: output, shape index: {}]
  %s4 = sld [smem:[#allocation0]]
  $region42: #{closed_call.19} parent=0
    _
  %s6 = ssub.s32 1, %s4
  %s7 = scalar_select 0, %s6, %s4
  $region1: #{closed_call.19} parent=0
    #allocation3 [shape = 'u8[4096]{0}', space=vmem, size = 0x1000, scoped, tag = 'input window, operand 0, single buffered']
    #allocation4 [shape = 's32[1]{0}', space=sflag, size = 0x4, scoped, tag = 'scoped memory for closed_call.19']
    #allocation5 [shape = 's32[1]{0}', space=sflag, size = 0x4, scoped, tag = 'scoped memory for closed_call.19']
    #allocation6 [shape = 'u8[8192]{0}', space=vmem, size = 0x2000, scoped, tag = 'input window, operand 1, single buffered']
    #allocation7 [shape = 's32[1]{0}', space=sflag, size = 0x4, scoped, tag = 'scoped memory for closed_call.19']
    #allocation8 [shape = 'u8[512]{0}', space=vmem, size = 0x400, scoped, tag = 'input window, operand 2, single buffered']
    #allocation9 [shape = 'u8[4096]{0}', space=vmem, size = 0x1000, scoped, tag = 'output window, operand 0, single buffered']
    %8 = vsyncpa [#allocation4], 0
    %9 = vsyncpa [#allocation7], 0
    %10 = vsyncpa [#allocation5], 0
    // Predicated region
    $region2: #{closed_call.19} parent=1 // pred_check
      _
    $region3: #{closed_call.19} parent=1 // pred_check_branch
      %12 = sbr.rel (0) target = $region5
    $region4: #{closed_call.19} parent=1 // pred_region
      %s14 = ssub.s32 128, 128
      %15 = vsyncadd [#allocation4], %s14
      %s16 = sshll.u32 [#allocation3], 4
      %s17 = int_to_ptr.vmem [resolvable:$true] %s16
      %22 = dma.hbm_to_vmem [thread:$0]  %s0, 128, %s17, [#allocation4], 64, 64, 4
    $region5: #{closed_call.19} parent=1 // pred_fallthru
      _
    // Predicated region
    $region6: #{closed_call.19} parent=1 // pred_check
      _
    $region7: #{closed_call.19} parent=1 // pred_check_branch
      %24 = sbr.rel (0) target = $region9
    $region8: #{closed_call.19} parent=1 // pred_region
      %s26 = ssub.s32 256, 256
      %27 = vsyncadd [#allocation7], %s26
      %s28 = sshll.u32 [#allocation6], 4
      %s29 = int_to_ptr.vmem [resolvable:$true] %s28
      %34 = dma.hbm_to_vmem [thread:$0]  %s1, 256, %s29, [#allocation7], 64, 64, 4
    $region9: #{closed_call.19} parent=1 // pred_fallthru
      _
    // Predicated region
    $region10: #{closed_call.19} parent=1 // pred_check
      _
    $region11: #{closed_call.19} parent=1 // pred_check_branch
      %36 = sbr.rel (0) target = $region13
    $region12: #{closed_call.19} parent=1 // pred_region
      %s38 = ssub.s32 16, 16
      %39 = vsyncadd [#allocation7], %s38
      %s41 = sshll.u32 [#allocation8], 4
      %s42 = int_to_ptr.vmem [resolvable:$true] %s41
      %44 = dma.hbm_to_vmem [thread:$0]  %s2, 16, %s42, [#allocation7]
    $region13: #{closed_call.19} parent=1 // pred_fallthru
      _
    // Predicated region
    $region14: #{closed_call.19} parent=1 // pred_check
      _
    $region15: #{closed_call.19} parent=1 // pred_check_branch
      %46 = sbr.rel (0) target = $region17
    $region16: #{closed_call.19} parent=1 // pred_region
      %47 = dma.done [#allocation4], 128
    $region17: #{closed_call.19} parent=1 // pred_fallthru
      _
    // Predicated region
    $region18: #{closed_call.19} parent=1 // pred_check
      _
    $region19: #{closed_call.19} parent=1 // pred_check_branch
      %49 = sbr.rel (0) target = $region21
    $region20: #{closed_call.19} parent=1 // pred_region
      %50 = dma.done [#allocation7], 256
    $region21: #{closed_call.19} parent=1 // pred_fallthru
      _
    // Predicated region
    $region22: #{closed_call.19} parent=1 // pred_check
      _
    $region23: #{closed_call.19} parent=1 // pred_check_branch
      %52 = sbr.rel (0) target = $region25
    $region24: #{closed_call.19} parent=1 // pred_region
      %53 = dma.done [#allocation7], 16
    $region25: #{closed_call.19} parent=1 // pred_fallthru
      _
    %p55 = scmp.eq.s32.totalorder 0, 0
    // Predicated region
    $region26: #{closed_call.19} parent=1 // pred_check
      %p56 = pneg %p55
    $region27: #{closed_call.19} parent=1 // pred_check_branch
      %58 = sbr.rel (%p56) target = $region29
    $region28: #{closed_call.19} parent=1 // pred_region
      %vm59 = vcmask 523264
      %60 = vst.msk [vmem:[#allocation2] sm:$0xff] %vm59, 0.0
      %61 = vst.msk [vmem:[#allocation2 + $0x8] sm:$0xff] %vm59, 0.0
    $region29: #{closed_call.19} parent=1 // pred_fallthru
      _
    %v62 = vld [vmem:[#allocation2] sm:$0xff]
    %v63 = vld [vmem:[#allocation2 + $0x8] sm:$0xff]
    %v64 = vld [vmem:[#allocation3] sm:$0xf]
    %v65 = vld [vmem:[#allocation3 + $0x4] sm:$0xf]
    %v66 = vld [vmem:[#allocation6] sm:$0xf]
    %v67 = vld [vmem:[#allocation6 + $0x4] sm:$0xf]
    %v68 = vld [vmem:[#allocation6 + $0x8] sm:$0xf]
    %v69 = vld [vmem:[#allocation6 + $0xc] sm:$0xf]
    %v72 = vunpack.c.l.b16 %v64
    %v73 = vunpack.c.l.b16 %v65
    %v74 = vpack.c.b16 %v73, %v72
    %v79 = vunpack.c.l.b16 %v66
    %v80 = vunpack.c.l.b16 %v67
    %v81 = vunpack.c.l.b16 %v68
    %v82 = vunpack.c.l.b16 %v69
    %v83 = vpack.c.b16 %v80, %v79
    %v84 = vpack.c.b16 %v82, %v81
    %vm87 = vcmask 261120
    %v89 = vsel %vm87, %v74, 0
    %91 = vmatprep.subr.bf16.mxu0 0
    %92 = vmatpush1.bf16.msra.mxu0 %v83
    %93 = vmatprep.subr.bf16.mxu0 0
    %94 = vmatpush1.bf16.msra.mxu0 %v84
    %95 = vmatprep.subr.bf16.mxu0 0
    %96 = vmatpush1.bf16.msra.mxu0 0
    %97 = vmatprep.subr.bf16.mxu0 0
    %98 = vmatpush1.bf16.msra.mxu0 0
    %99 = vmatprep.subr.bf16.mxu0 0
    %100 = vmatpush1.bf16.msra.mxu0 0
    %101 = vmatprep.subr.bf16.mxu0 0
    %102 = vmatpush1.bf16.msra.mxu0 0
    %103 = vmatprep.subr.bf16.mxu0 0
    %104 = vmatpush1.bf16.msra.mxu0 0
    %105 = vmatprep.subr.bf16.mxu0 0
    %106 = vmatpush1.bf16.msra.mxu0 0
    %107 = vmatprep.subr.bf16.mxu0 0
    %108 = vmatpush1.bf16.msra.mxu0 0
    %109 = vmatprep.subr.bf16.mxu0 0
    %110 = vmatpush1.bf16.msra.mxu0 0
    %111 = vmatprep.subr.bf16.mxu0 0
    %112 = vmatpush1.bf16.msra.mxu0 0
    %113 = vmatprep.subr.bf16.mxu0 0
    %114 = vmatpush1.bf16.msra.mxu0 0
    %115 = vmatprep.subr.bf16.mxu0 0
    %116 = vmatpush1.bf16.msra.mxu0 0
    %117 = vmatprep.subr.bf16.mxu0 0
    %118 = vmatpush1.bf16.msra.mxu0 0
    %119 = vmatprep.subr.bf16.mxu0 0
    %120 = vmatpush1.bf16.msra.mxu0 0
    %121 = vmatprep.subr.bf16.mxu0 0
    %122 = vmatpush1.bf16.msra.mxu0 0
    %123 = vmatprep.mubr.bf16.mxu0 0
    %124 = vmatmul.mubr.bf16.gmra.mrb[0].mxu0 %v89
    %v125 = vpop.f32.mrb[0].mxu0
    %v126 = vadd.f32 0.0, %v125
    %v127 = vpop.f32.mrb[0].mxu0
    %v128 = vpop.f32.mrb[0].mxu0
    %v129 = vadd.f32 0.0, %v128
    %v130 = vpop.f32.mrb[0].mxu0
    %131 = vdwg.mxu0
    %v132 = vadd.f32 %v62, %v126
    %v133 = vadd.f32 %v63, %v129
    %vm134 = vcmask 523264
    %135 = vst.msk [vmem:[#allocation2] sm:$0xff] %vm134, %v132
    %136 = vst.msk [vmem:[#allocation2 + $0x8] sm:$0xff] %vm134, %v133
    // Predicated region
    $region30: #{closed_call.19} parent=1 // pred_check
      %p137 = pneg %p55
    $region31: #{closed_call.19} parent=1 // pred_check_branch
      %139 = sbr.rel (%p137) target = $region33
    $region32: #{closed_call.19} parent=1 // pred_region
      %v140 = vld [vmem:[#allocation2] sm:$0xff]
      %v141 = vld [vmem:[#allocation2 + $0x8] sm:$0xff]
      %v142 = vld [vmem:[#allocation8] sm:$0x1]
      %v144 = vlaneseq
      %v145 = vshrl.u32 %v144, 7
      %v146 = vsub.s32 0, %v145
      %v147 = vrot.slane %v142, %v146
      %v149 = vadd.f32 %v140, %v147
      %v150 = vadd.f32 %v141, %v147
      %v151 = vmul.f32 %v149, %v149
      %v152 = vmul.f32 %v150, %v150
      %v153 = vmul.f32 %v149, %v151
      %v154 = vmul.f32 %v150, %v152
      %v155 = vmul.f32 %v153, 0.044715
      %v156 = vmul.f32 %v154, 0.044715
      %v157 = vadd.f32 %v149, %v155
      %v158 = vadd.f32 %v150, %v156
      %v159 = vmul.f32 %v157, 0.7978846
      %v160 = vmul.f32 %v158, 0.7978846
      %v161 = vtanh.pop %v159
      %v162 = vtanh.pop %v160
      %v163 = vadd.f32 %v161, 1.0
      %v164 = vadd.f32 %v162, 1.0
      %v165 = vmul.f32 %v163, 0.5
      %v166 = vmul.f32 %v164, 0.5
      %v167 = vmul.f32 %v149, %v165
      %v168 = vmul.f32 %v150, %v166
      %v169 = vpack.c.bf16 %v168, %v167
      %v171 = vunpack.c.l.b16 %v169
      %v172 = vunpack.c.h.b16 %v169
      %v173 = vpack.c.b16 %v171, %v171
      %v174 = vpack.c.b16 %v172, %v172
      %vm177 = vcmask 519168
      %178 = vst.msk [vmem:[#allocation9] sm:$0xf] %vm177, %v173
      %179 = vst.msk [vmem:[#allocation9 + $0x4] sm:$0xf] %vm177, %v174
    $region33: #{closed_call.19} parent=1 // pred_fallthru
      _
    // Predicated region
    $region34: #{closed_call.19} parent=1 // pred_check
      _
    $region35: #{closed_call.19} parent=1 // pred_check_branch
      %181 = sbr.rel (0) target = $region37
    $region36: #{closed_call.19} parent=1 // pred_region
      %s183 = ssub.s32 128, 128
      %184 = vsyncadd [#allocation5], %s183
      %s185 = sshll.u32 [#allocation9], 4
      %s186 = int_to_ptr.vmem [resolvable:$true] %s185
      %191 = dma.vmem_to_hbm [thread:$0]  %s186, 128, %s3, [#allocation5], 64, 64, 4
    $region37: #{closed_call.19} parent=1 // pred_fallthru
      _
    // Predicated region
    $region38: #{closed_call.19} parent=1 // pred_check
      _
    $region39: #{closed_call.19} parent=1 // pred_check_branch
      %193 = sbr.rel (0) target = $region41
    $region40: #{closed_call.19} parent=1 // pred_region
      %194 = dma.done [#allocation5], 128
    $region41: #{closed_call.19} parent=1 // pred_fallthru
      _
    %195 = vsyncpa [#allocation4], 1
    %196 = vsyncpa [#allocation7], 1
    %197 = vsyncpa [#allocation5], 1

// kernel: closed_call.18
$region0: #{closed_call.18}
  #allocation0 [shape = 'u32[]', space=smem, size = 0x4, offset = 0x4, fixed_abs, tag = 'smem constant byte address 0x4 - core index']
  #allocation1 [shape = 'u32[144,128]{1,0:T(1,128)}', space=vmem, size = 0x12000, scoped, tag = 'internal scratch']
  #allocation2 [shape = 'f32[16,32]{1,0:T(8,128)}', space=vmem, size = 0x2000, scoped, tag = 'scratch operand']
  %s0 = inlined_call_operand.hbm [shape: bf16[16,32], index: 0, kind: input, shape index: {}]
  %s1 = inlined_call_operand.hbm [shape: bf16[32,32], index: 1, kind: input, shape index: {}]
  %s2 = inlined_call_operand.hbm [shape: f32[1,32], index: 2, kind: input, shape index: {}]
  %s3 = inlined_call_operand.hbm [shape: bf16[16,32], index: 3, kind: input, shape index: {}]
  %s4 = inlined_call_operand.hbm [shape: f32[1,32], index: 4, kind: input, shape index: {}]
  %s5 = inlined_call_operand.hbm [shape: f32[1,32], index: 5, kind: input, shape index: {}]
  %s6 = inlined_call_operand.hbm [shape: bf16[16,32], index: 6, kind: output, shape index: {}]
  %s7 = sld [smem:[#allocation0]]
  $region66: #{closed_call.18} parent=0
    _
  %s9 = ssub.s32 1, %s7
  %s10 = scalar_select 0, %s9, %s7
  $region1: #{closed_call.18} parent=0
    #allocation3 [shape = 'u8[4096]{0}', space=vmem, size = 0x1000, scoped, tag = 'input window, operand 0, single buffered']
    #allocation4 [shape = 's32[1]{0}', space=sflag, size = 0x4, scoped, tag = 'scoped memory for closed_call.18']
    #allocation5 [shape = 's32[1]{0}', space=sflag, size = 0x4, scoped, tag = 'scoped memory for closed_call.18']
    #allocation6 [shape = 'u8[8192]{0}', space=vmem, size = 0x2000, scoped, tag = 'input window, operand 1, single buffered']
    #allocation7 [shape = 's32[1]{0}', space=sflag, size = 0x4, scoped, tag = 'scoped memory for closed_call.18']
    #allocation8 [shape = 'u8[512]{0}', space=vmem, size = 0x400, scoped, tag = 'input window, operand 2, single buffered']
    #allocation9 [shape = 'u8[4096]{0}', space=vmem, size = 0x1000, scoped, tag = 'input window, operand 3, single buffered']
    #allocation10 [shape = 's32[1]{0}', space=sflag, size = 0x4, scoped, tag = 'scoped memory for closed_call.18']
    #allocation11 [shape = 'u8[512]{0}', space=vmem, size = 0x400, scoped, tag = 'input window, operand 4, single buffered']
    #allocation12 [shape = 'u8[512]{0}', space=vmem, size = 0x400, scoped, tag = 'input window, operand 5, single buffered']
    #allocation13 [shape = 's32[1]{0}', space=sflag, size = 0x4, scoped, tag = 'scoped memory for closed_call.18']
    #allocation14 [shape = 'u8[4096]{0}', space=vmem, size = 0x1000, scoped, tag = 'output window, operand 0, single buffered']
    %11 = vsyncpa [#allocation4], 0
    %12 = vsyncpa [#allocation7], 0
    %13 = vsyncpa [#allocation10], 0
    %14 = vsyncpa [#allocation13], 0
    %15 = vsyncpa [#allocation5], 0
    // Predicated region
    $region2: #{closed_call.18} parent=1 // pred_check
      _
    $region3: #{closed_call.18} parent=1 // pred_check_branch
      %17 = sbr.rel (0) target = $region5
    $region4: #{closed_call.18} parent=1 // pred_region
      %s19 = ssub.s32 128, 128
      %20 = vsyncadd [#allocation4], %s19
      %s21 = sshll.u32 [#allocation3], 4
      %s22 = int_to_ptr.vmem [resolvable:$true] %s21
      %27 = dma.hbm_to_vmem [thread:$0]  %s0, 128, %s22, [#allocation4], 64, 64, 4
    $region5: #{closed_call.18} parent=1 // pred_fallthru
      _
    // Predicated region
    $region6: #{closed_call.18} parent=1 // pred_check
      _
    $region7: #{closed_call.18} parent=1 // pred_check_branch
      %29 = sbr.rel (0) target = $region9
    $region8: #{closed_call.18} parent=1 // pred_region
      %s31 = ssub.s32 256, 256
      %32 = vsyncadd [#allocation7], %s31
      %s33 = sshll.u32 [#allocation6], 4
      %s34 = int_to_ptr.vmem [resolvable:$true] %s33
      %39 = dma.hbm_to_vmem [thread:$0]  %s1, 256, %s34, [#allocation7], 64, 64, 4
    $region9: #{closed_call.18} parent=1 // pred_fallthru
      _
    // Predicated region
    $region10: #{closed_call.18} parent=1 // pred_check
      _
    $region11: #{closed_call.18} parent=1 // pred_check_branch
      %41 = sbr.rel (0) target = $region13
    $region12: #{closed_call.18} parent=1 // pred_region
      %s43 = ssub.s32 16, 16
      %44 = vsyncadd [#allocation7], %s43
      %s46 = sshll.u32 [#allocation8], 4
      %s47 = int_to_ptr.vmem [resolvable:$true] %s46
      %49 = dma.hbm_to_vmem [thread:$0]  %s2, 16, %s47, [#allocation7]
    $region13: #{closed_call.18} parent=1 // pred_fallthru
      _
    // Predicated region
    $region14: #{closed_call.18} parent=1 // pred_check
      _
    $region15: #{closed_call.18} parent=1 // pred_check_branch
      %51 = sbr.rel (0) target = $region17
    $region16: #{closed_call.18} parent=1 // pred_region
      %s53 = ssub.s32 128, 128
      %54 = vsyncadd [#allocation10], %s53
      %s55 = sshll.u32 [#allocation9], 4
      %s56 = int_to_ptr.vmem [resolvable:$true] %s55
      %61 = dma.hbm_to_vmem [thread:$0]  %s3, 128, %s56, [#allocation10], 64, 64, 4
    $region17: #{closed_call.18} parent=1 // pred_fallthru
      _
    // Predicated region
    $region18: #{closed_call.18} parent=1 // pred_check
      _
    $region19: #{closed_call.18} parent=1 // pred_check_branch
      %63 = sbr.rel (0) target = $region21
    $region20: #{closed_call.18} parent=1 // pred_region
      %s65 = ssub.s32 16, 16
      %66 = vsyncadd [#allocation10], %s65
      %s68 = sshll.u32 [#allocation11], 4
      %s69 = int_to_ptr.vmem [resolvable:$true] %s68
      %71 = dma.hbm_to_vmem [thread:$0]  %s4, 16, %s69, [#allocation10]
    $region21: #{closed_call.18} parent=1 // pred_fallthru
      _
    // Predicated region
    $region22: #{closed_call.18} parent=1 // pred_check
      _
    $region23: #{closed_call.18} parent=1 // pred_check_branch
      %73 = sbr.rel (0) target = $region25
    $region24: #{closed_call.18} parent=1 // pred_region
      %s75 = ssub.s32 16, 16
      %76 = vsyncadd [#allocation13], %s75
      %s78 = sshll.u32 [#allocation12], 4
      %s79 = int_to_ptr.vmem [resolvable:$true] %s78
      %81 = dma.hbm_to_vmem [thread:$0]  %s5, 16, %s79, [#allocation13]
    $region25: #{closed_call.18} parent=1 // pred_fallthru
      _
    // Predicated region
    $region26: #{closed_call.18} parent=1 // pred_check
      _
    $region27: #{closed_call.18} parent=1 // pred_check_branch
      %83 = sbr.rel (0) target = $region29
    $region28: #{closed_call.18} parent=1 // pred_region
      %84 = dma.done [#allocation4], 128
    $region29: #{closed_call.18} parent=1 // pred_fallthru
      _
    // Predicated region
    $region30: #{closed_call.18} parent=1 // pred_check
      _
    $region31: #{closed_call.18} parent=1 // pred_check_branch
      %86 = sbr.rel (0) target = $region33
    $region32: #{closed_call.18} parent=1 // pred_region
      %87 = dma.done [#allocation7], 256
    $region33: #{closed_call.18} parent=1 // pred_fallthru
      _
    // Predicated region
    $region34: #{closed_call.18} parent=1 // pred_check
      _
    $region35: #{closed_call.18} parent=1 // pred_check_branch
      %89 = sbr.rel (0) target = $region37
    $region36: #{closed_call.18} parent=1 // pred_region
      %90 = dma.done [#allocation7], 16
    $region37: #{closed_call.18} parent=1 // pred_fallthru
      _
    // Predicated region
    $region38: #{closed_call.18} parent=1 // pred_check
      _
    $region39: #{closed_call.18} parent=1 // pred_check_branch
      %92 = sbr.rel (0) target = $region41
    $region40: #{closed_call.18} parent=1 // pred_region
      %93 = dma.done [#allocation10], 128
    $region41: #{closed_call.18} parent=1 // pred_fallthru
      _
    // Predicated region
    $region42: #{closed_call.18} parent=1 // pred_check
      _
    $region43: #{closed_call.18} parent=1 // pred_check_branch
      %95 = sbr.rel (0) target = $region45
    $region44: #{closed_call.18} parent=1 // pred_region
      %96 = dma.done [#allocation10], 16
    $region45: #{closed_call.18} parent=1 // pred_fallthru
      _
    // Predicated region
    $region46: #{closed_call.18} parent=1 // pred_check
      _
    $region47: #{closed_call.18} parent=1 // pred_check_branch
      %98 = sbr.rel (0) target = $region49
    $region48: #{closed_call.18} parent=1 // pred_region
      %99 = dma.done [#allocation13], 16
    $region49: #{closed_call.18} parent=1 // pred_fallthru
      _
    %p101 = scmp.eq.s32.totalorder 0, 0
    // Predicated region
    $region50: #{closed_call.18} parent=1 // pred_check
      %p102 = pneg %p101
    $region51: #{closed_call.18} parent=1 // pred_check_branch
      %104 = sbr.rel (%p102) target = $region53
    $region52: #{closed_call.18} parent=1 // pred_region
      %vm105 = vcmask 261120
      %106 = vst.msk [vmem:[#allocation2] sm:$0xff] %vm105, 0.0
      %107 = vst.msk [vmem:[#allocation2 + $0x8] sm:$0xff] %vm105, 0.0
    $region53: #{closed_call.18} parent=1 // pred_fallthru
      _
    %v108 = vld [vmem:[#allocation2] sm:$0xff]
    %v109 = vld [vmem:[#allocation2 + $0x8] sm:$0xff]
    %v110 = vld [vmem:[#allocation3] sm:$0xf]
    %v111 = vld [vmem:[#allocation3 + $0x4] sm:$0xf]
    %v112 = vld [vmem:[#allocation6] sm:$0xf]
    %v113 = vld [vmem:[#allocation6 + $0x4] sm:$0xf]
    %v114 = vld [vmem:[#allocation6 + $0x8] sm:$0xf]
    %v115 = vld [vmem:[#allocation6 + $0xc] sm:$0xf]
    %v118 = vunpack.c.l.b16 %v110
    %v119 = vunpack.c.l.b16 %v111
    %v120 = vpack.c.b16 %v119, %v118
    %v125 = vunpack.c.l.b16 %v112
    %v126 = vunpack.c.l.b16 %v113
    %v127 = vunpack.c.l.b16 %v114
    %v128 = vunpack.c.l.b16 %v115
    %v129 = vpack.c.b16 %v126, %v125
    %v130 = vpack.c.b16 %v128, %v127
    %vm133 = vcmask 261120
    %v135 = vsel %vm133, %v120, 0
    %137 = vmatprep.subr.bf16.mxu0 0
    %138 = vmatpush1.bf16.msra.mxu0 %v129
    %139 = vmatprep.subr.bf16.mxu0 0
    %140 = vmatpush1.bf16.msra.mxu0 %v130
    %141 = vmatprep.subr.bf16.mxu0 0
    %142 = vmatpush1.bf16.msra.mxu0 0
    %143 = vmatprep.subr.bf16.mxu0 0
    %144 = vmatpush1.bf16.msra.mxu0 0
    %145 = vmatprep.subr.bf16.mxu0 0
    %146 = vmatpush1.bf16.msra.mxu0 0
    %147 = vmatprep.subr.bf16.mxu0 0
    %148 = vmatpush1.bf16.msra.mxu0 0
    %149 = vmatprep.subr.bf16.mxu0 0
    %150 = vmatpush1.bf16.msra.mxu0 0
    %151 = vmatprep.subr.bf16.mxu0 0
    %152 = vmatpush1.bf16.msra.mxu0 0
    %153 = vmatprep.subr.bf16.mxu0 0
    %154 = vmatpush1.bf16.msra.mxu0 0
    %155 = vmatprep.subr.bf16.mxu0 0
    %156 = vmatpush1.bf16.msra.mxu0 0
    %157 = vmatprep.subr.bf16.mxu0 0
    %158 = vmatpush1.bf16.msra.mxu0 0
    %159 = vmatprep.subr.bf16.mxu0 0
    %160 = vmatpush1.bf16.msra.mxu0 0
    %161 = vmatprep.subr.bf16.mxu0 0
    %162 = vmatpush1.bf16.msra.mxu0 0
    %163 = vmatprep.subr.bf16.mxu0 0
    %164 = vmatpush1.bf16.msra.mxu0 0
    %165 = vmatprep.subr.bf16.mxu0 0
    %166 = vmatpush1.bf16.msra.mxu0 0
    %167 = vmatprep.subr.bf16.mxu0 0
    %168 = vmatpush1.bf16.msra.mxu0 0
    %169 = vmatprep.mubr.bf16.mxu0 0
    %170 = vmatmul.mubr.bf16.gmra.mrb[0].mxu0 %v135
    %v171 = vpop.f32.mrb[0].mxu0
    %v172 = vadd.f32 0.0, %v171
    %v173 = vpop.f32.mrb[0].mxu0
    %v174 = vpop.f32.mrb[0].mxu0
    %v175 = vadd.f32 0.0, %v174
    %v176 = vpop.f32.mrb[0].mxu0
    %177 = vdwg.mxu0
    %v178 = vadd.f32 %v108, %v172
    %v179 = vadd.f32 %v109, %v175
    %180 = vst.msk [vmem:[#allocation2] sm:$0xff] %vm133, %v178
    %181 = vst.msk [vmem:[#allocation2 + $0x8] sm:$0xff] %vm133, %v179
    // Predicated region
    $region54: #{closed_call.18} parent=1 // pred_check
      %p182 = pneg %p101
    $region55: #{closed_call.18} parent=1 // pred_check_branch
      %184 = sbr.rel (%p182) target = $region57
    $region56: #{closed_call.18} parent=1 // pred_region
      %v185 = vld [vmem:[#allocation2] sm:$0xff]
      %v186 = vld [vmem:[#allocation2 + $0x8] sm:$0xff]
      %v187 = vld [vmem:[#allocation8] sm:$0x1]
      %v189 = vlaneseq
      %v190 = vshrl.u32 %v189, 7
      %v191 = vsub.s32 0, %v190
      %v192 = vrot.slane %v187, %v191
      %v194 = vadd.f32 %v185, %v192
      %v195 = vadd.f32 %v186, %v192
      %v196 = vld [vmem:[#allocation9] sm:$0xf]
      %v197 = vld [vmem:[#allocation9 + $0x4] sm:$0xf]
      %v198 = vunpack.c.l.bf16 %v196
      %v199 = vunpack.c.l.bf16 %v197
      %v200 = vadd.f32 %v194, %v198
      %v201 = vadd.f32 %v195, %v199
      %v202 = vsel %vm133, %v200, 0.0
      %203 = vadd.xlane.f32.xlu0 %v202
      %v204 = vpop.xlane.xlu0 %203
      %v205 = vsel %vm133, %v201, 0.0
      %206 = vadd.xlane.f32.xlu0 %v205
      %v207 = vpop.xlane.xlu0 %206
      %v208 = vrcp.pop 32.0
      %v209 = vmul.f32 %v204, %v208
      %v210 = vmul.f32 %v207, %v208
      %v211 = vsub.f32 %v200, %v209
      %v212 = vsub.f32 %v201, %v210
      %v213 = vmul.f32 %v211, %v211
      %v214 = vmul.f32 %v212, %v212
      %v215 = vsel %vm133, %v213, 0.0
      %216 = vadd.xlane.f32.xlu0 %v215
      %v217 = vpop.xlane.xlu0 %216
      %v218 = vsel %vm133, %v214, 0.0
      %219 = vadd.xlane.f32.xlu0 %v218
      %v220 = vpop.xlane.xlu0 %219
      %v221 = vmul.f32 %v217, %v208
      %v222 = vmul.f32 %v220, %v208
      %v223 = vadd.f32 %v221, 1e-12
      %v224 = vadd.f32 %v222, 1e-12
      %v225 = vrsqrt.pop %v223
      %v226 = vrsqrt.pop %v224
      %v227 = vmul.f32 %v211, %v225
      %v228 = vmul.f32 %v212, %v226
      %v229 = vld [vmem:[#allocation11] sm:$0x1]
      %v231 = vlaneseq
      %v232 = vshrl.u32 %v231, 7
      %v233 = vsub.s32 0, %v232
      %v234 = vrot.slane %v229, %v233
      %v236 = vmul.f32 %v227, %v234
      %v237 = vmul.f32 %v228, %v234
      %v238 = vld [vmem:[#allocation12] sm:$0x1]
      %v240 = vlaneseq
      %v241 = vshrl.u32 %v240, 7
      %v242 = vsub.s32 0, %v241
      %v243 = vrot.slane %v238, %v242
      %v245 = vadd.f32 %v236, %v243
      %v246 = vadd.f32 %v237, %v243
      %v247 = vpack.c.bf16 %v246, %v245
      %v249 = vunpack.c.l.b16 %v247
      %v250 = vunpack.c.h.b16 %v247
      %v251 = vpack.c.b16 %v249, %v249
      %v252 = vpack.c.b16 %v250, %v250
      %vm255 = vcmask 257024
      %256 = vst.msk [vmem:[#allocation14] sm:$0xf] %vm255, %v251
      %257 = vst.msk [vmem:[#allocation14 + $0x4] sm:$0xf] %vm255, %v252
    $region57: #{closed_call.18} parent=1 // pred_fallthru
      _
    // Predicated region
    $region58: #{closed_call.18} parent=1 // pred_check
      _
    $region59: #{closed_call.18} parent=1 // pred_check_branch
      %259 = sbr.rel (0) target = $region61
    $region60: #{closed_call.18} parent=1 // pred_region
      %s261 = ssub.s32 128, 128
      %262 = vsyncadd [#allocation5], %s261
      %s263 = sshll.u32 [#allocation14], 4
      %s264 = int_to_ptr.vmem [resolvable:$true] %s263
      %269 = dma.vmem_to_hbm [thread:$0]  %s264, 128, %s6, [#allocation5], 64, 64, 4
    $region61: #{closed_call.18} parent=1 // pred_fallthru
      _
    // Predicated region
    $region62: #{closed_call.18} parent=1 // pred_check
      _
    $region63: #{closed_call.18} parent=1 // pred_check_branch
      %271 = sbr.rel (0) target = $region65
    $region64: #{closed_call.18} parent=1 // pred_region
      %272 = dma.done [#allocation5], 128
    $region65: #{closed_call.18} parent=1 // pred_fallthru
      _
    %273 = vsyncpa [#allocation4], 1
    %274 = vsyncpa [#allocation7], 1
    %275 = vsyncpa [#allocation10], 1
    %276 = vsyncpa [#allocation13], 1
    %277 = vsyncpa [#allocation5], 1

// kernel: albert_forward.7
$region0: #{albert_forward.7}
  #allocation0 [shape = 'u32[]', space=smem, size = 0x4, offset = 0x4, fixed_abs, tag = 'smem constant byte address 0x4 - core index']
  #allocation1 [shape = 'u32[144,128]{1,0:T(1,128)}', space=vmem, size = 0x12000, scoped, tag = 'internal scratch']
  #allocation2 [shape = 'f32[2,32]{1,0:T(2,128)}', space=vmem, size = 0x400, scoped, tag = 'scratch operand']
  %s0 = inlined_call_operand.hbm [shape: bf16[2,32], index: 0, kind: input, shape index: {}]
  %s1 = inlined_call_operand.hbm [shape: bf16[32,32], index: 1, kind: input, shape index: {}]
  %s2 = inlined_call_operand.hbm [shape: f32[1,32], index: 2, kind: input, shape index: {}]
  %s3 = inlined_call_operand.hbm [shape: bf16[2,32], index: 3, kind: output, shape index: {}]
  %s4 = sld [smem:[#allocation0]]
  $region42: #{albert_forward.7} parent=0
    _
  %s6 = ssub.s32 1, %s4
  %s7 = scalar_select 0, %s6, %s4
  $region1: #{albert_forward.7} parent=0
    #allocation3 [shape = 'u8[512]{0}', space=vmem, size = 0x400, scoped, tag = 'input window, operand 0, single buffered']
    #allocation4 [shape = 's32[1]{0}', space=sflag, size = 0x4, scoped, tag = 'scoped memory for albert_forward.7']
    #allocation5 [shape = 's32[1]{0}', space=sflag, size = 0x4, scoped, tag = 'scoped memory for albert_forward.7']
    #allocation6 [shape = 'u8[8192]{0}', space=vmem, size = 0x2000, scoped, tag = 'input window, operand 1, single buffered']
    #allocation7 [shape = 's32[1]{0}', space=sflag, size = 0x4, scoped, tag = 'scoped memory for albert_forward.7']
    #allocation8 [shape = 'u8[512]{0}', space=vmem, size = 0x400, scoped, tag = 'input window, operand 2, single buffered']
    #allocation9 [shape = 'u8[512]{0}', space=vmem, size = 0x400, scoped, tag = 'output window, operand 0, single buffered']
    %8 = vsyncpa [#allocation4], 0
    %9 = vsyncpa [#allocation7], 0
    %10 = vsyncpa [#allocation5], 0
    // Predicated region
    $region2: #{albert_forward.7} parent=1 // pred_check
      _
    $region3: #{albert_forward.7} parent=1 // pred_check_branch
      %12 = sbr.rel (0) target = $region5
    $region4: #{albert_forward.7} parent=1 // pred_region
      %s14 = ssub.s32 16, 16
      %15 = vsyncadd [#allocation4], %s14
      %s17 = sshll.u32 [#allocation3], 4
      %s18 = int_to_ptr.vmem [resolvable:$true] %s17
      %20 = dma.hbm_to_vmem [thread:$0]  %s0, 16, %s18, [#allocation4]
    $region5: #{albert_forward.7} parent=1 // pred_fallthru
      _
    // Predicated region
    $region6: #{albert_forward.7} parent=1 // pred_check
      _
    $region7: #{albert_forward.7} parent=1 // pred_check_branch
      %22 = sbr.rel (0) target = $region9
    $region8: #{albert_forward.7} parent=1 // pred_region
      %s24 = ssub.s32 256, 256
      %25 = vsyncadd [#allocation7], %s24
      %s26 = sshll.u32 [#allocation6], 4
      %s27 = int_to_ptr.vmem [resolvable:$true] %s26
      %32 = dma.hbm_to_vmem [thread:$0]  %s1, 256, %s27, [#allocation7], 64, 64, 4
    $region9: #{albert_forward.7} parent=1 // pred_fallthru
      _
    // Predicated region
    $region10: #{albert_forward.7} parent=1 // pred_check
      _
    $region11: #{albert_forward.7} parent=1 // pred_check_branch
      %34 = sbr.rel (0) target = $region13
    $region12: #{albert_forward.7} parent=1 // pred_region
      %s36 = ssub.s32 16, 16
      %37 = vsyncadd [#allocation7], %s36
      %s39 = sshll.u32 [#allocation8], 4
      %s40 = int_to_ptr.vmem [resolvable:$true] %s39
      %42 = dma.hbm_to_vmem [thread:$0]  %s2, 16, %s40, [#allocation7]
    $region13: #{albert_forward.7} parent=1 // pred_fallthru
      _
    // Predicated region
    $region14: #{albert_forward.7} parent=1 // pred_check
      _
    $region15: #{albert_forward.7} parent=1 // pred_check_branch
      %44 = sbr.rel (0) target = $region17
    $region16: #{albert_forward.7} parent=1 // pred_region
      %45 = dma.done [#allocation4], 16
    $region17: #{albert_forward.7} parent=1 // pred_fallthru
      _
    // Predicated region
    $region18: #{albert_forward.7} parent=1 // pred_check
      _
    $region19: #{albert_forward.7} parent=1 // pred_check_branch
      %47 = sbr.rel (0) target = $region21
    $region20: #{albert_forward.7} parent=1 // pred_region
      %48 = dma.done [#allocation7], 256
    $region21: #{albert_forward.7} parent=1 // pred_fallthru
      _
    // Predicated region
    $region22: #{albert_forward.7} parent=1 // pred_check
      _
    $region23: #{albert_forward.7} parent=1 // pred_check_branch
      %50 = sbr.rel (0) target = $region25
    $region24: #{albert_forward.7} parent=1 // pred_region
      %51 = dma.done [#allocation7], 16
    $region25: #{albert_forward.7} parent=1 // pred_fallthru
      _
    %p53 = scmp.eq.s32.totalorder 0, 0
    // Predicated region
    $region26: #{albert_forward.7} parent=1 // pred_check
      %p54 = pneg %p53
    $region27: #{albert_forward.7} parent=1 // pred_check_branch
      %56 = sbr.rel (%p54) target = $region29
    $region28: #{albert_forward.7} parent=1 // pred_region
      %vm57 = vcmask 254976
      %58 = vst.msk [vmem:[#allocation2] sm:$0x3] %vm57, 0.0
    $region29: #{albert_forward.7} parent=1 // pred_fallthru
      _
    %v59 = vld [vmem:[#allocation2] sm:$0x3]
    %v60 = vld [vmem:[#allocation3] sm:$0x1]
    %v61 = vld [vmem:[#allocation6] sm:$0xf]
    %v62 = vld [vmem:[#allocation6 + $0x4] sm:$0xf]
    %v63 = vld [vmem:[#allocation6 + $0x8] sm:$0xf]
    %v64 = vld [vmem:[#allocation6 + $0xc] sm:$0xf]
    %v69 = vunpack.c.l.b16 %v61
    %v70 = vunpack.c.l.b16 %v62
    %v71 = vunpack.c.l.b16 %v63
    %v72 = vunpack.c.l.b16 %v64
    %v73 = vpack.c.b16 %v70, %v69
    %v74 = vpack.c.b16 %v72, %v71
    %vm77 = vcmask 261120
    %v79 = vsel %vm77, %v60, 0
    %81 = vmatprep.subr.bf16.mxu0 0
    %82 = vmatpush1.bf16.msra.mxu0 %v73
    %83 = vmatprep.subr.bf16.mxu0 0
    %84 = vmatpush1.bf16.msra.mxu0 %v74
    %85 = vmatprep.subr.bf16.mxu0 0
    %86 = vmatpush1.bf16.msra.mxu0 0
    %87 = vmatprep.subr.bf16.mxu0 0
    %88 = vmatpush1.bf16.msra.mxu0 0
    %89 = vmatprep.subr.bf16.mxu0 0
    %90 = vmatpush1.bf16.msra.mxu0 0
    %91 = vmatprep.subr.bf16.mxu0 0
    %92 = vmatpush1.bf16.msra.mxu0 0
    %93 = vmatprep.subr.bf16.mxu0 0
    %94 = vmatpush1.bf16.msra.mxu0 0
    %95 = vmatprep.subr.bf16.mxu0 0
    %96 = vmatpush1.bf16.msra.mxu0 0
    %97 = vmatprep.subr.bf16.mxu0 0
    %98 = vmatpush1.bf16.msra.mxu0 0
    %99 = vmatprep.subr.bf16.mxu0 0
    %100 = vmatpush1.bf16.msra.mxu0 0
    %101 = vmatprep.subr.bf16.mxu0 0
    %102 = vmatpush1.bf16.msra.mxu0 0
    %103 = vmatprep.subr.bf16.mxu0 0
    %104 = vmatpush1.bf16.msra.mxu0 0
    %105 = vmatprep.subr.bf16.mxu0 0
    %106 = vmatpush1.bf16.msra.mxu0 0
    %107 = vmatprep.subr.bf16.mxu0 0
    %108 = vmatpush1.bf16.msra.mxu0 0
    %109 = vmatprep.subr.bf16.mxu0 0
    %110 = vmatpush1.bf16.msra.mxu0 0
    %111 = vmatprep.subr.bf16.mxu0 0
    %112 = vmatpush1.bf16.msra.mxu0 0
    %113 = vmatprep.mubr.bf16.mxu0 0
    %114 = vmatmul.mubr.bf16.gmra.mrb[0].mxu0 %v79
    %v115 = vpop.f32.mrb[0].mxu0
    %v116 = vadd.f32 0.0, %v115
    %v117 = vpop.f32.mrb[0].mxu0
    %v118 = vpop.f32.mrb[0].mxu0
    %v119 = vpop.f32.mrb[0].mxu0
    %120 = vdwg.mxu0
    %v121 = vadd.f32 %v59, %v116
    %vm122 = vcmask 254976
    %123 = vst.msk [vmem:[#allocation2] sm:$0x3] %vm122, %v121
    // Predicated region
    $region30: #{albert_forward.7} parent=1 // pred_check
      %p124 = pneg %p53
    $region31: #{albert_forward.7} parent=1 // pred_check_branch
      %126 = sbr.rel (%p124) target = $region33
    $region32: #{albert_forward.7} parent=1 // pred_region
      %v127 = vld [vmem:[#allocation2] sm:$0x3]
      %v128 = vld [vmem:[#allocation8] sm:$0x1]
      %v130 = vlaneseq
      %v131 = vshrl.u32 %v130, 7
      %v132 = vsub.s32 0, %v131
      %v133 = vrot.slane %v128, %v132
      %v135 = vadd.f32 %v127, %v133
      %v136 = vtanh.pop %v135
      %v137 = vpack.c.bf16 %v136, %v136
      %vm138 = vcmask 253952
      %139 = vst.msk [vmem:[#allocation9] sm:$0x1] %vm138, %v137
    $region33: #{albert_forward.7} parent=1 // pred_fallthru
      _
    // Predicated region
    $region34: #{albert_forward.7} parent=1 // pred_check
      _
    $region35: #{albert_forward.7} parent=1 // pred_check_branch
      %141 = sbr.rel (0) target = $region37
    $region36: #{albert_forward.7} parent=1 // pred_region
      %s143 = ssub.s32 16, 16
      %144 = vsyncadd [#allocation5], %s143
      %s146 = sshll.u32 [#allocation9], 4
      %s147 = int_to_ptr.vmem [resolvable:$true] %s146
      %149 = dma.vmem_to_hbm [thread:$0]  %s147, 16, %s3, [#allocation5]
    $region37: #{albert_forward.7} parent=1 // pred_fallthru
      _
    // Predicated region
    $region38: #{albert_forward.7} parent=1 // pred_check
      _
    $region39: #{albert_forward.7} parent=1 // pred_check_branch
      %151 = sbr.rel (0) target = $region41
    $region40: #{albert_forward.7} parent=1 // pred_region
      %152 = dma.done [#allocation5], 16
    $region41: #{albert_forward.7} parent=1 // pred_fallthru
      _
    %153 = vsyncpa [#allocation4], 1
    %154 = vsyncpa [#allocation7], 1
    %155 = vsyncpa [#allocation5], 1

// kernel: albert_forward.9
$region0: #{albert_forward.9}
  #allocation0 [shape = 'u32[]', space=smem, size = 0x4, offset = 0x4, fixed_abs, tag = 'smem constant byte address 0x4 - core index']
  #allocation1 [shape = 'u32[144,128]{1,0:T(1,128)}', space=vmem, size = 0x12000, scoped, tag = 'internal scratch']
  %s0 = inlined_call_operand.vmem [shape: f32[2,128], index: 0, kind: input, shape index: {}]
  %s1 = inlined_call_operand.vmem [shape: f32[2,128], index: 1, kind: input, shape index: {}]
  %s2 = inlined_call_operand.hbm [shape: f32[2,128], index: 2, kind: output, shape index: {0}]
  %s3 = inlined_call_operand.hbm [shape: f32[1,1], index: 3, kind: output, shape index: {1}]
  %4 = xla_tuple %s2, %s3
  %s5 = sld [smem:[#allocation0]]
  $region26: #{albert_forward.9} parent=0
    _
  %s7 = ssub.s32 1, %s5
  %s8 = scalar_select 0, %s7, %s5
  $region1: #{albert_forward.9} parent=0
    #allocation2 [shape = 'u8[1024]{0}', space=vmem, size = 0x400, scoped, tag = 'output window, operand 0, single buffered']
    #allocation3 [shape = 's32[1]{0}', space=sflag, size = 0x4, scoped, tag = 'scoped memory for albert_forward.9']
    #allocation4 [shape = 'u8[512]{0}', space=vmem, size = 0x400, scoped, tag = 'output window, operand 1, single buffered']
    #allocation5 [shape = 's32[1]{0}', space=sflag, size = 0x4, scoped, tag = 'scoped memory for albert_forward.9']
    %9 = vsyncpa [#allocation3], 0
    %10 = vsyncpa [#allocation5], 0
    // Predicated region
    $region2: #{albert_forward.9} parent=1 // pred_check
      _
    $region3: #{albert_forward.9} parent=1 // pred_check_branch
      %12 = sbr.rel (0) target = $region5
    $region4: #{albert_forward.9} parent=1 // pred_region
      _
    $region5: #{albert_forward.9} parent=1 // pred_fallthru
      _
    // Predicated region
    $region6: #{albert_forward.9} parent=1 // pred_check
      _
    $region7: #{albert_forward.9} parent=1 // pred_check_branch
      %14 = sbr.rel (0) target = $region9
    $region8: #{albert_forward.9} parent=1 // pred_region
      _
    $region9: #{albert_forward.9} parent=1 // pred_fallthru
      _
    %v15 = vld [vmem:[%s0] sm:$0x3]
    %vm16 = vcmask 1041408
    %v17 = vsel %vm16, %v15, -inf
    %18 = vmax.xlane.f32.xlu0 %v17
    %v19 = vpop.xlane.xlu0 %18
    %v20 = vsub.f32 %v15, %v19
    %v21 = vmul.f32 %v20, 1.442695
    %v22 = vpow.pop %v21
    %v23 = vsel %vm16, %v22, 0.0
    %24 = vadd.xlane.f32.xlu0 %v23
    %v25 = vpop.xlane.xlu0 %24
    %v26 = vrcp.pop %v25
    %v27 = vmul.f32 %v22, %v26
    %28 = vst [vmem:[#allocation2] sm:$0x3] %v27
    %v29 = vlog2.pop %v25
    %v30 = vmul.f32 %v29, 0.6931472
    %v31 = vsub.f32 %v20, %v30
    %v32 = vld [vmem:[%s1] sm:$0x3]
    %v33 = vmul.f32 %v32, %v31
    %v34 = vsel %vm16, %v33, 0.0
    %35 = vadd.xlane.f32.xlu0 %v34
    %v36 = vpop.xlane.xlu0 %35
    %v37 = vsub.f32 0.0, %v36
    %v38 = vsel %vm16, %v37, 0.0
    %v39 = vrot.slane %v38, 4
    %v40 = vadd.f32 %v38, %v39
    %v41 = vrot.slane %v40, 2
    %v42 = vadd.f32 %v40, %v41
    %v43 = vrot.slane %v42, 1
    %v44 = vadd.f32 %v42, %v43
    %v45 = vrcp.pop 2.0
    %v46 = vmul.f32 %v44, %v45
    %vm47 = vcmask 0
    %48 = vst.msk [vmem:[#allocation4] sm:$0x1] %vm47, %v46
    // Predicated region
    $region10: #{albert_forward.9} parent=1 // pred_check
      _
    $region11: #{albert_forward.9} parent=1 // pred_check_branch
      %50 = sbr.rel (0) target = $region13
    $region12: #{albert_forward.9} parent=1 // pred_region
      %s52 = ssub.s32 32, 32
      %53 = vsyncadd [#allocation3], %s52
      %s55 = sshll.u32 [#allocation2], 4
      %s56 = int_to_ptr.vmem [resolvable:$true] %s55
      %58 = dma.vmem_to_hbm [thread:$0]  %s56, 32, %s2, [#allocation3]
    $region13: #{albert_forward.9} parent=1 // pred_fallthru
      _
    // Predicated region
    $region14: #{albert_forward.9} parent=1 // pred_check
      _
    $region15: #{albert_forward.9} parent=1 // pred_check_branch
      %60 = sbr.rel (0) target = $region17
    $region16: #{albert_forward.9} parent=1 // pred_region
      %s62 = ssub.s32 16, 16
      %63 = vsyncadd [#allocation5], %s62
      %s65 = sshll.u32 [#allocation4], 4
      %s66 = int_to_ptr.vmem [resolvable:$true] %s65
      %68 = dma.vmem_to_hbm [thread:$0]  %s66, 16, %s3, [#allocation5]
    $region17: #{albert_forward.9} parent=1 // pred_fallthru
      _
    // Predicated region
    $region18: #{albert_forward.9} parent=1 // pred_check
      _
    $region19: #{albert_forward.9} parent=1 // pred_check_branch
      %70 = sbr.rel (0) target = $region21
    $region20: #{albert_forward.9} parent=1 // pred_region
      %71 = dma.done [#allocation3], 32
    $region21: #{albert_forward.9} parent=1 // pred_fallthru
      _
    // Predicated region
    $region22: #{albert_forward.9} parent=1 // pred_check
      _
    $region23: #{albert_forward.9} parent=1 // pred_check_branch
      %73 = sbr.rel (0) target = $region25
    $region24: #{albert_forward.9} parent=1 // pred_region
      %74 = dma.done [#allocation5], 16
    $region25: #{albert_forward.9} parent=1 // pred_fallthru
      _
    %75 = vsyncpa [#allocation3], 1
    %76 = vsyncpa [#allocation5], 1

// kernel: albert_forward.8
$region0: #{albert_forward.8}
  #allocation0 [shape = 'u32[]', space=smem, size = 0x4, offset = 0x4, fixed_abs, tag = 'smem constant byte address 0x4 - core index']
  #allocation1 [shape = 'u32[144,128]{1,0:T(1,128)}', space=vmem, size = 0x12000, scoped, tag = 'internal scratch']
  #allocation2 [shape = 'f32[2,128]{1,0:T(2,128)}', space=vmem, size = 0x400, scoped, tag = 'scratch operand']
  %s0 = inlined_call_operand.hbm [shape: bf16[2,32], index: 0, kind: input, shape index: {}]
  %s1 = inlined_call_operand.hbm [shape: bf16[32,128], index: 1, kind: input, shape index: {}]
  %s2 = inlined_call_operand.hbm [shape: f32[1,128], index: 2, kind: input, shape index: {}]
  %s3 = inlined_call_operand.hbm [shape: f32[2,128], index: 3, kind: output, shape index: {}]
  %s4 = sld [smem:[#allocation0]]
  $region42: #{albert_forward.8} parent=0
    _
  %s6 = ssub.s32 1, %s4
  %s7 = scalar_select 0, %s6, %s4
  $region1: #{albert_forward.8} parent=0
    #allocation3 [shape = 'u8[512]{0}', space=vmem, size = 0x400, scoped, tag = 'input window, operand 0, single buffered']
    #allocation4 [shape = 's32[1]{0}', space=sflag, size = 0x4, scoped, tag = 'scoped memory for albert_forward.8']
    #allocation5 [shape = 's32[1]{0}', space=sflag, size = 0x4, scoped, tag = 'scoped memory for albert_forward.8']
    #allocation6 [shape = 'u8[8192]{0}', space=vmem, size = 0x2000, scoped, tag = 'input window, operand 1, single buffered']
    #allocation7 [shape = 's32[1]{0}', space=sflag, size = 0x4, scoped, tag = 'scoped memory for albert_forward.8']
    #allocation8 [shape = 'u8[512]{0}', space=vmem, size = 0x400, scoped, tag = 'input window, operand 2, single buffered']
    #allocation9 [shape = 'u8[1024]{0}', space=vmem, size = 0x400, scoped, tag = 'output window, operand 0, single buffered']
    %8 = vsyncpa [#allocation4], 0
    %9 = vsyncpa [#allocation7], 0
    %10 = vsyncpa [#allocation5], 0
    // Predicated region
    $region2: #{albert_forward.8} parent=1 // pred_check
      _
    $region3: #{albert_forward.8} parent=1 // pred_check_branch
      %12 = sbr.rel (0) target = $region5
    $region4: #{albert_forward.8} parent=1 // pred_region
      %s14 = ssub.s32 16, 16
      %15 = vsyncadd [#allocation4], %s14
      %s17 = sshll.u32 [#allocation3], 4
      %s18 = int_to_ptr.vmem [resolvable:$true] %s17
      %20 = dma.hbm_to_vmem [thread:$0]  %s0, 16, %s18, [#allocation4]
    $region5: #{albert_forward.8} parent=1 // pred_fallthru
      _
    // Predicated region
    $region6: #{albert_forward.8} parent=1 // pred_check
      _
    $region7: #{albert_forward.8} parent=1 // pred_check_branch
      %22 = sbr.rel (0) target = $region9
    $region8: #{albert_forward.8} parent=1 // pred_region
      %s24 = ssub.s32 256, 256
      %25 = vsyncadd [#allocation7], %s24
      %s26 = sshll.u32 [#allocation6], 4
      %s27 = int_to_ptr.vmem [resolvable:$true] %s26
      %32 = dma.hbm_to_vmem [thread:$0]  %s1, 256, %s27, [#allocation7], 64, 64, 4
    $region9: #{albert_forward.8} parent=1 // pred_fallthru
      _
    // Predicated region
    $region10: #{albert_forward.8} parent=1 // pred_check
      _
    $region11: #{albert_forward.8} parent=1 // pred_check_branch
      %34 = sbr.rel (0) target = $region13
    $region12: #{albert_forward.8} parent=1 // pred_region
      %s36 = ssub.s32 16, 16
      %37 = vsyncadd [#allocation7], %s36
      %s39 = sshll.u32 [#allocation8], 4
      %s40 = int_to_ptr.vmem [resolvable:$true] %s39
      %42 = dma.hbm_to_vmem [thread:$0]  %s2, 16, %s40, [#allocation7]
    $region13: #{albert_forward.8} parent=1 // pred_fallthru
      _
    // Predicated region
    $region14: #{albert_forward.8} parent=1 // pred_check
      _
    $region15: #{albert_forward.8} parent=1 // pred_check_branch
      %44 = sbr.rel (0) target = $region17
    $region16: #{albert_forward.8} parent=1 // pred_region
      %45 = dma.done [#allocation4], 16
    $region17: #{albert_forward.8} parent=1 // pred_fallthru
      _
    // Predicated region
    $region18: #{albert_forward.8} parent=1 // pred_check
      _
    $region19: #{albert_forward.8} parent=1 // pred_check_branch
      %47 = sbr.rel (0) target = $region21
    $region20: #{albert_forward.8} parent=1 // pred_region
      %48 = dma.done [#allocation7], 256
    $region21: #{albert_forward.8} parent=1 // pred_fallthru
      _
    // Predicated region
    $region22: #{albert_forward.8} parent=1 // pred_check
      _
    $region23: #{albert_forward.8} parent=1 // pred_check_branch
      %50 = sbr.rel (0) target = $region25
    $region24: #{albert_forward.8} parent=1 // pred_region
      %51 = dma.done [#allocation7], 16
    $region25: #{albert_forward.8} parent=1 // pred_fallthru
      _
    %p53 = scmp.eq.s32.totalorder 0, 0
    // Predicated region
    $region26: #{albert_forward.8} parent=1 // pred_check
      %p54 = pneg %p53
    $region27: #{albert_forward.8} parent=1 // pred_check_branch
      %56 = sbr.rel (%p54) target = $region29
    $region28: #{albert_forward.8} parent=1 // pred_region
      %57 = vst [vmem:[#allocation2] sm:$0x3] 0.0
    $region29: #{albert_forward.8} parent=1 // pred_fallthru
      _
    %v58 = vld [vmem:[#allocation2] sm:$0x3]
    %v59 = vld [vmem:[#allocation3] sm:$0x1]
    %v60 = vld [vmem:[#allocation6] sm:$0xf]
    %v61 = vld [vmem:[#allocation6 + $0x4] sm:$0xf]
    %v62 = vld [vmem:[#allocation6 + $0x8] sm:$0xf]
    %v63 = vld [vmem:[#allocation6 + $0xc] sm:$0xf]
    %v68 = vunpack.c.l.b16 %v60
    %v69 = vunpack.c.l.b16 %v61
    %v70 = vunpack.c.l.b16 %v62
    %v71 = vunpack.c.l.b16 %v63
    %v72 = vpack.c.b16 %v69, %v68
    %v73 = vpack.c.b16 %v71, %v70
    %vm76 = vcmask 261120
    %v78 = vsel %vm76, %v59, 0
    %80 = vmatprep.subr.bf16.mxu0 0
    %81 = vmatpush1.bf16.msra.mxu0 %v72
    %82 = vmatprep.subr.bf16.mxu0 0
    %83 = vmatpush1.bf16.msra.mxu0 %v73
    %84 = vmatprep.subr.bf16.mxu0 0
    %85 = vmatpush1.bf16.msra.mxu0 0
    %86 = vmatprep.subr.bf16.mxu0 0
    %87 = vmatpush1.bf16.msra.mxu0 0
    %88 = vmatprep.subr.bf16.mxu0 0
    %89 = vmatpush1.bf16.msra.mxu0 0
    %90 = vmatprep.subr.bf16.mxu0 0
    %91 = vmatpush1.bf16.msra.mxu0 0
    %92 = vmatprep.subr.bf16.mxu0 0
    %93 = vmatpush1.bf16.msra.mxu0 0
    %94 = vmatprep.subr.bf16.mxu0 0
    %95 = vmatpush1.bf16.msra.mxu0 0
    %96 = vmatprep.subr.bf16.mxu0 0
    %97 = vmatpush1.bf16.msra.mxu0 0
    %98 = vmatprep.subr.bf16.mxu0 0
    %99 = vmatpush1.bf16.msra.mxu0 0
    %100 = vmatprep.subr.bf16.mxu0 0
    %101 = vmatpush1.bf16.msra.mxu0 0
    %102 = vmatprep.subr.bf16.mxu0 0
    %103 = vmatpush1.bf16.msra.mxu0 0
    %104 = vmatprep.subr.bf16.mxu0 0
    %105 = vmatpush1.bf16.msra.mxu0 0
    %106 = vmatprep.subr.bf16.mxu0 0
    %107 = vmatpush1.bf16.msra.mxu0 0
    %108 = vmatprep.subr.bf16.mxu0 0
    %109 = vmatpush1.bf16.msra.mxu0 0
    %110 = vmatprep.subr.bf16.mxu0 0
    %111 = vmatpush1.bf16.msra.mxu0 0
    %112 = vmatprep.mubr.bf16.mxu0 0
    %113 = vmatmul.mubr.bf16.gmra.mrb[0].mxu0 %v78
    %v114 = vpop.f32.mrb[0].mxu0
    %v115 = vadd.f32 0.0, %v114
    %v116 = vpop.f32.mrb[0].mxu0
    %v117 = vpop.f32.mrb[0].mxu0
    %v118 = vpop.f32.mrb[0].mxu0
    %119 = vdwg.mxu0
    %v120 = vadd.f32 %v58, %v115
    %121 = vst [vmem:[#allocation2] sm:$0x3] %v120
    // Predicated region
    $region30: #{albert_forward.8} parent=1 // pred_check
      %p122 = pneg %p53
    $region31: #{albert_forward.8} parent=1 // pred_check_branch
      %124 = sbr.rel (%p122) target = $region33
    $region32: #{albert_forward.8} parent=1 // pred_region
      %v125 = vld [vmem:[#allocation2] sm:$0x3]
      %v126 = vld [vmem:[#allocation8] sm:$0x1]
      %v128 = vlaneseq
      %v129 = vshrl.u32 %v128, 7
      %v130 = vsub.s32 0, %v129
      %v131 = vrot.slane %v126, %v130
      %v133 = vadd.f32 %v125, %v131
      %134 = vst [vmem:[#allocation9] sm:$0x3] %v133
    $region33: #{albert_forward.8} parent=1 // pred_fallthru
      _
    // Predicated region
    $region34: #{albert_forward.8} parent=1 // pred_check
      _
    $region35: #{albert_forward.8} parent=1 // pred_check_branch
      %136 = sbr.rel (0) target = $region37
    $region36: #{albert_forward.8} parent=1 // pred_region
      %s138 = ssub.s32 32, 32
      %139 = vsyncadd [#allocation5], %s138
      %s141 = sshll.u32 [#allocation9], 4
      %s142 = int_to_ptr.vmem [resolvable:$true] %s141
      %144 = dma.vmem_to_hbm [thread:$0]  %s142, 32, %s3, [#allocation5]
    $region37: #{albert_forward.8} parent=1 // pred_fallthru
      _
    // Predicated region
    $region38: #{albert_forward.8} parent=1 // pred_check
      _
    $region39: #{albert_forward.8} parent=1 // pred_check_branch
      %146 = sbr.rel (0) target = $region41
    $region40: #{albert_forward.8} parent=1 // pred_region
      %147 = dma.done [#allocation5], 32
    $region41: #{albert_forward.8} parent=1 // pred_fallthru
      _
    %148 = vsyncpa [#allocation4], 1
    %149 = vsyncpa [#allocation7], 1
    %150 = vsyncpa [#allocation5], 1

</llo_original>
